<compile_context>
chip_gen: v5e
topology: v5e:2x2
jax: 0.10.0
libtpu: 0.0.40
codegen_flags: <defaults>
</compile_context>

<pallas_src>
import jax
import jax.numpy as jnp
import numpy as np
from jax.experimental import pallas as pl
from jax.experimental.pallas import tpu as pltpu

L = 128   # self.L
D = 64    # self.D
K = 1     # self.K
LANE = 128


def _round_up(v, m):
    return (v + m - 1) // m * m


def abmil_kernel(nvalid_ref,
                 x_ref, w1_ref, b1_ref, w2_ref, b2_ref, w3_ref, b3_ref,
                 wvu_ref, bvu_ref, ww_ref, bw_ref,
                 h_ref, s_ref, m_ref, l_ref, acc_ref):
    c = pl.program_id(0)          # core (parallel) axis
    i = pl.program_id(1)          # instance-block (arbitrary) axis
    nsteps = pl.num_programs(1)
    block_n = x_ref.shape[0]
    d_p = ww_ref.shape[1]

    # Per-core online-softmax accumulators live in the (c,0,0)-resident output blocks.
    @pl.when(i == 0)
    def _init():
        m_ref[...] = jnp.full_like(m_ref, -1e30)
        l_ref[...] = jnp.zeros_like(l_ref)
        acc_ref[...] = jnp.zeros_like(acc_ref)

    def linear(h, w_ref, b_ref):
        # bf16 MXU operands, f32 accumulation, f32 bias add.
        return jnp.dot(h, w_ref[...], preferred_element_type=jnp.float32) + b_ref[...]

    # ---- per-instance feature extractor MLP ----
    # TODO(synk): mildropout(topk, kernel) is a custom training-time dropout whose source
    # is not provided; treated as identity here (inference forward).
    x = x_ref[...]                                                 # (block_n, in_p) bf16
    h1 = jnp.maximum(linear(x, w1_ref, b1_ref), 0.0)               # (block_n, hid_pad) f32
    h2 = jnp.maximum(linear(h1.astype(jnp.bfloat16), w2_ref, b2_ref), 0.0)   # (block_n, 256)
    hb = jnp.maximum(linear(h2.astype(jnp.bfloat16), w3_ref, b3_ref), 0.0)   # (block_n, L)
    hb16 = hb.astype(jnp.bfloat16)                                 # cast once; reused 3x
    h_ref[...] = hb16                                              # bf16 H writeback

    # ---- gated attention: one fused 256-wide matmul, split tanh/sigmoid halves ----
    vu = linear(hb16, wvu_ref, bvu_ref)                            # (block_n, 2*d_p) f32
    gate = jnp.tanh(vu[:, :d_p]) * jax.nn.sigmoid(vu[:, d_p:])     # (block_n, d_p) f32

    # Scores kept in lane-dense (K, block_n) orientation: softmax stats stay lane
    # reductions and p @ hb feeds the MXU without transposing p.  (With K == 1 the
    # gate relayout implied by this einsum is a single (block_n, d_p) XLU op per step,
    # cheaper than moving the whole softmax/accumulation path to column orientation.)
    s = jnp.einsum('kd,nd->kn', ww_ref[...], gate,
                   preferred_element_type=jnp.float32) + bw_ref[...]   # (K, block_n)

    # Mask zero-padded instances using the prefetched (runtime) bag length.
    row0 = (c * nsteps + i) * block_n
    col = row0 + jax.lax.broadcasted_iota(jnp.int32, s.shape, 1)
    s = jnp.where(col < nvalid_ref[0], s, -1e30)
    s_ref[0] = s                                                   # streamed raw scores

    # ---- per-core online softmax statistics + attention-pooling accumulator ----
    m_prev = m_ref[0]                                              # (K, 1)
    m_new = jnp.maximum(m_prev, jnp.max(s, axis=-1, keepdims=True))
    alpha = jnp.exp(m_prev - m_new)
    p = jnp.exp(s - m_new)                                         # (K, block_n)
    l_ref[0] = alpha * l_ref[0] + jnp.sum(p, axis=-1, keepdims=True)
    acc_ref[0] = alpha * acc_ref[0] + jnp.dot(p.astype(jnp.bfloat16), hb16,
                                              preferred_element_type=jnp.float32)
    m_ref[0] = m_new


def attention_mil_forward(x, params, *, block_n=512, num_cores=2):
    """Gated-ABMIL forward. x: (N, in_features) f32. Returns (logits, A, H[bf16])."""
    n, in_features = x.shape
    num_classes = params['wc'].shape[0]
    # The PyTorch module applies Linear(L*K, num_classes) to the (K, L) pooled feature,
    # which only type-checks for K == 1 (the module's hard-coded value).
    assert K == 1, "AttentionMIL classifier layout requires K == 1"

    hid = in_features // 2
    in_p = _round_up(in_features, 16)     # bf16 sublane pad only; NOT lane-padded to 128
    hid_p = _round_up(hid, LANE)
    d_p = _round_up(D, LANE)

    block_n = _round_up(max(LANE, block_n), LANE)
    # Bucketed (power-of-two) block count so varying bag sizes hit the same compile.
    blocks_per_core = max(1, int(pl.next_power_of_2(pl.cdiv(n, num_cores * block_n))))
    rows_per_core = blocks_per_core * block_n
    n_pad = num_cores * rows_per_core
    total_blocks = num_cores * blocks_per_core

    f32, bf16 = jnp.float32, jnp.bfloat16

    def pad2(a, rows, cols):
        return jnp.pad(a, ((0, rows - a.shape[0]), (0, cols - a.shape[1])))

    # (in, out) layout, outputs padded to 128-lane multiples; big MXU operands in bf16.
    # TODO(synk): for large in_features on v5e/v6e, w1/w2 could be int8 with per-channel
    # f32 scales (2x MXU throughput, half the resident VMEM); v7x would need fp8 instead.
    w1 = pad2(params['w1'].T, in_p, hid_p).astype(bf16)
    b1 = pad2(params['b1'], 1, hid_p).astype(f32)
    w2 = pad2(params['w2'].T, hid_p, 256).astype(bf16)
    b2 = params['b2'].astype(f32)
    w3 = params['w3'].T.astype(bf16)                      # (256, L)
    b3 = params['b3'].astype(f32)
    wvu = jnp.concatenate([pad2(params['wv'].T, L, d_p),
                           pad2(params['wu'].T, L, d_p)], axis=1).astype(bf16)  # (L, 2*d_p)
    bvu = jnp.concatenate([pad2(params['bv'], 1, d_p),
                           pad2(params['bu'], 1, d_p)], axis=1).astype(f32)     # (1, 2*d_p)
    ww = pad2(params['ww'], K, d_p).astype(f32)           # (K, d_p): tiny -> keep f32
    bw = params['bw'].reshape(K, 1).astype(f32)           # (K, 1)
    x_p = pad2(x, n_pad, in_p).astype(bf16)

    weights = (w1, b1, w2, b2, w3, b3, wvu, bvu, ww, bw)

    def resident(a):  # constant index -> fetched once (per core), stays in VMEM
        return pl.BlockSpec(a.shape, lambda c, i, nref: (0, 0))

    def stream(c, i, nref):  # global instance-block index
        return (c * blocks_per_core + i, 0)

    in_specs = ([pl.BlockSpec((block_n, in_p), stream)]
                + [resident(w) for w in weights])
    out_specs = (
        pl.BlockSpec((block_n, L), stream),                                           # H (bf16)
        pl.BlockSpec((1, K, block_n), lambda c, i, nref: (c * blocks_per_core + i, 0, 0)),  # raw scores
        pl.BlockSpec((1, K, 1), lambda c, i, nref: (c, 0, 0)),                        # m partial
        pl.BlockSpec((1, K, 1), lambda c, i, nref: (c, 0, 0)),                        # l partial
        pl.BlockSpec((1, K, L), lambda c, i, nref: (c, 0, 0)),                        # acc partial
    )
    out_shape = (
        jax.ShapeDtypeStruct((n_pad, L), bf16),
        jax.ShapeDtypeStruct((total_blocks, K, block_n), f32),
        jax.ShapeDtypeStruct((num_cores, K, 1), f32),
        jax.ShapeDtypeStruct((num_cores, K, 1), f32),
        jax.ShapeDtypeStruct((num_cores, K, L), f32),
    )

    # VMEM budget: resident weights + double-buffered x/H/score tiles + f32 intermediates.
    weight_bytes = sum(int(np.prod(w.shape)) * w.dtype.itemsize for w in weights)
    stream_bytes = 2 * (block_n * in_p * 2 + block_n * L * 2 + block_n * 4)
    inter_bytes = block_n * (hid_p + 256 + 2 * L + 6 * d_p) * 4
    working = weight_bytes + stream_bytes + inter_bytes + 2 * num_cores * (L + 2) * 4
    try:
        vmem_cap = int(pltpu.get_tpu_info().vmem_capacity_bytes)
    except Exception:
        vmem_cap = 64 * 2**20                      # conservative default (v7x)
    vmem_limit = int(min(vmem_cap - 16 * 2**20,    # always leave compiler headroom
                         max(32 * 2**20, working + 16 * 2**20)))

    grid_spec = pltpu.PrefetchScalarGridSpec(
        num_scalar_prefetch=1,
        grid=(num_cores, blocks_per_core),
        in_specs=in_specs,
        out_specs=out_specs,
    )

    n_arr = jnp.array([n], dtype=jnp.int32)
    h_p, s_raw, m_part, l_part, acc_part = pl.pallas_call(
        abmil_kernel,
        grid_spec=grid_spec,
        out_shape=out_shape,
        compiler_params=pltpu.CompilerParams(
            dimension_semantics=("parallel", "arbitrary"),
            vmem_limit_bytes=vmem_limit),
    )(n_arr, x_p, *weights)

    # ---- tiny wrapper epilogue: combine per-core partials, normalize, classify ----
    m_c = m_part[:, :, 0]                               # (cores, K)
    l_c = l_part[:, :, 0]                               # (cores, K)
    m_tot = jnp.max(m_c, axis=0)                        # (K,)
    scale = jnp.exp(m_c - m_tot[None, :])               # all-padded cores -> exactly 0
    l_tot = jnp.sum(l_c * scale, axis=0)                # (K,)
    M = jnp.sum(acc_part * scale[:, :, None], axis=0) / l_tot[:, None]     # (K, L)
    logits = M @ params['wc'].astype(f32).T + params['bc'].astype(f32)     # (K, C)

    scores = s_raw.reshape(total_blocks * block_n)[:n]  # K == 1; padding sliced away
    A = jax.nn.softmax(scores)[None, :]                 # (K, N)
    H = h_p[:n, :]                                      # (N, L) bf16
    return logits, A, H


def init_params(key, in_features, num_classes=2):
    """Deterministic synthetic parameters matching the PyTorch module shapes."""
    hid = in_features // 2
    shapes = {
        'w1': (hid, in_features), 'b1': (1, hid),
        'w2': (256, hid),         'b2': (1, 256),
        'w3': (L, 256),           'b3': (1, L),
        'wv': (D, L),             'bv': (1, D),
        'wu': (D, L),             'bu': (1, D),
        'ww': (K, D),             'bw': (1, K),
        'wc': (num_classes, L * K), 'bc': (1, num_classes),
    }
    params = {}
    for name, shape in sorted(shapes.items()):
        key, sub = jax.random.split(key)
        scale = 1.0 / np.sqrt(max(shape[-1], 1))
        params[name] = scale * jax.random.normal(sub, shape, dtype=jnp.float32)
    return params


def reference_forward(x, p):
    """Pure-JAX reference mirroring the kernel numerics (bf16 MXU operands, f32 accumulate)."""
    q = lambda t: t.astype(jnp.bfloat16).astype(jnp.float32)
    lin = lambda h, w, b: q(h) @ q(w).T + b
    h1 = jax.nn.relu(lin(x, p['w1'], p['b1']))
    h2 = jax.nn.relu(lin(h1, p['w2'], p['b2']))
    H = jax.nn.relu(lin(h2, p['w3'], p['b3']))
    a_v = jnp.tanh(lin(H, p['wv'], p['bv']))
    a_u = jax.nn.sigmoid(lin(H, p['wu'], p['bu']))
    scores = (a_v * a_u) @ p['ww'].T + p['bw']    # (N, K)
    A = jax.nn.softmax(scores.T, axis=1)          # (K, N)
    M = A @ H                                     # (K, L)
    logits = M @ p['wc'].T + p['bc']              # (K, C)
    return logits, A, H


if __name__ == "__main__":
    key = jax.random.PRNGKey(0)
    in_features = 32
    num_classes = 2
    n_instances = 300   # NOT a multiple of the block (exercises masking + an all-padded core)

    k_x, k_p = jax.random.split(key)
    x = jax.random.normal(k_x, (n_instances, in_features), dtype=jnp.float32)
    params = init_params(k_p, in_features, num_classes)

    logits, A, H = attention_mil_forward(x, params)   # default block_n=512, num_cores=2
    jax.block_until_ready((logits, A, H))

    ref_logits, ref_A, ref_H = reference_forward(x, params)
    np.testing.assert_allclose(np.asarray(H.astype(jnp.float32)), np.asarray(ref_H),
                               rtol=1e-2, atol=1e-2)
    np.testing.assert_allclose(np.asarray(A), np.asarray(ref_A), rtol=1e-2, atol=1e-2)
    np.testing.assert_allclose(np.asarray(logits), np.asarray(ref_logits),
                               rtol=1e-2, atol=1e-2)
    assert logits.shape == (K, num_classes)
    assert A.shape == (K, n_instances)
    assert H.shape == (n_instances, L)
    assert abs(float(A.sum()) - 1.0) < 1e-3

    print("KERNEL_OK")
</pallas_src>

<mosaic_0001>
module attributes {stable_mosaic.version = 11 : i64} {
  func.func @abmil_kernel(%arg0: i32, %arg1: i32, %arg2: memref<1xi32, #tpu.memory_space<smem>>, %arg3: memref<512x32xbf16, #tpu.memory_space<vmem>>, %arg4: memref<32x128xbf16, #tpu.memory_space<vmem>>, %arg5: memref<1x128xf32, #tpu.memory_space<vmem>>, %arg6: memref<128x256xbf16, #tpu.memory_space<vmem>>, %arg7: memref<1x256xf32, #tpu.memory_space<vmem>>, %arg8: memref<256x128xbf16, #tpu.memory_space<vmem>>, %arg9: memref<1x128xf32, #tpu.memory_space<vmem>>, %arg10: memref<128x256xbf16, #tpu.memory_space<vmem>>, %arg11: memref<1x256xf32, #tpu.memory_space<vmem>>, %arg12: memref<1x128xf32, #tpu.memory_space<vmem>>, %arg13: memref<1x1xf32, #tpu.memory_space<vmem>>, %arg14: memref<512x128xbf16, #tpu.memory_space<vmem>>, %arg15: memref<1x1x512xf32, #tpu.memory_space<vmem>>, %arg16: memref<1x1x1xf32, #tpu.memory_space<vmem>>, %arg17: memref<1x1x1xf32, #tpu.memory_space<vmem>>, %arg18: memref<1x1x128xf32, #tpu.memory_space<vmem>>) attributes {dimension_semantics = [#tpu.dimension_semantics<parallel>, #tpu.dimension_semantics<arbitrary>], iteration_bounds = array<i64: 2, 1>, scalar_prefetch = 1 : i64, scratch_operands = 0 : i64, tpu.core_type = #tpu.core_type<tc>, window_params = [{transform_indices = @transform_0, window_bounds = array<i64: 512, 32>}, {pipeline_mode = #tpu.pipeline_mode<synchronous>, transform_indices = @transform_1, window_bounds = array<i64: 32, 128>}, {pipeline_mode = #tpu.pipeline_mode<synchronous>, transform_indices = @transform_2, window_bounds = array<i64: 1, 128>}, {pipeline_mode = #tpu.pipeline_mode<synchronous>, transform_indices = @transform_3, window_bounds = array<i64: 128, 256>}, {pipeline_mode = #tpu.pipeline_mode<synchronous>, transform_indices = @transform_4, window_bounds = array<i64: 1, 256>}, {pipeline_mode = #tpu.pipeline_mode<synchronous>, transform_indices = @transform_5, window_bounds = array<i64: 256, 128>}, {pipeline_mode = #tpu.pipeline_mode<synchronous>, transform_indices = @transform_6, window_bounds = array<i64: 1, 128>}, {pipeline_mode = #tpu.pipeline_mode<synchronous>, transform_indices = @transform_7, window_bounds = array<i64: 128, 256>}, {pipeline_mode = #tpu.pipeline_mode<synchronous>, transform_indices = @transform_8, window_bounds = array<i64: 1, 256>}, {pipeline_mode = #tpu.pipeline_mode<synchronous>, transform_indices = @transform_9, window_bounds = array<i64: 1, 128>}, {pipeline_mode = #tpu.pipeline_mode<synchronous>, transform_indices = @transform_10, window_bounds = array<i64: 1, 1>}, {transform_indices = @transform_11, window_bounds = array<i64: 512, 128>}, {transform_indices = @transform_12, window_bounds = array<i64: 1, 1, 512>}, {transform_indices = @transform_13, window_bounds = array<i64: 1, 1, 1>}, {transform_indices = @transform_14, window_bounds = array<i64: 1, 1, 1>}, {transform_indices = @transform_15, window_bounds = array<i64: 1, 1, 128>}]} {
    %c0_i32 = arith.constant 0 : i32
    %0 = arith.cmpi eq, %arg1, %c0_i32 : i32
    %1 = arith.extui %0 : i1 to i32
    %c0_i32_0 = arith.constant 0 : i32
    %2 = arith.cmpi ne, %1, %c0_i32_0 : i32
    scf.if %2 {
      %cst_58 = arith.constant -1.000000e+30 : f32
      %94 = vector.broadcast %cst_58 : f32 to vector<1x1x1xf32>
      %c0_59 = arith.constant 0 : index
      %c0_60 = arith.constant 0 : index
      %c0_61 = arith.constant 0 : index
      %95 = vector.load %arg16[%c0_59, %c0_60, %c0_61] : memref<1x1x1xf32, #tpu.memory_space<vmem>>, vector<1x1x1xf32>
      tpu.vector_store %arg16[%c0_59, %c0_60, %c0_61], %94 {strides = array<i32>} : memref<1x1x1xf32, #tpu.memory_space<vmem>>, vector<1x1x1xf32>,
      %cst_62 = arith.constant 0.000000e+00 : f32
      %96 = vector.broadcast %cst_62 : f32 to vector<1x1x1xf32>
      %c0_63 = arith.constant 0 : index
      %c0_64 = arith.constant 0 : index
      %c0_65 = arith.constant 0 : index
      %97 = vector.load %arg17[%c0_63, %c0_64, %c0_65] : memref<1x1x1xf32, #tpu.memory_space<vmem>>, vector<1x1x1xf32>
      tpu.vector_store %arg17[%c0_63, %c0_64, %c0_65], %96 {strides = array<i32>} : memref<1x1x1xf32, #tpu.memory_space<vmem>>, vector<1x1x1xf32>,
      %cst_66 = arith.constant 0.000000e+00 : f32
      %98 = vector.broadcast %cst_66 : f32 to vector<1x1x128xf32>
      %c0_67 = arith.constant 0 : index
      %c0_68 = arith.constant 0 : index
      %c0_69 = arith.constant 0 : index
      %99 = vector.load %arg18[%c0_67, %c0_68, %c0_69] : memref<1x1x128xf32, #tpu.memory_space<vmem>>, vector<1x1x128xf32>
      tpu.vector_store %arg18[%c0_67, %c0_68, %c0_69], %98 {strides = array<i32>} : memref<1x1x128xf32, #tpu.memory_space<vmem>>, vector<1x1x128xf32>,
    } else {
    }
    %c0 = arith.constant 0 : index
    %c0_1 = arith.constant 0 : index
    %3 = vector.load %arg3[%c0, %c0_1] : memref<512x32xbf16, #tpu.memory_space<vmem>>, vector<512x32xbf16>
    %c0_2 = arith.constant 0 : index
    %c0_3 = arith.constant 0 : index
    %4 = vector.load %arg4[%c0_2, %c0_3] : memref<32x128xbf16, #tpu.memory_space<vmem>>, vector<32x128xbf16>
    %cst = arith.constant dense<0.000000e+00> : vector<512x128xf32>
    %5 = tpu.matmul %3, %4, %cst {dimension_numbers = #tpu.dot_dimension_numbers<[1], [0], [0], [1], [0, 0, 1, 1], [], []>} : vector<512x32xbf16>, vector<32x128xbf16>, vector<512x128xf32> -> vector<512x128xf32>
    %c0_4 = arith.constant 0 : index
    %c0_5 = arith.constant 0 : index
    %6 = vector.load %arg5[%c0_4, %c0_5] : memref<1x128xf32, #tpu.memory_space<vmem>>, vector<1x128xf32>
    %7 = vector.broadcast %6 : vector<1x128xf32> to vector<512x128xf32>
    %8 = arith.addf %5, %7 : vector<512x128xf32>
    %cst_6 = arith.constant 0.000000e+00 : f32
    %9 = vector.broadcast %cst_6 : f32 to vector<512x128xf32>
    %10 = arith.maximumf %8, %9 : vector<512x128xf32>
    %11 = arith.truncf %10 : vector<512x128xf32> to vector<512x128xbf16>
    %c0_7 = arith.constant 0 : index
    %c0_8 = arith.constant 0 : index
    %12 = vector.load %arg6[%c0_7, %c0_8] : memref<128x256xbf16, #tpu.memory_space<vmem>>, vector<128x256xbf16>
    %cst_9 = arith.constant dense<0.000000e+00> : vector<512x256xf32>
    %13 = tpu.matmul %11, %12, %cst_9 {dimension_numbers = #tpu.dot_dimension_numbers<[1], [0], [0], [1], [0, 0, 1, 1], [], []>} : vector<512x128xbf16>, vector<128x256xbf16>, vector<512x256xf32> -> vector<512x256xf32>
    %c0_10 = arith.constant 0 : index
    %c0_11 = arith.constant 0 : index
    %14 = vector.load %arg7[%c0_10, %c0_11] : memref<1x256xf32, #tpu.memory_space<vmem>>, vector<1x256xf32>
    %15 = vector.broadcast %14 : vector<1x256xf32> to vector<512x256xf32>
    %16 = arith.addf %13, %15 : vector<512x256xf32>
    %cst_12 = arith.constant 0.000000e+00 : f32
    %17 = vector.broadcast %cst_12 : f32 to vector<512x256xf32>
    %18 = arith.maximumf %16, %17 : vector<512x256xf32>
    %19 = arith.truncf %18 : vector<512x256xf32> to vector<512x256xbf16>
    %c0_13 = arith.constant 0 : index
    %c0_14 = arith.constant 0 : index
    %20 = vector.load %arg8[%c0_13, %c0_14] : memref<256x128xbf16, #tpu.memory_space<vmem>>, vector<256x128xbf16>
    %cst_15 = arith.constant dense<0.000000e+00> : vector<512x128xf32>
    %21 = tpu.matmul %19, %20, %cst_15 {dimension_numbers = #tpu.dot_dimension_numbers<[1], [0], [0], [1], [0, 0, 1, 1], [], []>} : vector<512x256xbf16>, vector<256x128xbf16>, vector<512x128xf32> -> vector<512x128xf32>
    %c0_16 = arith.constant 0 : index
    %c0_17 = arith.constant 0 : index
    %22 = vector.load %arg9[%c0_16, %c0_17] : memref<1x128xf32, #tpu.memory_space<vmem>>, vector<1x128xf32>
    %23 = vector.broadcast %22 : vector<1x128xf32> to vector<512x128xf32>
    %24 = arith.addf %21, %23 : vector<512x128xf32>
    %cst_18 = arith.constant 0.000000e+00 : f32
    %25 = vector.broadcast %cst_18 : f32 to vector<512x128xf32>
    %26 = arith.maximumf %24, %25 : vector<512x128xf32>
    %27 = arith.truncf %26 : vector<512x128xf32> to vector<512x128xbf16>
    %c0_19 = arith.constant 0 : index
    %c0_20 = arith.constant 0 : index
    %28 = vector.load %arg14[%c0_19, %c0_20] : memref<512x128xbf16, #tpu.memory_space<vmem>>, vector<512x128xbf16>
    tpu.vector_store %arg14[%c0_19, %c0_20], %27 {strides = array<i32>} : memref<512x128xbf16, #tpu.memory_space<vmem>>, vector<512x128xbf16>,
    %c0_21 = arith.constant 0 : index
    %c0_22 = arith.constant 0 : index
    %29 = vector.load %arg10[%c0_21, %c0_22] : memref<128x256xbf16, #tpu.memory_space<vmem>>, vector<128x256xbf16>
    %cst_23 = arith.constant dense<0.000000e+00> : vector<512x256xf32>
    %30 = tpu.matmul %27, %29, %cst_23 {dimension_numbers = #tpu.dot_dimension_numbers<[1], [0], [0], [1], [0, 0, 1, 1], [], []>} : vector<512x128xbf16>, vector<128x256xbf16>, vector<512x256xf32> -> vector<512x256xf32>
    %c0_24 = arith.constant 0 : index
    %c0_25 = arith.constant 0 : index
    %31 = vector.load %arg11[%c0_24, %c0_25] : memref<1x256xf32, #tpu.memory_space<vmem>>, vector<1x256xf32>
    %32 = vector.broadcast %31 : vector<1x256xf32> to vector<512x256xf32>
    %33 = arith.addf %30, %32 : vector<512x256xf32>
    %34 = vector.extract_strided_slice %33 {offsets = [0, 0], sizes = [512, 128], strides = [1, 1]} : vector<512x256xf32> to vector<512x128xf32>
    %35 = math.tanh %34 : vector<512x128xf32>
    %36 = vector.extract_strided_slice %33 {offsets = [0, 128], sizes = [512, 128], strides = [1, 1]} : vector<512x256xf32> to vector<512x128xf32>
    %37 = arith.negf %36 : vector<512x128xf32>
    %38 = math.exp %37 : vector<512x128xf32>
    %cst_26 = arith.constant 1.000000e+00 : f32
    %39 = vector.broadcast %cst_26 : f32 to vector<512x128xf32>
    %40 = arith.addf %39, %38 : vector<512x128xf32>
    %41 = arith.divf %39, %40 : vector<512x128xf32>
    %42 = arith.mulf %35, %41 : vector<512x128xf32>
    %c0_27 = arith.constant 0 : index
    %c0_28 = arith.constant 0 : index
    %43 = vector.load %arg12[%c0_27, %c0_28] : memref<1x128xf32, #tpu.memory_space<vmem>>, vector<1x128xf32>
    "tpu.trace_start"() <{level = 10 : i32, message = "kd,nd->kn"}> : () -> ()
    %cst_29 = arith.constant dense<0.000000e+00> : vector<1x512xf32>
    %44 = tpu.matmul %43, %42, %cst_29 {dimension_numbers = #tpu.dot_dimension_numbers<[1], [1], [0], [0], [0, 0, 1, 0], [], []>} : vector<1x128xf32>, vector<512x128xf32>, vector<1x512xf32> -> vector<1x512xf32>
    "tpu.trace_stop"() : () -> ()
    %c0_30 = arith.constant 0 : index
    %c0_31 = arith.constant 0 : index
    %45 = vector.load %arg13[%c0_30, %c0_31] : memref<1x1xf32, #tpu.memory_space<vmem>>, vector<1x1xf32>
    %46 = vector.broadcast %45 : vector<1x1xf32> to vector<1x512xf32>
    %47 = arith.addf %44, %46 : vector<1x512xf32>
    %c1_i32 = arith.constant 1 : i32
    %48 = arith.muli %arg0, %c1_i32 : i32
    %49 = arith.addi %48, %arg1 : i32
    %c512_i32 = arith.constant 512 : i32
    %50 = arith.muli %49, %c512_i32 : i32
    %51 = tpu.iota {dimensions = array<i32: 1>} : vector<1x512xi32>
    %52 = vector.broadcast %50 : i32 to vector<1x512xi32>
    %53 = arith.addi %52, %51 : vector<1x512xi32>
    %c0_32 = arith.constant 0 : index
    %54 = memref.load %arg2[%c0_32] : memref<1xi32, #tpu.memory_space<smem>>
    %55 = vector.broadcast %54 : i32 to vector<1x512xi32>
    %56 = arith.cmpi slt, %53, %55 : vector<1x512xi32>
    %cst_33 = arith.constant -1.000000e+30 : f32
    %57 = vector.broadcast %cst_33 : f32 to vector<1x512xf32>
    %58 = arith.select %56, %47, %57 : vector<1x512xi1>, vector<1x512xf32>
    %c0_34 = arith.constant 0 : index
    %c0_35 = arith.constant 0 : index
    %c0_36 = arith.constant 0 : index
    %59 = vector.load %arg15[%c0_34, %c0_35, %c0_36] : memref<1x1x512xf32, #tpu.memory_space<vmem>>, vector<1x1x512xf32>
    %60 = vector.shape_cast %59 : vector<1x1x512xf32> to vector<1x512xf32>
    %61 = vector.shape_cast %58 : vector<1x512xf32> to vector<1x1x512xf32>
    tpu.vector_store %arg15[%c0_34, %c0_35, %c0_36], %61 {strides = array<i32>} : memref<1x1x512xf32, #tpu.memory_space<vmem>>, vector<1x1x512xf32>,
    %c0_37 = arith.constant 0 : index
    %c0_38 = arith.constant 0 : index
    %c0_39 = arith.constant 0 : index
    %62 = vector.load %arg16[%c0_37, %c0_38, %c0_39] : memref<1x1x1xf32, #tpu.memory_space<vmem>>, vector<1x1x1xf32>
    %63 = vector.shape_cast %62 : vector<1x1x1xf32> to vector<1x1xf32>
    %cst_40 = arith.constant dense<0xFF800000> : vector<1xf32>
    %64 = vector.multi_reduction <maximumf>, %58, %cst_40 [1] : vector<1x512xf32> to vector<1xf32>
    %65 = vector.shape_cast %64 : vector<1xf32> to vector<1x1xf32>
    %66 = arith.maximumf %63, %65 : vector<1x1xf32>
    %67 = arith.subf %63, %66 : vector<1x1xf32>
    %68 = math.exp %67 : vector<1x1xf32>
    %69 = vector.broadcast %66 : vector<1x1xf32> to vector<1x512xf32>
    %70 = arith.subf %58, %69 : vector<1x512xf32>
    %71 = math.exp %70 : vector<1x512xf32>
    %c0_41 = arith.constant 0 : index
    %c0_42 = arith.constant 0 : index
    %c0_43 = arith.constant 0 : index
    %72 = vector.load %arg17[%c0_41, %c0_42, %c0_43] : memref<1x1x1xf32, #tpu.memory_space<vmem>>, vector<1x1x1xf32>
    %73 = vector.shape_cast %72 : vector<1x1x1xf32> to vector<1x1xf32>
    %74 = arith.mulf %68, %73 : vector<1x1xf32>
    %cst_44 = arith.constant dense<0.000000e+00> : vector<1xf32>
    %75 = vector.multi_reduction <add>, %71, %cst_44 [1] : vector<1x512xf32> to vector<1xf32>
    %76 = vector.shape_cast %75 : vector<1xf32> to vector<1x1xf32>
    %77 = arith.addf %74, %76 : vector<1x1xf32>
    %c0_45 = arith.constant 0 : index
    %c0_46 = arith.constant 0 : index
    %c0_47 = arith.constant 0 : index
    %78 = vector.load %arg17[%c0_45, %c0_46, %c0_47] : memref<1x1x1xf32, #tpu.memory_space<vmem>>, vector<1x1x1xf32>
    %79 = vector.shape_cast %78 : vector<1x1x1xf32> to vector<1x1xf32>
    %80 = vector.shape_cast %77 : vector<1x1xf32> to vector<1x1x1xf32>
    tpu.vector_store %arg17[%c0_45, %c0_46, %c0_47], %80 {strides = array<i32>} : memref<1x1x1xf32, #tpu.memory_space<vmem>>, vector<1x1x1xf32>,
    %c0_48 = arith.constant 0 : index
    %c0_49 = arith.constant 0 : index
    %c0_50 = arith.constant 0 : index
    %81 = vector.load %arg18[%c0_48, %c0_49, %c0_50] : memref<1x1x128xf32, #tpu.memory_space<vmem>>, vector<1x1x128xf32>
    %82 = vector.shape_cast %81 : vector<1x1x128xf32> to vector<1x128xf32>
    %83 = vector.broadcast %68 : vector<1x1xf32> to vector<1x128xf32>
    %84 = arith.mulf %83, %82 : vector<1x128xf32>
    %85 = arith.truncf %71 : vector<1x512xf32> to vector<1x512xbf16>
    %cst_51 = arith.constant dense<0.000000e+00> : vector<1x128xf32>
    %86 = tpu.matmul %85, %27, %cst_51 {dimension_numbers = #tpu.dot_dimension_numbers<[1], [0], [0], [1], [0, 0, 1, 1], [], []>} : vector<1x512xbf16>, vector<512x128xbf16>, vector<1x128xf32> -> vector<1x128xf32>
    %87 = arith.addf %84, %86 : vector<1x128xf32>
    %c0_52 = arith.constant 0 : index
    %c0_53 = arith.constant 0 : index
    %c0_54 = arith.constant 0 : index
    %88 = vector.load %arg18[%c0_52, %c0_53, %c0_54] : memref<1x1x128xf32, #tpu.memory_space<vmem>>, vector<1x1x128xf32>
    %89 = vector.shape_cast %88 : vector<1x1x128xf32> to vector<1x128xf32>
    %90 = vector.shape_cast %87 : vector<1x128xf32> to vector<1x1x128xf32>
    tpu.vector_store %arg18[%c0_52, %c0_53, %c0_54], %90 {strides = array<i32>} : memref<1x1x128xf32, #tpu.memory_space<vmem>>, vector<1x1x128xf32>,
    %c0_55 = arith.constant 0 : index
    %c0_56 = arith.constant 0 : index
    %c0_57 = arith.constant 0 : index
    %91 = vector.load %arg16[%c0_55, %c0_56, %c0_57] : memref<1x1x1xf32, #tpu.memory_space<vmem>>, vector<1x1x1xf32>
    %92 = vector.shape_cast %91 : vector<1x1x1xf32> to vector<1x1xf32>
    %93 = vector.shape_cast %66 : vector<1x1xf32> to vector<1x1x1xf32>
    tpu.vector_store %arg16[%c0_55, %c0_56, %c0_57], %93 {strides = array<i32>} : memref<1x1x1xf32, #tpu.memory_space<vmem>>, vector<1x1x1xf32>,
    return
  }
  func.func @transform_0(%arg0: i32, %arg1: i32, %arg2: memref<1xi32, #tpu.memory_space<smem>>) -> (i32, i32) {
    %c1_i32 = arith.constant 1 : i32
    %0 = arith.muli %arg0, %c1_i32 : i32
    %1 = arith.addi %0, %arg1 : i32
    %c0_i32 = arith.constant 0 : i32
    %c0_i32_0 = arith.constant 0 : i32
    return %1, %c0_i32 : i32, i32
  }
  func.func @transform_1(%arg0: i32, %arg1: i32, %arg2: memref<1xi32, #tpu.memory_space<smem>>) -> (i32, i32) {
    %c0_i32 = arith.constant 0 : i32
    %c0_i32_0 = arith.constant 0 : i32
    %c0_i32_1 = arith.constant 0 : i32
    return %c0_i32, %c0_i32_0 : i32, i32
  }
  func.func @transform_2(%arg0: i32, %arg1: i32, %arg2: memref<1xi32, #tpu.memory_space<smem>>) -> (i32, i32) {
    %c0_i32 = arith.constant 0 : i32
    %c0_i32_0 = arith.constant 0 : i32
    %c0_i32_1 = arith.constant 0 : i32
    return %c0_i32, %c0_i32_0 : i32, i32
  }
  func.func @transform_3(%arg0: i32, %arg1: i32, %arg2: memref<1xi32, #tpu.memory_space<smem>>) -> (i32, i32) {
    %c0_i32 = arith.constant 0 : i32
    %c0_i32_0 = arith.constant 0 : i32
    %c0_i32_1 = arith.constant 0 : i32
    return %c0_i32, %c0_i32_0 : i32, i32
  }
  func.func @transform_4(%arg0: i32, %arg1: i32, %arg2: memref<1xi32, #tpu.memory_space<smem>>) -> (i32, i32) {
    %c0_i32 = arith.constant 0 : i32
    %c0_i32_0 = arith.constant 0 : i32
    %c0_i32_1 = arith.constant 0 : i32
    return %c0_i32, %c0_i32_0 : i32, i32
  }
  func.func @transform_5(%arg0: i32, %arg1: i32, %arg2: memref<1xi32, #tpu.memory_space<smem>>) -> (i32, i32) {
    %c0_i32 = arith.constant 0 : i32
    %c0_i32_0 = arith.constant 0 : i32
    %c0_i32_1 = arith.constant 0 : i32
    return %c0_i32, %c0_i32_0 : i32, i32
  }
  func.func @transform_6(%arg0: i32, %arg1: i32, %arg2: memref<1xi32, #tpu.memory_space<smem>>) -> (i32, i32) {
    %c0_i32 = arith.constant 0 : i32
    %c0_i32_0 = arith.constant 0 : i32
    %c0_i32_1 = arith.constant 0 : i32
    return %c0_i32, %c0_i32_0 : i32, i32
  }
  func.func @transform_7(%arg0: i32, %arg1: i32, %arg2: memref<1xi32, #tpu.memory_space<smem>>) -> (i32, i32) {
    %c0_i32 = arith.constant 0 : i32
    %c0_i32_0 = arith.constant 0 : i32
    %c0_i32_1 = arith.constant 0 : i32
    return %c0_i32, %c0_i32_0 : i32, i32
  }
  func.func @transform_8(%arg0: i32, %arg1: i32, %arg2: memref<1xi32, #tpu.memory_space<smem>>) -> (i32, i32) {
    %c0_i32 = arith.constant 0 : i32
    %c0_i32_0 = arith.constant 0 : i32
    %c0_i32_1 = arith.constant 0 : i32
    return %c0_i32, %c0_i32_0 : i32, i32
  }
  func.func @transform_9(%arg0: i32, %arg1: i32, %arg2: memref<1xi32, #tpu.memory_space<smem>>) -> (i32, i32) {
    %c0_i32 = arith.constant 0 : i32
    %c0_i32_0 = arith.constant 0 : i32
    %c0_i32_1 = arith.constant 0 : i32
    return %c0_i32, %c0_i32_0 : i32, i32
  }
  func.func @transform_10(%arg0: i32, %arg1: i32, %arg2: memref<1xi32, #tpu.memory_space<smem>>) -> (i32, i32) {
    %c0_i32 = arith.constant 0 : i32
    %c0_i32_0 = arith.constant 0 : i32
    %c0_i32_1 = arith.constant 0 : i32
    return %c0_i32, %c0_i32_0 : i32, i32
  }
  func.func @transform_11(%arg0: i32, %arg1: i32, %arg2: memref<1xi32, #tpu.memory_space<smem>>) -> (i32, i32) {
    %c1_i32 = arith.constant 1 : i32
    %0 = arith.muli %arg0, %c1_i32 : i32
    %1 = arith.addi %0, %arg1 : i32
    %c0_i32 = arith.constant 0 : i32
    %c0_i32_0 = arith.constant 0 : i32
    return %1, %c0_i32 : i32, i32
  }
  func.func @transform_12(%arg0: i32, %arg1: i32, %arg2: memref<1xi32, #tpu.memory_space<smem>>) -> (i32, i32, i32) {
    %c1_i32 = arith.constant 1 : i32
    %0 = arith.muli %arg0, %c1_i32 : i32
    %1 = arith.addi %0, %arg1 : i32
    %c0_i32 = arith.constant 0 : i32
    %c0_i32_0 = arith.constant 0 : i32
    %c0_i32_1 = arith.constant 0 : i32
    return %1, %c0_i32, %c0_i32_0 : i32, i32, i32
  }
  func.func @transform_13(%arg0: i32, %arg1: i32, %arg2: memref<1xi32, #tpu.memory_space<smem>>) -> (i32, i32, i32) {
    %c0_i32 = arith.constant 0 : i32
    %c0_i32_0 = arith.constant 0 : i32
    %c0_i32_1 = arith.constant 0 : i32
    return %arg0, %c0_i32, %c0_i32_0 : i32, i32, i32
  }
  func.func @transform_14(%arg0: i32, %arg1: i32, %arg2: memref<1xi32, #tpu.memory_space<smem>>) -> (i32, i32, i32) {
    %c0_i32 = arith.constant 0 : i32
    %c0_i32_0 = arith.constant 0 : i32
    %c0_i32_1 = arith.constant 0 : i32
    return %arg0, %c0_i32, %c0_i32_0 : i32, i32, i32
  }
  func.func @transform_15(%arg0: i32, %arg1: i32, %arg2: memref<1xi32, #tpu.memory_space<smem>>) -> (i32, i32, i32) {
    %c0_i32 = arith.constant 0 : i32
    %c0_i32_0 = arith.constant 0 : i32
    %c0_i32_1 = arith.constant 0 : i32
    return %arg0, %c0_i32, %c0_i32_0 : i32, i32, i32
  }
}

</mosaic_0001>

<llo_original>
// kernel: tpu_custom_call.1
$region0: #{tpu_custom_call.1}
  #allocation0 [shape = 'u32[]', space=smem, size = 0x4, offset = 0x4, fixed_abs, tag = 'smem constant byte address 0x4 - core index']
  #allocation1 [shape = 'u32[72,128]{1,0:T(1,128)}', space=vmem, size = 0x9000, scoped, tag = 'internal scratch']
  #allocation2 [shape = 's32[1]{0}', space=sflag, size = 0x4, scoped, tag = 'scoped memory for tpu_custom_call.1']
  #allocation3 [shape = 's32[1]{0:T(128)S(6)}', space=smem, size = 0x200, scoped, tag = 'prefetched SMEM operand 0']
  #allocation4 [shape = 'f32[1,1]{1,0:T(1,128)S(1)}', space=vmem, size = 0x200, scoped, tag = 'scoped memory for tpu_custom_call.1']
  %s0 = inlined_call_operand.<no memory space> [shape: s32[1], index: 0, kind: input, shape index: {}]
  %s1 = inlined_call_operand.vmem [shape: bf16[1024,32], index: 1, kind: input, shape index: {}]
  %s2 = inlined_call_operand.vmem [shape: bf16[32,128], index: 2, kind: input, shape index: {}]
  %s3 = inlined_call_operand.vmem [shape: f32[1,128], index: 3, kind: input, shape index: {}]
  %s4 = inlined_call_operand.vmem [shape: bf16[128,256], index: 4, kind: input, shape index: {}]
  %s5 = inlined_call_operand.vmem [shape: f32[1,256], index: 5, kind: input, shape index: {}]
  %s6 = inlined_call_operand.vmem [shape: bf16[256,128], index: 6, kind: input, shape index: {}]
  %s7 = inlined_call_operand.vmem [shape: f32[1,128], index: 7, kind: input, shape index: {}]
  %s8 = inlined_call_operand.vmem [shape: bf16[128,256], index: 8, kind: input, shape index: {}]
  %s9 = inlined_call_operand.vmem [shape: f32[1,256], index: 9, kind: input, shape index: {}]
  %s10 = inlined_call_operand.vmem [shape: f32[1,128], index: 10, kind: input, shape index: {}]
  %s11 = inlined_call_operand.<no memory space> [shape: f32[1,1], index: 11, kind: input, shape index: {}]
  %s12 = inlined_call_operand.hbm [shape: bf16[1024,128], index: 12, kind: output, shape index: {0}]
  %s13 = inlined_call_operand.hbm [shape: f32[2,1,512], index: 13, kind: output, shape index: {1}]
  %s14 = inlined_call_operand.vmem [shape: f32[2,1,1], index: 14, kind: output, shape index: {2}]
  %s15 = inlined_call_operand.vmem [shape: f32[2,1,1], index: 15, kind: output, shape index: {3}]
  %s16 = inlined_call_operand.hbm [shape: f32[2,1,128], index: 16, kind: output, shape index: {4}]
  %17 = xla_tuple %s12, %s13, %s14, %s15, %s16
  %s18 = sld [smem:[#allocation0]]
  $region113: #{tpu_custom_call.1} parent=0
    _
  %s20 = ssub.s32 1, %s18
  %s21 = scalar_select 0, %s20, %s18
  %22 = sst [smem:[#allocation3]] %s0
  %v23 = vstv %s11
  %24 = vst [vmem:[#allocation4] sm:$0x1] %v23
  $region1: #{tpu_custom_call.1} parent=0
    #allocation5 [shape = 'u8[262144]{0}', space=vmem, size = 0x40000, scoped, tag = 'output window, operand 0']
    #allocation6 [shape = 's32[2]{0}', space=sflag, size = 0x8, scoped, tag = 'scoped memory for tpu_custom_call.1']
    #allocation7 [shape = 'u8[4096]{0}', space=vmem, size = 0x1000, scoped, tag = 'output window, operand 1']
    #allocation8 [shape = 's32[2]{0}', space=sflag, size = 0x8, scoped, tag = 'scoped memory for tpu_custom_call.1']
    #allocation9 [shape = 'u8[1024]{0}', space=vmem, size = 0x400, scoped, tag = 'output window, operand 4']
    %25 = vsyncpa [#allocation6], 0
    %s26 = scalar_lea.sflag [#allocation6], 1
    %27 = vsyncpa %s26, 0
    %28 = vsyncpa [#allocation8], 0
    %s29 = scalar_lea.sflag [#allocation8], 1
    %30 = vsyncpa %s29, 0
    loop: start=0, step=1, limit=4
    $region2: #{tpu_custom_call.1} parent=1 // loop_pre_header
      _
    $region3: #{tpu_custom_call.1} parent=1 // loop_header
      %s32 = sphi 0, %s36
      %p33 = scmp.ge.s32.totalorder %s32, 4
      %s39 = sphi 0, %s51
      %s40 = sphi 0, %s47
      %s41 = sphi 0, %s39
      %s42 = sphi 0, %s40
      %s43 = sphi 0, %s41
      %s44 = sphi 0, %s42
      %s56 = sphi 0, %s58
      %s59 = sphi 0, %s56
      %s60 = sphi 0, %s59
      %s76 = sphi 0, %s60
      %s80 = sphi 0, %s80
      %s82 = sphi 0, %s80
      %s83 = sphi 0, %s82
      %s97 = sphi 0, %s83
      %s101 = sphi 0, %s101
      %s103 = sphi 0, %s101
      %s104 = sphi 0, %s103
      %s118 = sphi 0, %s104
      %s122 = sphi 0, %s122
      %s124 = sphi 0, %s122
      %s125 = sphi 0, %s124
      %s139 = sphi 0, %s125
      %s143 = sphi 0, %s143
      %s145 = sphi 0, %s143
      %s146 = sphi 0, %s145
      %s160 = sphi 0, %s146
      %s164 = sphi 0, %s164
      %s166 = sphi 0, %s164
      %s167 = sphi 0, %s166
      %s181 = sphi 0, %s167
      %s185 = sphi 0, %s185
      %s187 = sphi 0, %s185
      %s188 = sphi 0, %s187
      %s202 = sphi 0, %s188
      %s206 = sphi 0, %s206
      %s208 = sphi 0, %s206
      %s209 = sphi 0, %s208
      %s223 = sphi 0, %s209
      %s227 = sphi 0, %s227
      %s229 = sphi 0, %s227
      %s230 = sphi 0, %s229
      %s244 = sphi 0, %s230
      %s248 = sphi 0, %s248
      %s250 = sphi 0, %s248
      %s251 = sphi 0, %s250
      %s265 = sphi 0, %s251
      %s269 = sphi 0, %s269
      %s271 = sphi 0, %s269
      %s272 = sphi 0, %s271
      %s286 = sphi 0, %s272
      %s294 = sphi 0, %s296
      %s297 = sphi 0, %s294
      %s298 = sphi 0, %s297
      %s314 = sphi 0, %s298
      %s322 = sphi 0, %s324
      %s325 = sphi 0, %s322
      %s326 = sphi 0, %s325
      %s342 = sphi 0, %s326
      %s348 = sphi 0, %s350
      %s351 = sphi 0, %s348
      %s352 = sphi 0, %s351
      %s368 = sphi 0, %s352
      %s374 = sphi 0, %s376
      %s377 = sphi 0, %s374
      %s378 = sphi 0, %s377
      %s394 = sphi 0, %s378
      %s400 = sphi 0, %s402
      %s403 = sphi 0, %s400
      %s404 = sphi 0, %s403
      %s420 = sphi 0, %s404
    $region4: #{tpu_custom_call.1} parent=1 // loop_header_branch
      %35 = sbr.rel (%p33) target = $region8
    $region5: #{tpu_custom_call.1} parent=1 // loop_body
      %s37 = ssub.s32 %s32, 1
      %s38 = ssub.s32 %s32, 2
      %s45 = sadd.s32 1, %s40
      %p46 = scmp.ge.s32.totalorder %s45, 1
      %s47 = scalar_select %p46, 0, %s45
      %s48 = sadd.s32 1, %s39
      %s49 = scalar_select %p46, %s48, %s39
      %p50 = scmp.ge.s32.totalorder %s49, 2
      %s51 = scalar_select %p50, 0, %s49
      %s52 = sadd.s32 %s39, %s40
      %s53 = sadd.s32 %s51, %s47
      %s54 = ssub.s32 %s52, %s53
      %p55 = scmp.eq.s32.totalorder %s54, 0
      %s57 = sadd.s32 %s56, 1
      %s58 = scalar_select %p55, %s56, %s57
      %p61 = pneg %p55
      %p62 = scmp.eq.s32.totalorder %s32, 1
      %p63 = por %p61, %p62
      %p64 = scmp.ne.s32.totalorder %s56, %s59
      %p65 = scmp.eq.s32.totalorder %s32, 0
      %p66 = por %p64, %p65
      %p67 = scmp.ne.s32.totalorder %s56, %s59
      %p68 = scmp.eq.s32.totalorder %s37, 1
      %p69 = por %p67, %p68
      %p70 = scmp.ne.s32.totalorder %s59, %s60
      %p71 = scmp.eq.s32.totalorder %s37, 0
      %p72 = por %p70, %p71
      %p73 = scmp.ne.s32.totalorder %s59, %s60
      %p74 = scmp.eq.s32.totalorder %s38, 1
      %p75 = por %p73, %p74
      %p77 = scmp.ne.s32.totalorder %s60, %s76
      %p78 = scmp.eq.s32.totalorder %s38, 0
      %p79 = por %p77, %p78
      %s81 = sadd.s32 %s80, 1
      %p84 = scmp.eq.s32.totalorder %s32, 1
      %p85 = scmp.ne.s32.totalorder %s80, %s82
      %p86 = scmp.eq.s32.totalorder %s32, 0
      %p87 = por %p85, %p86
      %p88 = scmp.ne.s32.totalorder %s80, %s82
      %p89 = scmp.eq.s32.totalorder %s37, 1
      %p90 = por %p88, %p89
      %p91 = scmp.ne.s32.totalorder %s82, %s83
      %p92 = scmp.eq.s32.totalorder %s37, 0
      %p93 = por %p91, %p92
      %p94 = scmp.ne.s32.totalorder %s82, %s83
      %p95 = scmp.eq.s32.totalorder %s38, 1
      %p96 = por %p94, %p95
      %p98 = scmp.ne.s32.totalorder %s83, %s97
      %p99 = scmp.eq.s32.totalorder %s38, 0
      %p100 = por %p98, %p99
      %s102 = sadd.s32 %s101, 1
      %p105 = scmp.eq.s32.totalorder %s32, 1
      %p106 = scmp.ne.s32.totalorder %s101, %s103
      %p107 = scmp.eq.s32.totalorder %s32, 0
      %p108 = por %p106, %p107
      %p109 = scmp.ne.s32.totalorder %s101, %s103
      %p110 = scmp.eq.s32.totalorder %s37, 1
      %p111 = por %p109, %p110
      %p112 = scmp.ne.s32.totalorder %s103, %s104
      %p113 = scmp.eq.s32.totalorder %s37, 0
      %p114 = por %p112, %p113
      %p115 = scmp.ne.s32.totalorder %s103, %s104
      %p116 = scmp.eq.s32.totalorder %s38, 1
      %p117 = por %p115, %p116
      %p119 = scmp.ne.s32.totalorder %s104, %s118
      %p120 = scmp.eq.s32.totalorder %s38, 0
      %p121 = por %p119, %p120
      %s123 = sadd.s32 %s122, 1
      %p126 = scmp.eq.s32.totalorder %s32, 1
      %p127 = scmp.ne.s32.totalorder %s122, %s124
      %p128 = scmp.eq.s32.totalorder %s32, 0
      %p129 = por %p127, %p128
      %p130 = scmp.ne.s32.totalorder %s122, %s124
      %p131 = scmp.eq.s32.totalorder %s37, 1
      %p132 = por %p130, %p131
      %p133 = scmp.ne.s32.totalorder %s124, %s125
      %p134 = scmp.eq.s32.totalorder %s37, 0
      %p135 = por %p133, %p134
      %p136 = scmp.ne.s32.totalorder %s124, %s125
      %p137 = scmp.eq.s32.totalorder %s38, 1
      %p138 = por %p136, %p137
      %p140 = scmp.ne.s32.totalorder %s125, %s139
      %p141 = scmp.eq.s32.totalorder %s38, 0
      %p142 = por %p140, %p141
      %s144 = sadd.s32 %s143, 1
      %p147 = scmp.eq.s32.totalorder %s32, 1
      %p148 = scmp.ne.s32.totalorder %s143, %s145
      %p149 = scmp.eq.s32.totalorder %s32, 0
      %p150 = por %p148, %p149
      %p151 = scmp.ne.s32.totalorder %s143, %s145
      %p152 = scmp.eq.s32.totalorder %s37, 1
      %p153 = por %p151, %p152
      %p154 = scmp.ne.s32.totalorder %s145, %s146
      %p155 = scmp.eq.s32.totalorder %s37, 0
      %p156 = por %p154, %p155
      %p157 = scmp.ne.s32.totalorder %s145, %s146
      %p158 = scmp.eq.s32.totalorder %s38, 1
      %p159 = por %p157, %p158
      %p161 = scmp.ne.s32.totalorder %s146, %s160
      %p162 = scmp.eq.s32.totalorder %s38, 0
      %p163 = por %p161, %p162
      %s165 = sadd.s32 %s164, 1
      %p168 = scmp.eq.s32.totalorder %s32, 1
      %p169 = scmp.ne.s32.totalorder %s164, %s166
      %p170 = scmp.eq.s32.totalorder %s32, 0
      %p171 = por %p169, %p170
      %p172 = scmp.ne.s32.totalorder %s164, %s166
      %p173 = scmp.eq.s32.totalorder %s37, 1
      %p174 = por %p172, %p173
      %p175 = scmp.ne.s32.totalorder %s166, %s167
      %p176 = scmp.eq.s32.totalorder %s37, 0
      %p177 = por %p175, %p176
      %p178 = scmp.ne.s32.totalorder %s166, %s167
      %p179 = scmp.eq.s32.totalorder %s38, 1
      %p180 = por %p178, %p179
      %p182 = scmp.ne.s32.totalorder %s167, %s181
      %p183 = scmp.eq.s32.totalorder %s38, 0
      %p184 = por %p182, %p183
      %s186 = sadd.s32 %s185, 1
      %p189 = scmp.eq.s32.totalorder %s32, 1
      %p190 = scmp.ne.s32.totalorder %s185, %s187
      %p191 = scmp.eq.s32.totalorder %s32, 0
      %p192 = por %p190, %p191
      %p193 = scmp.ne.s32.totalorder %s185, %s187
      %p194 = scmp.eq.s32.totalorder %s37, 1
      %p195 = por %p193, %p194
      %p196 = scmp.ne.s32.totalorder %s187, %s188
      %p197 = scmp.eq.s32.totalorder %s37, 0
      %p198 = por %p196, %p197
      %p199 = scmp.ne.s32.totalorder %s187, %s188
      %p200 = scmp.eq.s32.totalorder %s38, 1
      %p201 = por %p199, %p200
      %p203 = scmp.ne.s32.totalorder %s188, %s202
      %p204 = scmp.eq.s32.totalorder %s38, 0
      %p205 = por %p203, %p204
      %s207 = sadd.s32 %s206, 1
      %p210 = scmp.eq.s32.totalorder %s32, 1
      %p211 = scmp.ne.s32.totalorder %s206, %s208
      %p212 = scmp.eq.s32.totalorder %s32, 0
      %p213 = por %p211, %p212
      %p214 = scmp.ne.s32.totalorder %s206, %s208
      %p215 = scmp.eq.s32.totalorder %s37, 1
      %p216 = por %p214, %p215
      %p217 = scmp.ne.s32.totalorder %s208, %s209
      %p218 = scmp.eq.s32.totalorder %s37, 0
      %p219 = por %p217, %p218
      %p220 = scmp.ne.s32.totalorder %s208, %s209
      %p221 = scmp.eq.s32.totalorder %s38, 1
      %p222 = por %p220, %p221
      %p224 = scmp.ne.s32.totalorder %s209, %s223
      %p225 = scmp.eq.s32.totalorder %s38, 0
      %p226 = por %p224, %p225
      %s228 = sadd.s32 %s227, 1
      %p231 = scmp.eq.s32.totalorder %s32, 1
      %p232 = scmp.ne.s32.totalorder %s227, %s229
      %p233 = scmp.eq.s32.totalorder %s32, 0
      %p234 = por %p232, %p233
      %p235 = scmp.ne.s32.totalorder %s227, %s229
      %p236 = scmp.eq.s32.totalorder %s37, 1
      %p237 = por %p235, %p236
      %p238 = scmp.ne.s32.totalorder %s229, %s230
      %p239 = scmp.eq.s32.totalorder %s37, 0
      %p240 = por %p238, %p239
      %p241 = scmp.ne.s32.totalorder %s229, %s230
      %p242 = scmp.eq.s32.totalorder %s38, 1
      %p243 = por %p241, %p242
      %p245 = scmp.ne.s32.totalorder %s230, %s244
      %p246 = scmp.eq.s32.totalorder %s38, 0
      %p247 = por %p245, %p246
      %s249 = sadd.s32 %s248, 1
      %p252 = scmp.eq.s32.totalorder %s32, 1
      %p253 = scmp.ne.s32.totalorder %s248, %s250
      %p254 = scmp.eq.s32.totalorder %s32, 0
      %p255 = por %p253, %p254
      %p256 = scmp.ne.s32.totalorder %s248, %s250
      %p257 = scmp.eq.s32.totalorder %s37, 1
      %p258 = por %p256, %p257
      %p259 = scmp.ne.s32.totalorder %s250, %s251
      %p260 = scmp.eq.s32.totalorder %s37, 0
      %p261 = por %p259, %p260
      %p262 = scmp.ne.s32.totalorder %s250, %s251
      %p263 = scmp.eq.s32.totalorder %s38, 1
      %p264 = por %p262, %p263
      %p266 = scmp.ne.s32.totalorder %s251, %s265
      %p267 = scmp.eq.s32.totalorder %s38, 0
      %p268 = por %p266, %p267
      %s270 = sadd.s32 %s269, 1
      %p273 = scmp.eq.s32.totalorder %s32, 1
      %p274 = scmp.ne.s32.totalorder %s269, %s271
      %p275 = scmp.eq.s32.totalorder %s32, 0
      %p276 = por %p274, %p275
      %p277 = scmp.ne.s32.totalorder %s269, %s271
      %p278 = scmp.eq.s32.totalorder %s37, 1
      %p279 = por %p277, %p278
      %p280 = scmp.ne.s32.totalorder %s271, %s272
      %p281 = scmp.eq.s32.totalorder %s37, 0
      %p282 = por %p280, %p281
      %p283 = scmp.ne.s32.totalorder %s271, %s272
      %p284 = scmp.eq.s32.totalorder %s38, 1
      %p285 = por %p283, %p284
      %p287 = scmp.ne.s32.totalorder %s272, %s286
      %p288 = scmp.eq.s32.totalorder %s38, 0
      %p289 = por %p287, %p288
      %s290 = sadd.s32 %s39, %s40
      %s291 = sadd.s32 %s51, %s47
      %s292 = ssub.s32 %s290, %s291
      %p293 = scmp.eq.s32.totalorder %s292, 0
      %s295 = sadd.s32 %s294, 1
      %s296 = scalar_select %p293, %s294, %s295
      %p299 = pneg %p293
      %p300 = scmp.eq.s32.totalorder %s32, 1
      %p301 = por %p299, %p300
      %p302 = scmp.ne.s32.totalorder %s294, %s297
      %p303 = scmp.eq.s32.totalorder %s32, 0
      %p304 = por %p302, %p303
      %p305 = scmp.ne.s32.totalorder %s294, %s297
      %p306 = scmp.eq.s32.totalorder %s37, 1
      %p307 = por %p305, %p306
      %p308 = scmp.ne.s32.totalorder %s297, %s298
      %p309 = scmp.eq.s32.totalorder %s37, 0
      %p310 = por %p308, %p309
      %p311 = scmp.ne.s32.totalorder %s297, %s298
      %p312 = scmp.eq.s32.totalorder %s38, 1
      %p313 = por %p311, %p312
      %p315 = scmp.ne.s32.totalorder %s298, %s314
      %p316 = scmp.eq.s32.totalorder %s38, 0
      %p317 = por %p315, %p316
      %s318 = sadd.s32 %s39, %s40
      %s319 = sadd.s32 %s51, %s47
      %s320 = ssub.s32 %s318, %s319
      %p321 = scmp.eq.s32.totalorder %s320, 0
      %s323 = sadd.s32 %s322, 1
      %s324 = scalar_select %p321, %s322, %s323
      %p327 = pneg %p321
      %p328 = scmp.eq.s32.totalorder %s32, 1
      %p329 = por %p327, %p328
      %p330 = scmp.ne.s32.totalorder %s322, %s325
      %p331 = scmp.eq.s32.totalorder %s32, 0
      %p332 = por %p330, %p331
      %p333 = scmp.ne.s32.totalorder %s322, %s325
      %p334 = scmp.eq.s32.totalorder %s37, 1
      %p335 = por %p333, %p334
      %p336 = scmp.ne.s32.totalorder %s325, %s326
      %p337 = scmp.eq.s32.totalorder %s37, 0
      %p338 = por %p336, %p337
      %p339 = scmp.ne.s32.totalorder %s325, %s326
      %p340 = scmp.eq.s32.totalorder %s38, 1
      %p341 = por %p339, %p340
      %p343 = scmp.ne.s32.totalorder %s326, %s342
      %p344 = scmp.eq.s32.totalorder %s38, 0
      %p345 = por %p343, %p344
      %s346 = ssub.s32 %s39, %s51
      %p347 = scmp.eq.s32.totalorder %s346, 0
      %s349 = sadd.s32 %s348, 1
      %s350 = scalar_select %p347, %s348, %s349
      %p353 = pneg %p347
      %p354 = scmp.eq.s32.totalorder %s32, 1
      %p355 = por %p353, %p354
      %p356 = scmp.ne.s32.totalorder %s348, %s351
      %p357 = scmp.eq.s32.totalorder %s32, 0
      %p358 = por %p356, %p357
      %p359 = scmp.ne.s32.totalorder %s348, %s351
      %p360 = scmp.eq.s32.totalorder %s37, 1
      %p361 = por %p359, %p360
      %p362 = scmp.ne.s32.totalorder %s351, %s352
      %p363 = scmp.eq.s32.totalorder %s37, 0
      %p364 = por %p362, %p363
      %p365 = scmp.ne.s32.totalorder %s351, %s352
      %p366 = scmp.eq.s32.totalorder %s38, 1
      %p367 = por %p365, %p366
      %p369 = scmp.ne.s32.totalorder %s352, %s368
      %p370 = scmp.eq.s32.totalorder %s38, 0
      %p371 = por %p369, %p370
      %s372 = ssub.s32 %s39, %s51
      %p373 = scmp.eq.s32.totalorder %s372, 0
      %s375 = sadd.s32 %s374, 1
      %s376 = scalar_select %p373, %s374, %s375
      %p379 = pneg %p373
      %p380 = scmp.eq.s32.totalorder %s32, 1
      %p381 = por %p379, %p380
      %p382 = scmp.ne.s32.totalorder %s374, %s377
      %p383 = scmp.eq.s32.totalorder %s32, 0
      %p384 = por %p382, %p383
      %p385 = scmp.ne.s32.totalorder %s374, %s377
      %p386 = scmp.eq.s32.totalorder %s37, 1
      %p387 = por %p385, %p386
      %p388 = scmp.ne.s32.totalorder %s377, %s378
      %p389 = scmp.eq.s32.totalorder %s37, 0
      %p390 = por %p388, %p389
      %p391 = scmp.ne.s32.totalorder %s377, %s378
      %p392 = scmp.eq.s32.totalorder %s38, 1
      %p393 = por %p391, %p392
      %p395 = scmp.ne.s32.totalorder %s378, %s394
      %p396 = scmp.eq.s32.totalorder %s38, 0
      %p397 = por %p395, %p396
      %s398 = ssub.s32 %s39, %s51
      %p399 = scmp.eq.s32.totalorder %s398, 0
      %s401 = sadd.s32 %s400, 1
      %s402 = scalar_select %p399, %s400, %s401
      %p405 = pneg %p399
      %p406 = scmp.eq.s32.totalorder %s32, 1
      %p407 = por %p405, %p406
      %p408 = scmp.ne.s32.totalorder %s400, %s403
      %p409 = scmp.eq.s32.totalorder %s32, 0
      %p410 = por %p408, %p409
      %p411 = scmp.ne.s32.totalorder %s400, %s403
      %p412 = scmp.eq.s32.totalorder %s37, 1
      %p413 = por %p411, %p412
      %p414 = scmp.ne.s32.totalorder %s403, %s404
      %p415 = scmp.eq.s32.totalorder %s37, 0
      %p416 = por %p414, %p415
      %p417 = scmp.ne.s32.totalorder %s403, %s404
      %p418 = scmp.eq.s32.totalorder %s38, 1
      %p419 = por %p417, %p418
      %p421 = scmp.ne.s32.totalorder %s404, %s420
      %p422 = scmp.eq.s32.totalorder %s38, 0
      %p423 = por %p421, %p422
      %p424 = scmp.le.s32.totalorder 1, %s32
      %p425 = scmp.lt.s32.totalorder %s32, 3
      %p426 = pnand %p424, %p425
      %p427 = pneg %p426
      // Predicated region
      $region9: #{tpu_custom_call.1} parent=5 // pred_check
        _
      $region10: #{tpu_custom_call.1} parent=5 // pred_check_branch
        %429 = sbr.rel (%p426) target = $region12
      $region11: #{tpu_custom_call.1} parent=5 // pred_region
        %s430 = ssub.s32 %s32, 1
        // Predicated region
        $region13: #{tpu_custom_call.1} parent=11 // pred_check
          %p431 = pneg %p93
        $region14: #{tpu_custom_call.1} parent=11 // pred_check_branch
          %433 = sbr.rel (%p431) target = $region16
        $region15: #{tpu_custom_call.1} parent=11 // pred_region
          _
        $region16: #{tpu_custom_call.1} parent=11 // pred_fallthru
          _
        // Predicated region
        $region17: #{tpu_custom_call.1} parent=11 // pred_check
          %p434 = pneg %p114
        $region18: #{tpu_custom_call.1} parent=11 // pred_check_branch
          %436 = sbr.rel (%p434) target = $region20
        $region19: #{tpu_custom_call.1} parent=11 // pred_region
          _
        $region20: #{tpu_custom_call.1} parent=11 // pred_fallthru
          _
        // Predicated region
        $region21: #{tpu_custom_call.1} parent=11 // pred_check
          %p437 = pneg %p135
        $region22: #{tpu_custom_call.1} parent=11 // pred_check_branch
          %439 = sbr.rel (%p437) target = $region24
        $region23: #{tpu_custom_call.1} parent=11 // pred_region
          _
        $region24: #{tpu_custom_call.1} parent=11 // pred_fallthru
          _
        // Predicated region
        $region25: #{tpu_custom_call.1} parent=11 // pred_check
          %p440 = pneg %p156
        $region26: #{tpu_custom_call.1} parent=11 // pred_check_branch
          %442 = sbr.rel (%p440) target = $region28
        $region27: #{tpu_custom_call.1} parent=11 // pred_region
          _
        $region28: #{tpu_custom_call.1} parent=11 // pred_fallthru
          _
        // Predicated region
        $region29: #{tpu_custom_call.1} parent=11 // pred_check
          %p443 = pneg %p177
        $region30: #{tpu_custom_call.1} parent=11 // pred_check_branch
          %445 = sbr.rel (%p443) target = $region32
        $region31: #{tpu_custom_call.1} parent=11 // pred_region
          _
        $region32: #{tpu_custom_call.1} parent=11 // pred_fallthru
          _
        // Predicated region
        $region33: #{tpu_custom_call.1} parent=11 // pred_check
          %p446 = pneg %p198
        $region34: #{tpu_custom_call.1} parent=11 // pred_check_branch
          %448 = sbr.rel (%p446) target = $region36
        $region35: #{tpu_custom_call.1} parent=11 // pred_region
          _
        $region36: #{tpu_custom_call.1} parent=11 // pred_fallthru
          _
        // Predicated region
        $region37: #{tpu_custom_call.1} parent=11 // pred_check
          %p449 = pneg %p219
        $region38: #{tpu_custom_call.1} parent=11 // pred_check_branch
          %451 = sbr.rel (%p449) target = $region40
        $region39: #{tpu_custom_call.1} parent=11 // pred_region
          _
        $region40: #{tpu_custom_call.1} parent=11 // pred_fallthru
          _
        // Predicated region
        $region41: #{tpu_custom_call.1} parent=11 // pred_check
          %p452 = pneg %p240
        $region42: #{tpu_custom_call.1} parent=11 // pred_check_branch
          %454 = sbr.rel (%p452) target = $region44
        $region43: #{tpu_custom_call.1} parent=11 // pred_region
          _
        $region44: #{tpu_custom_call.1} parent=11 // pred_fallthru
          _
        // Predicated region
        $region45: #{tpu_custom_call.1} parent=11 // pred_check
          %p455 = pneg %p261
        $region46: #{tpu_custom_call.1} parent=11 // pred_check_branch
          %457 = sbr.rel (%p455) target = $region48
        $region47: #{tpu_custom_call.1} parent=11 // pred_region
          _
        $region48: #{tpu_custom_call.1} parent=11 // pred_fallthru
          _
        // Predicated region
        $region49: #{tpu_custom_call.1} parent=11 // pred_check
          %p458 = pneg %p282
        $region50: #{tpu_custom_call.1} parent=11 // pred_check_branch
          %460 = sbr.rel (%p458) target = $region52
        $region51: #{tpu_custom_call.1} parent=11 // pred_region
          _
        $region52: #{tpu_custom_call.1} parent=11 // pred_fallthru
          _
      $region12: #{tpu_custom_call.1} parent=5 // pred_fallthru
        _
      %p461 = scmp.lt.s32.totalorder %s32, 2
      // Predicated region
      $region53: #{tpu_custom_call.1} parent=5 // pred_check
        %p462 = pneg %p461
      $region54: #{tpu_custom_call.1} parent=5 // pred_check_branch
        %464 = sbr.rel (%p462) target = $region56
      $region55: #{tpu_custom_call.1} parent=5 // pred_region
        // Predicated region
        $region57: #{tpu_custom_call.1} parent=55 // pred_check
          %p465 = pneg %p66
        $region58: #{tpu_custom_call.1} parent=55 // pred_check_branch
          %467 = sbr.rel (%p465) target = $region60
        $region59: #{tpu_custom_call.1} parent=55 // pred_region
          %s468 = sadd.s32 %s39, %s40
          %s469 = smul.u32 64, %s468
          %p470 = scmp.lt.s32.totalorder %s469, 127
          %s471 = scalar_select %p470, %s469, 127
          %s472 = smul.addr %s471, 4
          %s473 = scalar_lea.vmem %s1, %s472
          %s474 = sadd.s32 %s39, %s40
          %s475 = smul.u32 64, %s474
        $region60: #{tpu_custom_call.1} parent=55 // pred_fallthru
          _
      $region56: #{tpu_custom_call.1} parent=5 // pred_fallthru
        _
      %p476 = scmp.le.s32.totalorder 1, %s32
      %p477 = scmp.lt.s32.totalorder %s32, 3
      %p478 = pnand %p476, %p477
      %p479 = pneg %p478
      // Predicated region
      $region61: #{tpu_custom_call.1} parent=5 // pred_check
        _
      $region62: #{tpu_custom_call.1} parent=5 // pred_check_branch
        %481 = sbr.rel (%p478) target = $region64
      $region63: #{tpu_custom_call.1} parent=5 // pred_region
        %s482 = ssub.s32 %s32, 1
        %s483 = sadd.s32 %s41, %s42
        %s484 = smul.u32 64, %s483
        %p485 = scmp.lt.s32.totalorder %s484, 127
        %s486 = scalar_select %p485, %s484, 127
        %s487 = smul.addr %s486, 4
        %s488 = scalar_lea.vmem %s1, %s487
        %p489 = pneg %p72
        %p490 = pneg %p69
        %p491 = pneg %p93
        %p492 = pneg %p90
        %p493 = pneg %p114
        %p494 = pneg %p111
        %p495 = pneg %p135
        %p496 = pneg %p132
        %p497 = pneg %p156
        %p498 = pneg %p153
        %p499 = pneg %p177
        %p500 = pneg %p174
        %p501 = pneg %p198
        %p502 = pneg %p195
        %p503 = pneg %p219
        %p504 = pneg %p216
        %p505 = pneg %p240
        %p506 = pneg %p237
        %p507 = pneg %p261
        %p508 = pneg %p258
        %p509 = pneg %p282
        %p510 = pneg %p279
        %p511 = pneg %p310
        %p512 = pneg %p307
        %s513 = sand.u32 %s297, 1
        %s514 = scalar_lea.sflag [#allocation6], %s513
        %s515 = sand.u32 %s297, 1
        %s516 = smul.addr %s515, 256
        %s517 = scalar_lea.vmem [#allocation5], %s516
        %p518 = pneg %p338
        %p519 = pneg %p335
        %s520 = sand.u32 %s37, 1
        %s521 = scalar_lea.sflag [#allocation8], %s520
        %s522 = sand.u32 %s325, 1
        %s523 = smul.addr %s522, 4
        %s524 = scalar_lea.vmem [#allocation7], %s523
        %p525 = pneg %p364
        %p526 = pneg %p361
        %p527 = scmp.lt.s32.totalorder %s41, 1
        %s528 = scalar_select %p527, %s41, 1
        %s529 = scalar_lea.vmem %s14, %s528
        %p530 = pneg %p390
        %p531 = pneg %p387
        %p532 = scmp.lt.s32.totalorder %s41, 1
        %s533 = scalar_select %p532, %s41, 1
        %s534 = scalar_lea.vmem %s15, %s533
        %p535 = pneg %p416
        %p536 = pneg %p413
        %s537 = sand.u32 %s37, 1
        %s538 = scalar_lea.sflag [#allocation8], %s537
        %s539 = sand.u32 %s403, 1
        %s540 = scalar_lea.vmem [#allocation9], %s539
        %s541 = sadd.s32 %s41, %s42
        %s542 = smul.u32 64, %s541
        %p543 = scmp.lt.s32.totalorder %s542, 127
        %s544 = scalar_select %p543, %s542, 127
        %s545 = smul.addr %s544, 4
        %s546 = scalar_lea.vmem %s1, %s545
        %s547 = sadd.s32 %s41, %s42
        %s548 = smul.u32 64, %s547
        %s549 = sadd.s32 %s41, %s42
        %s550 = smul.u32 64, %s549
        %s551 = sadd.s32 %s41, %s42
        %p552 = scmp.lt.s32.totalorder %s41, 1
        %s553 = scalar_select %p552, %s41, 1
        %s554 = scalar_lea.vmem %s14, %s553
        %p555 = scmp.lt.s32.totalorder %s41, 1
        %s556 = scalar_select %p555, %s41, 1
        %s557 = scalar_lea.vmem %s15, %s556
        %p559 = scmp.eq.s32.totalorder %s42, 0
        // Predicated region
        $region65: #{tpu_custom_call.1} parent=63 // pred_check
          %p560 = pneg %p559
        $region66: #{tpu_custom_call.1} parent=63 // pred_check_branch
          %562 = sbr.rel (%p560) target = $region68
        $region67: #{tpu_custom_call.1} parent=63 // pred_region
          %vm563 = vcmask 0
          %564 = vst.msk [vmem:[%s554] sm:$0x1] %vm563, -1e+30
          %565 = vst.msk [vmem:[%s557] sm:$0x1] %vm563, 0.0
          %566 = vst [vmem:[%s540] sm:$0x1] 0.0
        $region68: #{tpu_custom_call.1} parent=63 // pred_fallthru
          _
        %v567 = vld [vmem:[%s546] sm:$0xf]
        %v568 = vld [vmem:[%s546 + $0x4] sm:$0xf]
        %v569 = vld [vmem:[%s546 + $0x8] sm:$0xf]
        %v570 = vld [vmem:[%s546 + $0xc] sm:$0xf]
        %v571 = vld [vmem:[%s546 + $0x10] sm:$0xf]
        %v572 = vld [vmem:[%s546 + $0x14] sm:$0xf]
        %v573 = vld [vmem:[%s546 + $0x18] sm:$0xf]
        %v574 = vld [vmem:[%s546 + $0x1c] sm:$0xf]
        %v575 = vld [vmem:[%s546 + $0x20] sm:$0xf]
        %v576 = vld [vmem:[%s546 + $0x24] sm:$0xf]
        %v577 = vld [vmem:[%s546 + $0x28] sm:$0xf]
        %v578 = vld [vmem:[%s546 + $0x2c] sm:$0xf]
        %v579 = vld [vmem:[%s546 + $0x30] sm:$0xf]
        %v580 = vld [vmem:[%s546 + $0x34] sm:$0xf]
        %v581 = vld [vmem:[%s546 + $0x38] sm:$0xf]
        %v582 = vld [vmem:[%s546 + $0x3c] sm:$0xf]
        %v583 = vld [vmem:[%s546 + $0x40] sm:$0xf]
        %v584 = vld [vmem:[%s546 + $0x44] sm:$0xf]
        %v585 = vld [vmem:[%s546 + $0x48] sm:$0xf]
        %v586 = vld [vmem:[%s546 + $0x4c] sm:$0xf]
        %v587 = vld [vmem:[%s546 + $0x50] sm:$0xf]
        %v588 = vld [vmem:[%s546 + $0x54] sm:$0xf]
        %v589 = vld [vmem:[%s546 + $0x58] sm:$0xf]
        %v590 = vld [vmem:[%s546 + $0x5c] sm:$0xf]
        %v591 = vld [vmem:[%s546 + $0x60] sm:$0xf]
        %v592 = vld [vmem:[%s546 + $0x64] sm:$0xf]
        %v593 = vld [vmem:[%s546 + $0x68] sm:$0xf]
        %v594 = vld [vmem:[%s546 + $0x6c] sm:$0xf]
        %v595 = vld [vmem:[%s546 + $0x70] sm:$0xf]
        %v596 = vld [vmem:[%s546 + $0x74] sm:$0xf]
        %v597 = vld [vmem:[%s546 + $0x78] sm:$0xf]
        %v598 = vld [vmem:[%s546 + $0x7c] sm:$0xf]
        %v599 = vld [vmem:[%s546 + $0x80] sm:$0xf]
        %v600 = vld [vmem:[%s546 + $0x84] sm:$0xf]
        %v601 = vld [vmem:[%s546 + $0x88] sm:$0xf]
        %v602 = vld [vmem:[%s546 + $0x8c] sm:$0xf]
        %v603 = vld [vmem:[%s546 + $0x90] sm:$0xf]
        %v604 = vld [vmem:[%s546 + $0x94] sm:$0xf]
        %v605 = vld [vmem:[%s546 + $0x98] sm:$0xf]
        %v606 = vld [vmem:[%s546 + $0x9c] sm:$0xf]
        %v607 = vld [vmem:[%s546 + $0xa0] sm:$0xf]
        %v608 = vld [vmem:[%s546 + $0xa4] sm:$0xf]
        %v609 = vld [vmem:[%s546 + $0xa8] sm:$0xf]
        %v610 = vld [vmem:[%s546 + $0xac] sm:$0xf]
        %v611 = vld [vmem:[%s546 + $0xb0] sm:$0xf]
        %v612 = vld [vmem:[%s546 + $0xb4] sm:$0xf]
        %v613 = vld [vmem:[%s546 + $0xb8] sm:$0xf]
        %v614 = vld [vmem:[%s546 + $0xbc] sm:$0xf]
        %v615 = vld [vmem:[%s546 + $0xc0] sm:$0xf]
        %v616 = vld [vmem:[%s546 + $0xc4] sm:$0xf]
        %v617 = vld [vmem:[%s546 + $0xc8] sm:$0xf]
        %v618 = vld [vmem:[%s546 + $0xcc] sm:$0xf]
        %v619 = vld [vmem:[%s546 + $0xd0] sm:$0xf]
        %v620 = vld [vmem:[%s546 + $0xd4] sm:$0xf]
        %v621 = vld [vmem:[%s546 + $0xd8] sm:$0xf]
        %v622 = vld [vmem:[%s546 + $0xdc] sm:$0xf]
        %v623 = vld [vmem:[%s546 + $0xe0] sm:$0xf]
        %v624 = vld [vmem:[%s546 + $0xe4] sm:$0xf]
        %v625 = vld [vmem:[%s546 + $0xe8] sm:$0xf]
        %v626 = vld [vmem:[%s546 + $0xec] sm:$0xf]
        %v627 = vld [vmem:[%s546 + $0xf0] sm:$0xf]
        %v628 = vld [vmem:[%s546 + $0xf4] sm:$0xf]
        %v629 = vld [vmem:[%s546 + $0xf8] sm:$0xf]
        %v630 = vld [vmem:[%s546 + $0xfc] sm:$0xf]
        %v631 = vld [vmem:[%s2] sm:$0xf]
        %v632 = vld [vmem:[%s2 + $0x4] sm:$0xf]
        %v633 = vld [vmem:[%s2 + $0x8] sm:$0xf]
        %v634 = vld [vmem:[%s2 + $0xc] sm:$0xf]
        %v635 = vld [vmem:[%s3] sm:$0x1]
        %v637 = vperm.slane %v635, 0
        %v703 = vunpack.c.l.b16 %v567
        %v704 = vunpack.c.l.b16 %v568
        %v705 = vunpack.c.l.b16 %v569
        %v706 = vunpack.c.l.b16 %v570
        %v707 = vunpack.c.l.b16 %v571
        %v708 = vunpack.c.l.b16 %v572
        %v709 = vunpack.c.l.b16 %v573
        %v710 = vunpack.c.l.b16 %v574
        %v711 = vunpack.c.l.b16 %v575
        %v712 = vunpack.c.l.b16 %v576
        %v713 = vunpack.c.l.b16 %v577
        %v714 = vunpack.c.l.b16 %v578
        %v715 = vunpack.c.l.b16 %v579
        %v716 = vunpack.c.l.b16 %v580
        %v717 = vunpack.c.l.b16 %v581
        %v718 = vunpack.c.l.b16 %v582
        %v719 = vunpack.c.l.b16 %v583
        %v720 = vunpack.c.l.b16 %v584
        %v721 = vunpack.c.l.b16 %v585
        %v722 = vunpack.c.l.b16 %v586
        %v723 = vunpack.c.l.b16 %v587
        %v724 = vunpack.c.l.b16 %v588
        %v725 = vunpack.c.l.b16 %v589
        %v726 = vunpack.c.l.b16 %v590
        %v727 = vunpack.c.l.b16 %v591
        %v728 = vunpack.c.l.b16 %v592
        %v729 = vunpack.c.l.b16 %v593
        %v730 = vunpack.c.l.b16 %v594
        %v731 = vunpack.c.l.b16 %v595
        %v732 = vunpack.c.l.b16 %v596
        %v733 = vunpack.c.l.b16 %v597
        %v734 = vunpack.c.l.b16 %v598
        %v735 = vunpack.c.l.b16 %v599
        %v736 = vunpack.c.l.b16 %v600
        %v737 = vunpack.c.l.b16 %v601
        %v738 = vunpack.c.l.b16 %v602
        %v739 = vunpack.c.l.b16 %v603
        %v740 = vunpack.c.l.b16 %v604
        %v741 = vunpack.c.l.b16 %v605
        %v742 = vunpack.c.l.b16 %v606
        %v743 = vunpack.c.l.b16 %v607
        %v744 = vunpack.c.l.b16 %v608
        %v745 = vunpack.c.l.b16 %v609
        %v746 = vunpack.c.l.b16 %v610
        %v747 = vunpack.c.l.b16 %v611
        %v748 = vunpack.c.l.b16 %v612
        %v749 = vunpack.c.l.b16 %v613
        %v750 = vunpack.c.l.b16 %v614
        %v751 = vunpack.c.l.b16 %v615
        %v752 = vunpack.c.l.b16 %v616
        %v753 = vunpack.c.l.b16 %v617
        %v754 = vunpack.c.l.b16 %v618
        %v755 = vunpack.c.l.b16 %v619
        %v756 = vunpack.c.l.b16 %v620
        %v757 = vunpack.c.l.b16 %v621
        %v758 = vunpack.c.l.b16 %v622
        %v759 = vunpack.c.l.b16 %v623
        %v760 = vunpack.c.l.b16 %v624
        %v761 = vunpack.c.l.b16 %v625
        %v762 = vunpack.c.l.b16 %v626
        %v763 = vunpack.c.l.b16 %v627
        %v764 = vunpack.c.l.b16 %v628
        %v765 = vunpack.c.l.b16 %v629
        %v766 = vunpack.c.l.b16 %v630
        %v767 = vpack.c.b16 %v704, %v703
        %v768 = vpack.c.b16 %v706, %v705
        %v769 = vpack.c.b16 %v708, %v707
        %v770 = vpack.c.b16 %v710, %v709
        %v771 = vpack.c.b16 %v712, %v711
        %v772 = vpack.c.b16 %v714, %v713
        %v773 = vpack.c.b16 %v716, %v715
        %v774 = vpack.c.b16 %v718, %v717
        %v775 = vpack.c.b16 %v720, %v719
        %v776 = vpack.c.b16 %v722, %v721
        %v777 = vpack.c.b16 %v724, %v723
        %v778 = vpack.c.b16 %v726, %v725
        %v779 = vpack.c.b16 %v728, %v727
        %v780 = vpack.c.b16 %v730, %v729
        %v781 = vpack.c.b16 %v732, %v731
        %v782 = vpack.c.b16 %v734, %v733
        %v783 = vpack.c.b16 %v736, %v735
        %v784 = vpack.c.b16 %v738, %v737
        %v785 = vpack.c.b16 %v740, %v739
        %v786 = vpack.c.b16 %v742, %v741
        %v787 = vpack.c.b16 %v744, %v743
        %v788 = vpack.c.b16 %v746, %v745
        %v789 = vpack.c.b16 %v748, %v747
        %v790 = vpack.c.b16 %v750, %v749
        %v791 = vpack.c.b16 %v752, %v751
        %v792 = vpack.c.b16 %v754, %v753
        %v793 = vpack.c.b16 %v756, %v755
        %v794 = vpack.c.b16 %v758, %v757
        %v795 = vpack.c.b16 %v760, %v759
        %v796 = vpack.c.b16 %v762, %v761
        %v797 = vpack.c.b16 %v764, %v763
        %v798 = vpack.c.b16 %v766, %v765
        %v803 = vunpack.c.l.b16 %v631
        %v804 = vunpack.c.l.b16 %v632
        %v805 = vunpack.c.l.b16 %v633
        %v806 = vunpack.c.l.b16 %v634
        %v807 = vpack.c.b16 %v804, %v803
        %v808 = vpack.c.b16 %v806, %v805
        %vm811 = vcmask 261120
        %v813 = vsel %vm811, %v767, 0
        %v816 = vsel %vm811, %v768, 0
        %v819 = vsel %vm811, %v769, 0
        %v822 = vsel %vm811, %v770, 0
        %v825 = vsel %vm811, %v771, 0
        %v828 = vsel %vm811, %v772, 0
        %v831 = vsel %vm811, %v773, 0
        %v834 = vsel %vm811, %v774, 0
        %v837 = vsel %vm811, %v775, 0
        %v840 = vsel %vm811, %v776, 0
        %v843 = vsel %vm811, %v777, 0
        %v846 = vsel %vm811, %v778, 0
        %v849 = vsel %vm811, %v779, 0
        %v852 = vsel %vm811, %v780, 0
        %v855 = vsel %vm811, %v781, 0
        %v858 = vsel %vm811, %v782, 0
        %v861 = vsel %vm811, %v783, 0
        %v864 = vsel %vm811, %v784, 0
        %v867 = vsel %vm811, %v785, 0
        %v870 = vsel %vm811, %v786, 0
        %v873 = vsel %vm811, %v787, 0
        %v876 = vsel %vm811, %v788, 0
        %v879 = vsel %vm811, %v789, 0
        %v882 = vsel %vm811, %v790, 0
        %v885 = vsel %vm811, %v791, 0
        %v888 = vsel %vm811, %v792, 0
        %v891 = vsel %vm811, %v793, 0
        %v894 = vsel %vm811, %v794, 0
        %v897 = vsel %vm811, %v795, 0
        %v900 = vsel %vm811, %v796, 0
        %v903 = vsel %vm811, %v797, 0
        %v906 = vsel %vm811, %v798, 0
        %908 = vmatpush.bf16.msra.mxu0 0
        %909 = vmatpush.bf16.msra.mxu0 0
        %910 = vmatpush.bf16.msra.mxu0 0
        %911 = vmatpush.bf16.msra.mxu0 0
        %912 = vmatpush.bf16.msra.mxu0 0
        %913 = vmatpush.bf16.msra.mxu0 0
        %914 = vmatpush.bf16.msra.mxu0 %v808
        %915 = vmatpush.bf16.msra.mxu0 %v807
        %916 = vmatmul.bf16.gmra.mxu0 %v813
        %v917 = vpop.f32.mrf.mxu0
        %v918 = vadd.f32 %v637, %v917
        %v919 = vpop.f32.mrf.mxu0
        %v920 = vadd.f32 %v637, %v919
        %921 = vmatmul.bf16.gmra.mxu0 %v816
        %v922 = vpop.f32.mrf.mxu0
        %v923 = vadd.f32 %v637, %v922
        %v924 = vpop.f32.mrf.mxu0
        %v925 = vadd.f32 %v637, %v924
        %926 = vmatmul.bf16.gmra.mxu0 %v819
        %v927 = vpop.f32.mrf.mxu0
        %v928 = vadd.f32 %v637, %v927
        %v929 = vpop.f32.mrf.mxu0
        %v930 = vadd.f32 %v637, %v929
        %931 = vmatmul.bf16.gmra.mxu0 %v822
        %v932 = vpop.f32.mrf.mxu0
        %v933 = vadd.f32 %v637, %v932
        %v934 = vpop.f32.mrf.mxu0
        %v935 = vadd.f32 %v637, %v934
        %936 = vmatmul.bf16.gmra.mxu0 %v825
        %v937 = vpop.f32.mrf.mxu0
        %v938 = vadd.f32 %v637, %v937
        %v939 = vpop.f32.mrf.mxu0
        %v940 = vadd.f32 %v637, %v939
        %941 = vmatmul.bf16.gmra.mxu0 %v828
        %v942 = vpop.f32.mrf.mxu0
        %v943 = vadd.f32 %v637, %v942
        %v944 = vpop.f32.mrf.mxu0
        %v945 = vadd.f32 %v637, %v944
        %946 = vmatmul.bf16.gmra.mxu0 %v831
        %v947 = vpop.f32.mrf.mxu0
        %v948 = vadd.f32 %v637, %v947
        %v949 = vpop.f32.mrf.mxu0
        %v950 = vadd.f32 %v637, %v949
        %951 = vmatmul.bf16.gmra.mxu0 %v834
        %v952 = vpop.f32.mrf.mxu0
        %v953 = vadd.f32 %v637, %v952
        %v954 = vpop.f32.mrf.mxu0
        %v955 = vadd.f32 %v637, %v954
        %956 = vmatmul.bf16.gmra.mxu0 %v837
        %v957 = vpop.f32.mrf.mxu0
        %v958 = vadd.f32 %v637, %v957
        %v959 = vpop.f32.mrf.mxu0
        %v960 = vadd.f32 %v637, %v959
        %961 = vmatmul.bf16.gmra.mxu0 %v840
        %v962 = vpop.f32.mrf.mxu0
        %v963 = vadd.f32 %v637, %v962
        %v964 = vpop.f32.mrf.mxu0
        %v965 = vadd.f32 %v637, %v964
        %966 = vmatmul.bf16.gmra.mxu0 %v843
        %v967 = vpop.f32.mrf.mxu0
        %v968 = vadd.f32 %v637, %v967
        %v969 = vpop.f32.mrf.mxu0
        %v970 = vadd.f32 %v637, %v969
        %971 = vmatmul.bf16.gmra.mxu0 %v846
        %v972 = vpop.f32.mrf.mxu0
        %v973 = vadd.f32 %v637, %v972
        %v974 = vpop.f32.mrf.mxu0
        %v975 = vadd.f32 %v637, %v974
        %976 = vmatmul.bf16.gmra.mxu0 %v849
        %v977 = vpop.f32.mrf.mxu0
        %v978 = vadd.f32 %v637, %v977
        %v979 = vpop.f32.mrf.mxu0
        %v980 = vadd.f32 %v637, %v979
        %981 = vmatmul.bf16.gmra.mxu0 %v852
        %v982 = vpop.f32.mrf.mxu0
        %v983 = vadd.f32 %v637, %v982
        %v984 = vpop.f32.mrf.mxu0
        %v985 = vadd.f32 %v637, %v984
        %986 = vmatmul.bf16.gmra.mxu0 %v855
        %v987 = vpop.f32.mrf.mxu0
        %v988 = vadd.f32 %v637, %v987
        %v989 = vpop.f32.mrf.mxu0
        %v990 = vadd.f32 %v637, %v989
        %991 = vmatmul.bf16.gmra.mxu0 %v858
        %v992 = vpop.f32.mrf.mxu0
        %v993 = vadd.f32 %v637, %v992
        %v994 = vpop.f32.mrf.mxu0
        %v995 = vadd.f32 %v637, %v994
        %996 = vmatmul.bf16.gmra.mxu0 %v861
        %v997 = vpop.f32.mrf.mxu0
        %v998 = vadd.f32 %v637, %v997
        %v999 = vpop.f32.mrf.mxu0
        %v1000 = vadd.f32 %v637, %v999
        %1001 = vmatmul.bf16.gmra.mxu0 %v864
        %v1002 = vpop.f32.mrf.mxu0
        %v1003 = vadd.f32 %v637, %v1002
        %v1004 = vpop.f32.mrf.mxu0
        %v1005 = vadd.f32 %v637, %v1004
        %1006 = vmatmul.bf16.gmra.mxu0 %v867
        %v1007 = vpop.f32.mrf.mxu0
        %v1008 = vadd.f32 %v637, %v1007
        %v1009 = vpop.f32.mrf.mxu0
        %v1010 = vadd.f32 %v637, %v1009
        %1011 = vmatmul.bf16.gmra.mxu0 %v870
        %v1012 = vpop.f32.mrf.mxu0
        %v1013 = vadd.f32 %v637, %v1012
        %v1014 = vpop.f32.mrf.mxu0
        %v1015 = vadd.f32 %v637, %v1014
        %1016 = vmatmul.bf16.gmra.mxu0 %v873
        %v1017 = vpop.f32.mrf.mxu0
        %v1018 = vadd.f32 %v637, %v1017
        %v1019 = vpop.f32.mrf.mxu0
        %v1020 = vadd.f32 %v637, %v1019
        %1021 = vmatmul.bf16.gmra.mxu0 %v876
        %v1022 = vpop.f32.mrf.mxu0
        %v1023 = vadd.f32 %v637, %v1022
        %v1024 = vpop.f32.mrf.mxu0
        %v1025 = vadd.f32 %v637, %v1024
        %1026 = vmatmul.bf16.gmra.mxu0 %v879
        %v1027 = vpop.f32.mrf.mxu0
        %v1028 = vadd.f32 %v637, %v1027
        %v1029 = vpop.f32.mrf.mxu0
        %v1030 = vadd.f32 %v637, %v1029
        %1031 = vmatmul.bf16.gmra.mxu0 %v882
        %v1032 = vpop.f32.mrf.mxu0
        %v1033 = vadd.f32 %v637, %v1032
        %v1034 = vpop.f32.mrf.mxu0
        %v1035 = vadd.f32 %v637, %v1034
        %1036 = vmatmul.bf16.gmra.mxu0 %v885
        %v1037 = vpop.f32.mrf.mxu0
        %v1038 = vadd.f32 %v637, %v1037
        %v1039 = vpop.f32.mrf.mxu0
        %v1040 = vadd.f32 %v637, %v1039
        %1041 = vmatmul.bf16.gmra.mxu0 %v888
        %v1042 = vpop.f32.mrf.mxu0
        %v1043 = vadd.f32 %v637, %v1042
        %v1044 = vpop.f32.mrf.mxu0
        %v1045 = vadd.f32 %v637, %v1044
        %1046 = vmatmul.bf16.gmra.mxu0 %v891
        %v1047 = vpop.f32.mrf.mxu0
        %v1048 = vadd.f32 %v637, %v1047
        %v1049 = vpop.f32.mrf.mxu0
        %v1050 = vadd.f32 %v637, %v1049
        %1051 = vmatmul.bf16.gmra.mxu0 %v894
        %v1052 = vpop.f32.mrf.mxu0
        %v1053 = vadd.f32 %v637, %v1052
        %v1054 = vpop.f32.mrf.mxu0
        %v1055 = vadd.f32 %v637, %v1054
        %1056 = vmatmul.bf16.gmra.mxu0 %v897
        %v1057 = vpop.f32.mrf.mxu0
        %v1058 = vadd.f32 %v637, %v1057
        %v1059 = vpop.f32.mrf.mxu0
        %v1060 = vadd.f32 %v637, %v1059
        %1061 = vmatmul.bf16.gmra.mxu0 %v900
        %v1062 = vpop.f32.mrf.mxu0
        %v1063 = vadd.f32 %v637, %v1062
        %v1064 = vpop.f32.mrf.mxu0
        %v1065 = vadd.f32 %v637, %v1064
        %1066 = vmatmul.bf16.gmra.mxu0 %v903
        %v1067 = vpop.f32.mrf.mxu0
        %v1068 = vadd.f32 %v637, %v1067
        %v1069 = vpop.f32.mrf.mxu0
        %v1070 = vadd.f32 %v637, %v1069
        %1071 = vmatmul.bf16.gmra.mxu0 %v906
        %v1072 = vpop.f32.mrf.mxu0
        %v1073 = vadd.f32 %v637, %v1072
        %v1074 = vpop.f32.mrf.mxu0
        %v1075 = vadd.f32 %v637, %v1074
        %1076 = vdwg.mxu0
        %v1077 = vmax.f32 %v918, 0.0
        %v1078 = vmax.f32 %v920, 0.0
        %v1079 = vmax.f32 %v923, 0.0
        %v1080 = vmax.f32 %v925, 0.0
        %v1081 = vmax.f32 %v928, 0.0
        %v1082 = vmax.f32 %v930, 0.0
        %v1083 = vmax.f32 %v933, 0.0
        %v1084 = vmax.f32 %v935, 0.0
        %v1085 = vmax.f32 %v938, 0.0
        %v1086 = vmax.f32 %v940, 0.0
        %v1087 = vmax.f32 %v943, 0.0
        %v1088 = vmax.f32 %v945, 0.0
        %v1089 = vmax.f32 %v948, 0.0
        %v1090 = vmax.f32 %v950, 0.0
        %v1091 = vmax.f32 %v953, 0.0
        %v1092 = vmax.f32 %v955, 0.0
        %v1093 = vmax.f32 %v958, 0.0
        %v1094 = vmax.f32 %v960, 0.0
        %v1095 = vmax.f32 %v963, 0.0
        %v1096 = vmax.f32 %v965, 0.0
        %v1097 = vmax.f32 %v968, 0.0
        %v1098 = vmax.f32 %v970, 0.0
        %v1099 = vmax.f32 %v973, 0.0
        %v1100 = vmax.f32 %v975, 0.0
        %v1101 = vmax.f32 %v978, 0.0
        %v1102 = vmax.f32 %v980, 0.0
        %v1103 = vmax.f32 %v983, 0.0
        %v1104 = vmax.f32 %v985, 0.0
        %v1105 = vmax.f32 %v988, 0.0
        %v1106 = vmax.f32 %v990, 0.0
        %v1107 = vmax.f32 %v993, 0.0
        %v1108 = vmax.f32 %v995, 0.0
        %v1109 = vmax.f32 %v998, 0.0
        %v1110 = vmax.f32 %v1000, 0.0
        %v1111 = vmax.f32 %v1003, 0.0
        %v1112 = vmax.f32 %v1005, 0.0
        %v1113 = vmax.f32 %v1008, 0.0
        %v1114 = vmax.f32 %v1010, 0.0
        %v1115 = vmax.f32 %v1013, 0.0
        %v1116 = vmax.f32 %v1015, 0.0
        %v1117 = vmax.f32 %v1018, 0.0
        %v1118 = vmax.f32 %v1020, 0.0
        %v1119 = vmax.f32 %v1023, 0.0
        %v1120 = vmax.f32 %v1025, 0.0
        %v1121 = vmax.f32 %v1028, 0.0
        %v1122 = vmax.f32 %v1030, 0.0
        %v1123 = vmax.f32 %v1033, 0.0
        %v1124 = vmax.f32 %v1035, 0.0
        %v1125 = vmax.f32 %v1038, 0.0
        %v1126 = vmax.f32 %v1040, 0.0
        %v1127 = vmax.f32 %v1043, 0.0
        %v1128 = vmax.f32 %v1045, 0.0
        %v1129 = vmax.f32 %v1048, 0.0
        %v1130 = vmax.f32 %v1050, 0.0
        %v1131 = vmax.f32 %v1053, 0.0
        %v1132 = vmax.f32 %v1055, 0.0
        %v1133 = vmax.f32 %v1058, 0.0
        %v1134 = vmax.f32 %v1060, 0.0
        %v1135 = vmax.f32 %v1063, 0.0
        %v1136 = vmax.f32 %v1065, 0.0
        %v1137 = vmax.f32 %v1068, 0.0
        %v1138 = vmax.f32 %v1070, 0.0
        %v1139 = vmax.f32 %v1073, 0.0
        %v1140 = vmax.f32 %v1075, 0.0
        %v1141 = vpack.c.bf16 %v1078, %v1077
        %v1142 = vpack.c.bf16 %v1080, %v1079
        %v1143 = vpack.c.bf16 %v1082, %v1081
        %v1144 = vpack.c.bf16 %v1084, %v1083
        %v1145 = vpack.c.bf16 %v1086, %v1085
        %v1146 = vpack.c.bf16 %v1088, %v1087
        %v1147 = vpack.c.bf16 %v1090, %v1089
        %v1148 = vpack.c.bf16 %v1092, %v1091
        %v1149 = vpack.c.bf16 %v1094, %v1093
        %v1150 = vpack.c.bf16 %v1096, %v1095
        %v1151 = vpack.c.bf16 %v1098, %v1097
        %v1152 = vpack.c.bf16 %v1100, %v1099
        %v1153 = vpack.c.bf16 %v1102, %v1101
        %v1154 = vpack.c.bf16 %v1104, %v1103
        %v1155 = vpack.c.bf16 %v1106, %v1105
        %v1156 = vpack.c.bf16 %v1108, %v1107
        %v1157 = vpack.c.bf16 %v1110, %v1109
        %v1158 = vpack.c.bf16 %v1112, %v1111
        %v1159 = vpack.c.bf16 %v1114, %v1113
        %v1160 = vpack.c.bf16 %v1116, %v1115
        %v1161 = vpack.c.bf16 %v1118, %v1117
        %v1162 = vpack.c.bf16 %v1120, %v1119
        %v1163 = vpack.c.bf16 %v1122, %v1121
        %v1164 = vpack.c.bf16 %v1124, %v1123
        %v1165 = vpack.c.bf16 %v1126, %v1125
        %v1166 = vpack.c.bf16 %v1128, %v1127
        %v1167 = vpack.c.bf16 %v1130, %v1129
        %v1168 = vpack.c.bf16 %v1132, %v1131
        %v1169 = vpack.c.bf16 %v1134, %v1133
        %v1170 = vpack.c.bf16 %v1136, %v1135
        %v1171 = vpack.c.bf16 %v1138, %v1137
        %v1172 = vpack.c.bf16 %v1140, %v1139
        %v1173 = vld [vmem:[%s4] sm:$0xff]
        %v1174 = vld [vmem:[%s4 + $0x8] sm:$0xff]
        %v1175 = vld [vmem:[%s4 + $0x10] sm:$0xff]
        %v1176 = vld [vmem:[%s4 + $0x18] sm:$0xff]
        %v1177 = vld [vmem:[%s4 + $0x20] sm:$0xff]
        %v1178 = vld [vmem:[%s4 + $0x28] sm:$0xff]
        %v1179 = vld [vmem:[%s4 + $0x30] sm:$0xff]
        %v1180 = vld [vmem:[%s4 + $0x38] sm:$0xff]
        %v1181 = vld [vmem:[%s4 + $0x40] sm:$0xff]
        %v1182 = vld [vmem:[%s4 + $0x48] sm:$0xff]
        %v1183 = vld [vmem:[%s4 + $0x50] sm:$0xff]
        %v1184 = vld [vmem:[%s4 + $0x58] sm:$0xff]
        %v1185 = vld [vmem:[%s4 + $0x60] sm:$0xff]
        %v1186 = vld [vmem:[%s4 + $0x68] sm:$0xff]
        %v1187 = vld [vmem:[%s4 + $0x70] sm:$0xff]
        %v1188 = vld [vmem:[%s4 + $0x78] sm:$0xff]
        %v1189 = vld [vmem:[%s5] sm:$0x3]
        %v1191 = vperm.slane %v1189, 0
        %v1192 = vperm.slane %v1189, 1
        %v1211 = vunpack.c.l.b16 %v1173
        %v1212 = vunpack.c.h.b16 %v1173
        %v1213 = vunpack.c.l.b16 %v1174
        %v1214 = vunpack.c.h.b16 %v1174
        %v1215 = vunpack.c.l.b16 %v1175
        %v1216 = vunpack.c.h.b16 %v1175
        %v1217 = vunpack.c.l.b16 %v1176
        %v1218 = vunpack.c.h.b16 %v1176
        %v1219 = vunpack.c.l.b16 %v1177
        %v1220 = vunpack.c.h.b16 %v1177
        %v1221 = vunpack.c.l.b16 %v1178
        %v1222 = vunpack.c.h.b16 %v1178
        %v1223 = vunpack.c.l.b16 %v1179
        %v1224 = vunpack.c.h.b16 %v1179
        %v1225 = vunpack.c.l.b16 %v1180
        %v1226 = vunpack.c.h.b16 %v1180
        %v1227 = vunpack.c.l.b16 %v1181
        %v1228 = vunpack.c.h.b16 %v1181
        %v1229 = vunpack.c.l.b16 %v1182
        %v1230 = vunpack.c.h.b16 %v1182
        %v1231 = vunpack.c.l.b16 %v1183
        %v1232 = vunpack.c.h.b16 %v1183
        %v1233 = vunpack.c.l.b16 %v1184
        %v1234 = vunpack.c.h.b16 %v1184
        %v1235 = vunpack.c.l.b16 %v1185
        %v1236 = vunpack.c.h.b16 %v1185
        %v1237 = vunpack.c.l.b16 %v1186
        %v1238 = vunpack.c.h.b16 %v1186
        %v1239 = vunpack.c.l.b16 %v1187
        %v1240 = vunpack.c.h.b16 %v1187
        %v1241 = vunpack.c.l.b16 %v1188
        %v1242 = vunpack.c.h.b16 %v1188
        %v1243 = vpack.c.b16 %v1213, %v1211
        %v1244 = vpack.c.b16 %v1214, %v1212
        %v1245 = vpack.c.b16 %v1217, %v1215
        %v1246 = vpack.c.b16 %v1218, %v1216
        %v1247 = vpack.c.b16 %v1221, %v1219
        %v1248 = vpack.c.b16 %v1222, %v1220
        %v1249 = vpack.c.b16 %v1225, %v1223
        %v1250 = vpack.c.b16 %v1226, %v1224
        %v1251 = vpack.c.b16 %v1229, %v1227
        %v1252 = vpack.c.b16 %v1230, %v1228
        %v1253 = vpack.c.b16 %v1233, %v1231
        %v1254 = vpack.c.b16 %v1234, %v1232
        %v1255 = vpack.c.b16 %v1237, %v1235
        %v1256 = vpack.c.b16 %v1238, %v1236
        %v1257 = vpack.c.b16 %v1241, %v1239
        %v1258 = vpack.c.b16 %v1242, %v1240
        %1275 = vmatpush.bf16.msra.mxu0 %v1257
        %1276 = vmatpush.bf16.msra.mxu0 %v1255
        %1277 = vmatpush.bf16.msra.mxu0 %v1253
        %1278 = vmatpush.bf16.msra.mxu0 %v1251
        %1279 = vmatpush.bf16.msra.mxu0 %v1249
        %1280 = vmatpush.bf16.msra.mxu0 %v1247
        %1281 = vmatpush.bf16.msra.mxu0 %v1245
        %1282 = vmatpush.bf16.msra.mxu0 %v1243
        %1283 = vmatmul.bf16.gmra.mxu0 %v1141
        %v1284 = vpop.f32.mrf.mxu0
        %v1285 = vadd.f32 %v1191, %v1284
        %v1286 = vpop.f32.mrf.mxu0
        %v1287 = vadd.f32 %v1191, %v1286
        %1288 = vmatmul.bf16.gmra.mxu0 %v1142
        %v1289 = vpop.f32.mrf.mxu0
        %v1290 = vadd.f32 %v1191, %v1289
        %v1291 = vpop.f32.mrf.mxu0
        %v1292 = vadd.f32 %v1191, %v1291
        %1293 = vmatmul.bf16.gmra.mxu0 %v1143
        %v1294 = vpop.f32.mrf.mxu0
        %v1295 = vadd.f32 %v1191, %v1294
        %v1296 = vpop.f32.mrf.mxu0
        %v1297 = vadd.f32 %v1191, %v1296
        %1298 = vmatmul.bf16.gmra.mxu0 %v1144
        %v1299 = vpop.f32.mrf.mxu0
        %v1300 = vadd.f32 %v1191, %v1299
        %v1301 = vpop.f32.mrf.mxu0
        %v1302 = vadd.f32 %v1191, %v1301
        %1303 = vmatmul.bf16.gmra.mxu0 %v1145
        %v1304 = vpop.f32.mrf.mxu0
        %v1305 = vadd.f32 %v1191, %v1304
        %v1306 = vpop.f32.mrf.mxu0
        %v1307 = vadd.f32 %v1191, %v1306
        %1308 = vmatmul.bf16.gmra.mxu0 %v1146
        %v1309 = vpop.f32.mrf.mxu0
        %v1310 = vadd.f32 %v1191, %v1309
        %v1311 = vpop.f32.mrf.mxu0
        %v1312 = vadd.f32 %v1191, %v1311
        %1313 = vmatmul.bf16.gmra.mxu0 %v1147
        %v1314 = vpop.f32.mrf.mxu0
        %v1315 = vadd.f32 %v1191, %v1314
        %v1316 = vpop.f32.mrf.mxu0
        %v1317 = vadd.f32 %v1191, %v1316
        %1318 = vmatmul.bf16.gmra.mxu0 %v1148
        %v1319 = vpop.f32.mrf.mxu0
        %v1320 = vadd.f32 %v1191, %v1319
        %v1321 = vpop.f32.mrf.mxu0
        %v1322 = vadd.f32 %v1191, %v1321
        %1323 = vmatmul.bf16.gmra.mxu0 %v1149
        %v1324 = vpop.f32.mrf.mxu0
        %v1325 = vadd.f32 %v1191, %v1324
        %v1326 = vpop.f32.mrf.mxu0
        %v1327 = vadd.f32 %v1191, %v1326
        %1328 = vmatmul.bf16.gmra.mxu0 %v1150
        %v1329 = vpop.f32.mrf.mxu0
        %v1330 = vadd.f32 %v1191, %v1329
        %v1331 = vpop.f32.mrf.mxu0
        %v1332 = vadd.f32 %v1191, %v1331
        %1333 = vmatmul.bf16.gmra.mxu0 %v1151
        %v1334 = vpop.f32.mrf.mxu0
        %v1335 = vadd.f32 %v1191, %v1334
        %v1336 = vpop.f32.mrf.mxu0
        %v1337 = vadd.f32 %v1191, %v1336
        %1338 = vmatmul.bf16.gmra.mxu0 %v1152
        %v1339 = vpop.f32.mrf.mxu0
        %v1340 = vadd.f32 %v1191, %v1339
        %v1341 = vpop.f32.mrf.mxu0
        %v1342 = vadd.f32 %v1191, %v1341
        %1343 = vmatmul.bf16.gmra.mxu0 %v1153
        %v1344 = vpop.f32.mrf.mxu0
        %v1345 = vadd.f32 %v1191, %v1344
        %v1346 = vpop.f32.mrf.mxu0
        %v1347 = vadd.f32 %v1191, %v1346
        %1348 = vmatmul.bf16.gmra.mxu0 %v1154
        %v1349 = vpop.f32.mrf.mxu0
        %v1350 = vadd.f32 %v1191, %v1349
        %v1351 = vpop.f32.mrf.mxu0
        %v1352 = vadd.f32 %v1191, %v1351
        %1353 = vmatmul.bf16.gmra.mxu0 %v1155
        %v1354 = vpop.f32.mrf.mxu0
        %v1355 = vadd.f32 %v1191, %v1354
        %v1356 = vpop.f32.mrf.mxu0
        %v1357 = vadd.f32 %v1191, %v1356
        %1358 = vmatmul.bf16.gmra.mxu0 %v1156
        %v1359 = vpop.f32.mrf.mxu0
        %v1360 = vadd.f32 %v1191, %v1359
        %v1361 = vpop.f32.mrf.mxu0
        %v1362 = vadd.f32 %v1191, %v1361
        %1363 = vmatmul.bf16.gmra.mxu0 %v1157
        %v1364 = vpop.f32.mrf.mxu0
        %v1365 = vadd.f32 %v1191, %v1364
        %v1366 = vpop.f32.mrf.mxu0
        %v1367 = vadd.f32 %v1191, %v1366
        %1368 = vmatmul.bf16.gmra.mxu0 %v1158
        %v1369 = vpop.f32.mrf.mxu0
        %v1370 = vadd.f32 %v1191, %v1369
        %v1371 = vpop.f32.mrf.mxu0
        %v1372 = vadd.f32 %v1191, %v1371
        %1373 = vmatmul.bf16.gmra.mxu0 %v1159
        %v1374 = vpop.f32.mrf.mxu0
        %v1375 = vadd.f32 %v1191, %v1374
        %v1376 = vpop.f32.mrf.mxu0
        %v1377 = vadd.f32 %v1191, %v1376
        %1378 = vmatmul.bf16.gmra.mxu0 %v1160
        %v1379 = vpop.f32.mrf.mxu0
        %v1380 = vadd.f32 %v1191, %v1379
        %v1381 = vpop.f32.mrf.mxu0
        %v1382 = vadd.f32 %v1191, %v1381
        %1383 = vmatmul.bf16.gmra.mxu0 %v1161
        %v1384 = vpop.f32.mrf.mxu0
        %v1385 = vadd.f32 %v1191, %v1384
        %v1386 = vpop.f32.mrf.mxu0
        %v1387 = vadd.f32 %v1191, %v1386
        %1388 = vmatmul.bf16.gmra.mxu0 %v1162
        %v1389 = vpop.f32.mrf.mxu0
        %v1390 = vadd.f32 %v1191, %v1389
        %v1391 = vpop.f32.mrf.mxu0
        %v1392 = vadd.f32 %v1191, %v1391
        %1393 = vmatmul.bf16.gmra.mxu0 %v1163
        %v1394 = vpop.f32.mrf.mxu0
        %v1395 = vadd.f32 %v1191, %v1394
        %v1396 = vpop.f32.mrf.mxu0
        %v1397 = vadd.f32 %v1191, %v1396
        %1398 = vmatmul.bf16.gmra.mxu0 %v1164
        %v1399 = vpop.f32.mrf.mxu0
        %v1400 = vadd.f32 %v1191, %v1399
        %v1401 = vpop.f32.mrf.mxu0
        %v1402 = vadd.f32 %v1191, %v1401
        %1403 = vmatmul.bf16.gmra.mxu0 %v1165
        %v1404 = vpop.f32.mrf.mxu0
        %v1405 = vadd.f32 %v1191, %v1404
        %v1406 = vpop.f32.mrf.mxu0
        %v1407 = vadd.f32 %v1191, %v1406
        %1408 = vmatmul.bf16.gmra.mxu0 %v1166
        %v1409 = vpop.f32.mrf.mxu0
        %v1410 = vadd.f32 %v1191, %v1409
        %v1411 = vpop.f32.mrf.mxu0
        %v1412 = vadd.f32 %v1191, %v1411
        %1413 = vmatmul.bf16.gmra.mxu0 %v1167
        %v1414 = vpop.f32.mrf.mxu0
        %v1415 = vadd.f32 %v1191, %v1414
        %v1416 = vpop.f32.mrf.mxu0
        %v1417 = vadd.f32 %v1191, %v1416
        %1418 = vmatmul.bf16.gmra.mxu0 %v1168
        %v1419 = vpop.f32.mrf.mxu0
        %v1420 = vadd.f32 %v1191, %v1419
        %v1421 = vpop.f32.mrf.mxu0
        %v1422 = vadd.f32 %v1191, %v1421
        %1423 = vmatmul.bf16.gmra.mxu0 %v1169
        %v1424 = vpop.f32.mrf.mxu0
        %v1425 = vadd.f32 %v1191, %v1424
        %v1426 = vpop.f32.mrf.mxu0
        %v1427 = vadd.f32 %v1191, %v1426
        %1428 = vmatmul.bf16.gmra.mxu0 %v1170
        %v1429 = vpop.f32.mrf.mxu0
        %v1430 = vadd.f32 %v1191, %v1429
        %v1431 = vpop.f32.mrf.mxu0
        %v1432 = vadd.f32 %v1191, %v1431
        %1433 = vmatmul.bf16.gmra.mxu0 %v1171
        %v1434 = vpop.f32.mrf.mxu0
        %v1435 = vadd.f32 %v1191, %v1434
        %v1436 = vpop.f32.mrf.mxu0
        %v1437 = vadd.f32 %v1191, %v1436
        %1438 = vmatmul.bf16.gmra.mxu0 %v1172
        %v1439 = vpop.f32.mrf.mxu0
        %v1440 = vadd.f32 %v1191, %v1439
        %v1441 = vpop.f32.mrf.mxu0
        %v1442 = vadd.f32 %v1191, %v1441
        %1443 = vdwg.mxu0
        %1444 = vmatpush.bf16.msra.mxu0 %v1258
        %1445 = vmatpush.bf16.msra.mxu0 %v1256
        %1446 = vmatpush.bf16.msra.mxu0 %v1254
        %1447 = vmatpush.bf16.msra.mxu0 %v1252
        %1448 = vmatpush.bf16.msra.mxu0 %v1250
        %1449 = vmatpush.bf16.msra.mxu0 %v1248
        %1450 = vmatpush.bf16.msra.mxu0 %v1246
        %1451 = vmatpush.bf16.msra.mxu0 %v1244
        %1452 = vmatmul.bf16.gmra.mxu0 %v1141
        %v1453 = vpop.f32.mrf.mxu0
        %v1454 = vadd.f32 %v1192, %v1453
        %v1455 = vpop.f32.mrf.mxu0
        %v1456 = vadd.f32 %v1192, %v1455
        %1457 = vmatmul.bf16.gmra.mxu0 %v1142
        %v1458 = vpop.f32.mrf.mxu0
        %v1459 = vadd.f32 %v1192, %v1458
        %v1460 = vpop.f32.mrf.mxu0
        %v1461 = vadd.f32 %v1192, %v1460
        %1462 = vmatmul.bf16.gmra.mxu0 %v1143
        %v1463 = vpop.f32.mrf.mxu0
        %v1464 = vadd.f32 %v1192, %v1463
        %v1465 = vpop.f32.mrf.mxu0
        %v1466 = vadd.f32 %v1192, %v1465
        %1467 = vmatmul.bf16.gmra.mxu0 %v1144
        %v1468 = vpop.f32.mrf.mxu0
        %v1469 = vadd.f32 %v1192, %v1468
        %v1470 = vpop.f32.mrf.mxu0
        %v1471 = vadd.f32 %v1192, %v1470
        %1472 = vmatmul.bf16.gmra.mxu0 %v1145
        %v1473 = vpop.f32.mrf.mxu0
        %v1474 = vadd.f32 %v1192, %v1473
        %v1475 = vpop.f32.mrf.mxu0
        %v1476 = vadd.f32 %v1192, %v1475
        %1477 = vmatmul.bf16.gmra.mxu0 %v1146
        %v1478 = vpop.f32.mrf.mxu0
        %v1479 = vadd.f32 %v1192, %v1478
        %v1480 = vpop.f32.mrf.mxu0
        %v1481 = vadd.f32 %v1192, %v1480
        %1482 = vmatmul.bf16.gmra.mxu0 %v1147
        %v1483 = vpop.f32.mrf.mxu0
        %v1484 = vadd.f32 %v1192, %v1483
        %v1485 = vpop.f32.mrf.mxu0
        %v1486 = vadd.f32 %v1192, %v1485
        %1487 = vmatmul.bf16.gmra.mxu0 %v1148
        %v1488 = vpop.f32.mrf.mxu0
        %v1489 = vadd.f32 %v1192, %v1488
        %v1490 = vpop.f32.mrf.mxu0
        %v1491 = vadd.f32 %v1192, %v1490
        %1492 = vmatmul.bf16.gmra.mxu0 %v1149
        %v1493 = vpop.f32.mrf.mxu0
        %v1494 = vadd.f32 %v1192, %v1493
        %v1495 = vpop.f32.mrf.mxu0
        %v1496 = vadd.f32 %v1192, %v1495
        %1497 = vmatmul.bf16.gmra.mxu0 %v1150
        %v1498 = vpop.f32.mrf.mxu0
        %v1499 = vadd.f32 %v1192, %v1498
        %v1500 = vpop.f32.mrf.mxu0
        %v1501 = vadd.f32 %v1192, %v1500
        %1502 = vmatmul.bf16.gmra.mxu0 %v1151
        %v1503 = vpop.f32.mrf.mxu0
        %v1504 = vadd.f32 %v1192, %v1503
        %v1505 = vpop.f32.mrf.mxu0
        %v1506 = vadd.f32 %v1192, %v1505
        %1507 = vmatmul.bf16.gmra.mxu0 %v1152
        %v1508 = vpop.f32.mrf.mxu0
        %v1509 = vadd.f32 %v1192, %v1508
        %v1510 = vpop.f32.mrf.mxu0
        %v1511 = vadd.f32 %v1192, %v1510
        %1512 = vmatmul.bf16.gmra.mxu0 %v1153
        %v1513 = vpop.f32.mrf.mxu0
        %v1514 = vadd.f32 %v1192, %v1513
        %v1515 = vpop.f32.mrf.mxu0
        %v1516 = vadd.f32 %v1192, %v1515
        %1517 = vmatmul.bf16.gmra.mxu0 %v1154
        %v1518 = vpop.f32.mrf.mxu0
        %v1519 = vadd.f32 %v1192, %v1518
        %v1520 = vpop.f32.mrf.mxu0
        %v1521 = vadd.f32 %v1192, %v1520
        %1522 = vmatmul.bf16.gmra.mxu0 %v1155
        %v1523 = vpop.f32.mrf.mxu0
        %v1524 = vadd.f32 %v1192, %v1523
        %v1525 = vpop.f32.mrf.mxu0
        %v1526 = vadd.f32 %v1192, %v1525
        %1527 = vmatmul.bf16.gmra.mxu0 %v1156
        %v1528 = vpop.f32.mrf.mxu0
        %v1529 = vadd.f32 %v1192, %v1528
        %v1530 = vpop.f32.mrf.mxu0
        %v1531 = vadd.f32 %v1192, %v1530
        %1532 = vmatmul.bf16.gmra.mxu0 %v1157
        %v1533 = vpop.f32.mrf.mxu0
        %v1534 = vadd.f32 %v1192, %v1533
        %v1535 = vpop.f32.mrf.mxu0
        %v1536 = vadd.f32 %v1192, %v1535
        %1537 = vmatmul.bf16.gmra.mxu0 %v1158
        %v1538 = vpop.f32.mrf.mxu0
        %v1539 = vadd.f32 %v1192, %v1538
        %v1540 = vpop.f32.mrf.mxu0
        %v1541 = vadd.f32 %v1192, %v1540
        %1542 = vmatmul.bf16.gmra.mxu0 %v1159
        %v1543 = vpop.f32.mrf.mxu0
        %v1544 = vadd.f32 %v1192, %v1543
        %v1545 = vpop.f32.mrf.mxu0
        %v1546 = vadd.f32 %v1192, %v1545
        %1547 = vmatmul.bf16.gmra.mxu0 %v1160
        %v1548 = vpop.f32.mrf.mxu0
        %v1549 = vadd.f32 %v1192, %v1548
        %v1550 = vpop.f32.mrf.mxu0
        %v1551 = vadd.f32 %v1192, %v1550
        %1552 = vmatmul.bf16.gmra.mxu0 %v1161
        %v1553 = vpop.f32.mrf.mxu0
        %v1554 = vadd.f32 %v1192, %v1553
        %v1555 = vpop.f32.mrf.mxu0
        %v1556 = vadd.f32 %v1192, %v1555
        %1557 = vmatmul.bf16.gmra.mxu0 %v1162
        %v1558 = vpop.f32.mrf.mxu0
        %v1559 = vadd.f32 %v1192, %v1558
        %v1560 = vpop.f32.mrf.mxu0
        %v1561 = vadd.f32 %v1192, %v1560
        %1562 = vmatmul.bf16.gmra.mxu0 %v1163
        %v1563 = vpop.f32.mrf.mxu0
        %v1564 = vadd.f32 %v1192, %v1563
        %v1565 = vpop.f32.mrf.mxu0
        %v1566 = vadd.f32 %v1192, %v1565
        %1567 = vmatmul.bf16.gmra.mxu0 %v1164
        %v1568 = vpop.f32.mrf.mxu0
        %v1569 = vadd.f32 %v1192, %v1568
        %v1570 = vpop.f32.mrf.mxu0
        %v1571 = vadd.f32 %v1192, %v1570
        %1572 = vmatmul.bf16.gmra.mxu0 %v1165
        %v1573 = vpop.f32.mrf.mxu0
        %v1574 = vadd.f32 %v1192, %v1573
        %v1575 = vpop.f32.mrf.mxu0
        %v1576 = vadd.f32 %v1192, %v1575
        %1577 = vmatmul.bf16.gmra.mxu0 %v1166
        %v1578 = vpop.f32.mrf.mxu0
        %v1579 = vadd.f32 %v1192, %v1578
        %v1580 = vpop.f32.mrf.mxu0
        %v1581 = vadd.f32 %v1192, %v1580
        %1582 = vmatmul.bf16.gmra.mxu0 %v1167
        %v1583 = vpop.f32.mrf.mxu0
        %v1584 = vadd.f32 %v1192, %v1583
        %v1585 = vpop.f32.mrf.mxu0
        %v1586 = vadd.f32 %v1192, %v1585
        %1587 = vmatmul.bf16.gmra.mxu0 %v1168
        %v1588 = vpop.f32.mrf.mxu0
        %v1589 = vadd.f32 %v1192, %v1588
        %v1590 = vpop.f32.mrf.mxu0
        %v1591 = vadd.f32 %v1192, %v1590
        %1592 = vmatmul.bf16.gmra.mxu0 %v1169
        %v1593 = vpop.f32.mrf.mxu0
        %v1594 = vadd.f32 %v1192, %v1593
        %v1595 = vpop.f32.mrf.mxu0
        %v1596 = vadd.f32 %v1192, %v1595
        %1597 = vmatmul.bf16.gmra.mxu0 %v1170
        %v1598 = vpop.f32.mrf.mxu0
        %v1599 = vadd.f32 %v1192, %v1598
        %v1600 = vpop.f32.mrf.mxu0
        %v1601 = vadd.f32 %v1192, %v1600
        %1602 = vmatmul.bf16.gmra.mxu0 %v1171
        %v1603 = vpop.f32.mrf.mxu0
        %v1604 = vadd.f32 %v1192, %v1603
        %v1605 = vpop.f32.mrf.mxu0
        %v1606 = vadd.f32 %v1192, %v1605
        %1607 = vmatmul.bf16.gmra.mxu0 %v1172
        %v1608 = vpop.f32.mrf.mxu0
        %v1609 = vadd.f32 %v1192, %v1608
        %v1610 = vpop.f32.mrf.mxu0
        %v1611 = vadd.f32 %v1192, %v1610
        %1612 = vdwg.mxu0
        %v1613 = vmax.f32 %v1285, 0.0
        %v1614 = vmax.f32 %v1454, 0.0
        %v1615 = vmax.f32 %v1287, 0.0
        %v1616 = vmax.f32 %v1456, 0.0
        %v1617 = vmax.f32 %v1290, 0.0
        %v1618 = vmax.f32 %v1459, 0.0
        %v1619 = vmax.f32 %v1292, 0.0
        %v1620 = vmax.f32 %v1461, 0.0
        %v1621 = vmax.f32 %v1295, 0.0
        %v1622 = vmax.f32 %v1464, 0.0
        %v1623 = vmax.f32 %v1297, 0.0
        %v1624 = vmax.f32 %v1466, 0.0
        %v1625 = vmax.f32 %v1300, 0.0
        %v1626 = vmax.f32 %v1469, 0.0
        %v1627 = vmax.f32 %v1302, 0.0
        %v1628 = vmax.f32 %v1471, 0.0
        %v1629 = vmax.f32 %v1305, 0.0
        %v1630 = vmax.f32 %v1474, 0.0
        %v1631 = vmax.f32 %v1307, 0.0
        %v1632 = vmax.f32 %v1476, 0.0
        %v1633 = vmax.f32 %v1310, 0.0
        %v1634 = vmax.f32 %v1479, 0.0
        %v1635 = vmax.f32 %v1312, 0.0
        %v1636 = vmax.f32 %v1481, 0.0
        %v1637 = vmax.f32 %v1315, 0.0
        %v1638 = vmax.f32 %v1484, 0.0
        %v1639 = vmax.f32 %v1317, 0.0
        %v1640 = vmax.f32 %v1486, 0.0
        %v1641 = vmax.f32 %v1320, 0.0
        %v1642 = vmax.f32 %v1489, 0.0
        %v1643 = vmax.f32 %v1322, 0.0
        %v1644 = vmax.f32 %v1491, 0.0
        %v1645 = vmax.f32 %v1325, 0.0
        %v1646 = vmax.f32 %v1494, 0.0
        %v1647 = vmax.f32 %v1327, 0.0
        %v1648 = vmax.f32 %v1496, 0.0
        %v1649 = vmax.f32 %v1330, 0.0
        %v1650 = vmax.f32 %v1499, 0.0
        %v1651 = vmax.f32 %v1332, 0.0
        %v1652 = vmax.f32 %v1501, 0.0
        %v1653 = vmax.f32 %v1335, 0.0
        %v1654 = vmax.f32 %v1504, 0.0
        %v1655 = vmax.f32 %v1337, 0.0
        %v1656 = vmax.f32 %v1506, 0.0
        %v1657 = vmax.f32 %v1340, 0.0
        %v1658 = vmax.f32 %v1509, 0.0
        %v1659 = vmax.f32 %v1342, 0.0
        %v1660 = vmax.f32 %v1511, 0.0
        %v1661 = vmax.f32 %v1345, 0.0
        %v1662 = vmax.f32 %v1514, 0.0
        %v1663 = vmax.f32 %v1347, 0.0
        %v1664 = vmax.f32 %v1516, 0.0
        %v1665 = vmax.f32 %v1350, 0.0
        %v1666 = vmax.f32 %v1519, 0.0
        %v1667 = vmax.f32 %v1352, 0.0
        %v1668 = vmax.f32 %v1521, 0.0
        %v1669 = vmax.f32 %v1355, 0.0
        %v1670 = vmax.f32 %v1524, 0.0
        %v1671 = vmax.f32 %v1357, 0.0
        %v1672 = vmax.f32 %v1526, 0.0
        %v1673 = vmax.f32 %v1360, 0.0
        %v1674 = vmax.f32 %v1529, 0.0
        %v1675 = vmax.f32 %v1362, 0.0
        %v1676 = vmax.f32 %v1531, 0.0
        %v1677 = vmax.f32 %v1365, 0.0
        %v1678 = vmax.f32 %v1534, 0.0
        %v1679 = vmax.f32 %v1367, 0.0
        %v1680 = vmax.f32 %v1536, 0.0
        %v1681 = vmax.f32 %v1370, 0.0
        %v1682 = vmax.f32 %v1539, 0.0
        %v1683 = vmax.f32 %v1372, 0.0
        %v1684 = vmax.f32 %v1541, 0.0
        %v1685 = vmax.f32 %v1375, 0.0
        %v1686 = vmax.f32 %v1544, 0.0
        %v1687 = vmax.f32 %v1377, 0.0
        %v1688 = vmax.f32 %v1546, 0.0
        %v1689 = vmax.f32 %v1380, 0.0
        %v1690 = vmax.f32 %v1549, 0.0
        %v1691 = vmax.f32 %v1382, 0.0
        %v1692 = vmax.f32 %v1551, 0.0
        %v1693 = vmax.f32 %v1385, 0.0
        %v1694 = vmax.f32 %v1554, 0.0
        %v1695 = vmax.f32 %v1387, 0.0
        %v1696 = vmax.f32 %v1556, 0.0
        %v1697 = vmax.f32 %v1390, 0.0
        %v1698 = vmax.f32 %v1559, 0.0
        %v1699 = vmax.f32 %v1392, 0.0
        %v1700 = vmax.f32 %v1561, 0.0
        %v1701 = vmax.f32 %v1395, 0.0
        %v1702 = vmax.f32 %v1564, 0.0
        %v1703 = vmax.f32 %v1397, 0.0
        %v1704 = vmax.f32 %v1566, 0.0
        %v1705 = vmax.f32 %v1400, 0.0
        %v1706 = vmax.f32 %v1569, 0.0
        %v1707 = vmax.f32 %v1402, 0.0
        %v1708 = vmax.f32 %v1571, 0.0
        %v1709 = vmax.f32 %v1405, 0.0
        %v1710 = vmax.f32 %v1574, 0.0
        %v1711 = vmax.f32 %v1407, 0.0
        %v1712 = vmax.f32 %v1576, 0.0
        %v1713 = vmax.f32 %v1410, 0.0
        %v1714 = vmax.f32 %v1579, 0.0
        %v1715 = vmax.f32 %v1412, 0.0
        %v1716 = vmax.f32 %v1581, 0.0
        %v1717 = vmax.f32 %v1415, 0.0
        %v1718 = vmax.f32 %v1584, 0.0
        %v1719 = vmax.f32 %v1417, 0.0
        %v1720 = vmax.f32 %v1586, 0.0
        %v1721 = vmax.f32 %v1420, 0.0
        %v1722 = vmax.f32 %v1589, 0.0
        %v1723 = vmax.f32 %v1422, 0.0
        %v1724 = vmax.f32 %v1591, 0.0
        %v1725 = vmax.f32 %v1425, 0.0
        %v1726 = vmax.f32 %v1594, 0.0
        %v1727 = vmax.f32 %v1427, 0.0
        %v1728 = vmax.f32 %v1596, 0.0
        %v1729 = vmax.f32 %v1430, 0.0
        %v1730 = vmax.f32 %v1599, 0.0
        %v1731 = vmax.f32 %v1432, 0.0
        %v1732 = vmax.f32 %v1601, 0.0
        %v1733 = vmax.f32 %v1435, 0.0
        %v1734 = vmax.f32 %v1604, 0.0
        %v1735 = vmax.f32 %v1437, 0.0
        %v1736 = vmax.f32 %v1606, 0.0
        %v1737 = vmax.f32 %v1440, 0.0
        %v1738 = vmax.f32 %v1609, 0.0
        %v1739 = vmax.f32 %v1442, 0.0
        %v1740 = vmax.f32 %v1611, 0.0
        %v1741 = vpack.c.bf16 %v1615, %v1613
        %v1742 = vpack.c.bf16 %v1616, %v1614
        %v1743 = vpack.c.bf16 %v1619, %v1617
        %v1744 = vpack.c.bf16 %v1620, %v1618
        %v1745 = vpack.c.bf16 %v1623, %v1621
        %v1746 = vpack.c.bf16 %v1624, %v1622
        %v1747 = vpack.c.bf16 %v1627, %v1625
        %v1748 = vpack.c.bf16 %v1628, %v1626
        %v1749 = vpack.c.bf16 %v1631, %v1629
        %v1750 = vpack.c.bf16 %v1632, %v1630
        %v1751 = vpack.c.bf16 %v1635, %v1633
        %v1752 = vpack.c.bf16 %v1636, %v1634
        %v1753 = vpack.c.bf16 %v1639, %v1637
        %v1754 = vpack.c.bf16 %v1640, %v1638
        %v1755 = vpack.c.bf16 %v1643, %v1641
        %v1756 = vpack.c.bf16 %v1644, %v1642
        %v1757 = vpack.c.bf16 %v1647, %v1645
        %v1758 = vpack.c.bf16 %v1648, %v1646
        %v1759 = vpack.c.bf16 %v1651, %v1649
        %v1760 = vpack.c.bf16 %v1652, %v1650
        %v1761 = vpack.c.bf16 %v1655, %v1653
        %v1762 = vpack.c.bf16 %v1656, %v1654
        %v1763 = vpack.c.bf16 %v1659, %v1657
        %v1764 = vpack.c.bf16 %v1660, %v1658
        %v1765 = vpack.c.bf16 %v1663, %v1661
        %v1766 = vpack.c.bf16 %v1664, %v1662
        %v1767 = vpack.c.bf16 %v1667, %v1665
        %v1768 = vpack.c.bf16 %v1668, %v1666
        %v1769 = vpack.c.bf16 %v1671, %v1669
        %v1770 = vpack.c.bf16 %v1672, %v1670
        %v1771 = vpack.c.bf16 %v1675, %v1673
        %v1772 = vpack.c.bf16 %v1676, %v1674
        %v1773 = vpack.c.bf16 %v1679, %v1677
        %v1774 = vpack.c.bf16 %v1680, %v1678
        %v1775 = vpack.c.bf16 %v1683, %v1681
        %v1776 = vpack.c.bf16 %v1684, %v1682
        %v1777 = vpack.c.bf16 %v1687, %v1685
        %v1778 = vpack.c.bf16 %v1688, %v1686
        %v1779 = vpack.c.bf16 %v1691, %v1689
        %v1780 = vpack.c.bf16 %v1692, %v1690
        %v1781 = vpack.c.bf16 %v1695, %v1693
        %v1782 = vpack.c.bf16 %v1696, %v1694
        %v1783 = vpack.c.bf16 %v1699, %v1697
        %v1784 = vpack.c.bf16 %v1700, %v1698
        %v1785 = vpack.c.bf16 %v1703, %v1701
        %v1786 = vpack.c.bf16 %v1704, %v1702
        %v1787 = vpack.c.bf16 %v1707, %v1705
        %v1788 = vpack.c.bf16 %v1708, %v1706
        %v1789 = vpack.c.bf16 %v1711, %v1709
        %v1790 = vpack.c.bf16 %v1712, %v1710
        %v1791 = vpack.c.bf16 %v1715, %v1713
        %v1792 = vpack.c.bf16 %v1716, %v1714
        %v1793 = vpack.c.bf16 %v1719, %v1717
        %v1794 = vpack.c.bf16 %v1720, %v1718
        %v1795 = vpack.c.bf16 %v1723, %v1721
        %v1796 = vpack.c.bf16 %v1724, %v1722
        %v1797 = vpack.c.bf16 %v1727, %v1725
        %v1798 = vpack.c.bf16 %v1728, %v1726
        %v1799 = vpack.c.bf16 %v1731, %v1729
        %v1800 = vpack.c.bf16 %v1732, %v1730
        %v1801 = vpack.c.bf16 %v1735, %v1733
        %v1802 = vpack.c.bf16 %v1736, %v1734
        %v1803 = vpack.c.bf16 %v1739, %v1737
        %v1804 = vpack.c.bf16 %v1740, %v1738
        %v1805 = vld [vmem:[%s6] sm:$0xf]
        %v1806 = vld [vmem:[%s6 + $0x4] sm:$0xf]
        %v1807 = vld [vmem:[%s6 + $0x8] sm:$0xf]
        %v1808 = vld [vmem:[%s6 + $0xc] sm:$0xf]
        %v1809 = vld [vmem:[%s6 + $0x10] sm:$0xf]
        %v1810 = vld [vmem:[%s6 + $0x14] sm:$0xf]
        %v1811 = vld [vmem:[%s6 + $0x18] sm:$0xf]
        %v1812 = vld [vmem:[%s6 + $0x1c] sm:$0xf]
        %v1813 = vld [vmem:[%s6 + $0x20] sm:$0xf]
        %v1814 = vld [vmem:[%s6 + $0x24] sm:$0xf]
        %v1815 = vld [vmem:[%s6 + $0x28] sm:$0xf]
        %v1816 = vld [vmem:[%s6 + $0x2c] sm:$0xf]
        %v1817 = vld [vmem:[%s6 + $0x30] sm:$0xf]
        %v1818 = vld [vmem:[%s6 + $0x34] sm:$0xf]
        %v1819 = vld [vmem:[%s6 + $0x38] sm:$0xf]
        %v1820 = vld [vmem:[%s6 + $0x3c] sm:$0xf]
        %v1821 = vld [vmem:[%s6 + $0x40] sm:$0xf]
        %v1822 = vld [vmem:[%s6 + $0x44] sm:$0xf]
        %v1823 = vld [vmem:[%s6 + $0x48] sm:$0xf]
        %v1824 = vld [vmem:[%s6 + $0x4c] sm:$0xf]
        %v1825 = vld [vmem:[%s6 + $0x50] sm:$0xf]
        %v1826 = vld [vmem:[%s6 + $0x54] sm:$0xf]
        %v1827 = vld [vmem:[%s6 + $0x58] sm:$0xf]
        %v1828 = vld [vmem:[%s6 + $0x5c] sm:$0xf]
        %v1829 = vld [vmem:[%s6 + $0x60] sm:$0xf]
        %v1830 = vld [vmem:[%s6 + $0x64] sm:$0xf]
        %v1831 = vld [vmem:[%s6 + $0x68] sm:$0xf]
        %v1832 = vld [vmem:[%s6 + $0x6c] sm:$0xf]
        %v1833 = vld [vmem:[%s6 + $0x70] sm:$0xf]
        %v1834 = vld [vmem:[%s6 + $0x74] sm:$0xf]
        %v1835 = vld [vmem:[%s6 + $0x78] sm:$0xf]
        %v1836 = vld [vmem:[%s6 + $0x7c] sm:$0xf]
        %v1837 = vld [vmem:[%s7] sm:$0x1]
        %v1839 = vperm.slane %v1837, 0
        %v1873 = vunpack.c.l.b16 %v1805
        %v1874 = vunpack.c.l.b16 %v1806
        %v1875 = vunpack.c.l.b16 %v1807
        %v1876 = vunpack.c.l.b16 %v1808
        %v1877 = vunpack.c.l.b16 %v1809
        %v1878 = vunpack.c.l.b16 %v1810
        %v1879 = vunpack.c.l.b16 %v1811
        %v1880 = vunpack.c.l.b16 %v1812
        %v1881 = vunpack.c.l.b16 %v1813
        %v1882 = vunpack.c.l.b16 %v1814
        %v1883 = vunpack.c.l.b16 %v1815
        %v1884 = vunpack.c.l.b16 %v1816
        %v1885 = vunpack.c.l.b16 %v1817
        %v1886 = vunpack.c.l.b16 %v1818
        %v1887 = vunpack.c.l.b16 %v1819
        %v1888 = vunpack.c.l.b16 %v1820
        %v1889 = vunpack.c.l.b16 %v1821
        %v1890 = vunpack.c.l.b16 %v1822
        %v1891 = vunpack.c.l.b16 %v1823
        %v1892 = vunpack.c.l.b16 %v1824
        %v1893 = vunpack.c.l.b16 %v1825
        %v1894 = vunpack.c.l.b16 %v1826
        %v1895 = vunpack.c.l.b16 %v1827
        %v1896 = vunpack.c.l.b16 %v1828
        %v1897 = vunpack.c.l.b16 %v1829
        %v1898 = vunpack.c.l.b16 %v1830
        %v1899 = vunpack.c.l.b16 %v1831
        %v1900 = vunpack.c.l.b16 %v1832
        %v1901 = vunpack.c.l.b16 %v1833
        %v1902 = vunpack.c.l.b16 %v1834
        %v1903 = vunpack.c.l.b16 %v1835
        %v1904 = vunpack.c.l.b16 %v1836
        %v1905 = vpack.c.b16 %v1874, %v1873
        %v1906 = vpack.c.b16 %v1876, %v1875
        %v1907 = vpack.c.b16 %v1878, %v1877
        %v1908 = vpack.c.b16 %v1880, %v1879
        %v1909 = vpack.c.b16 %v1882, %v1881
        %v1910 = vpack.c.b16 %v1884, %v1883
        %v1911 = vpack.c.b16 %v1886, %v1885
        %v1912 = vpack.c.b16 %v1888, %v1887
        %v1913 = vpack.c.b16 %v1890, %v1889
        %v1914 = vpack.c.b16 %v1892, %v1891
        %v1915 = vpack.c.b16 %v1894, %v1893
        %v1916 = vpack.c.b16 %v1896, %v1895
        %v1917 = vpack.c.b16 %v1898, %v1897
        %v1918 = vpack.c.b16 %v1900, %v1899
        %v1919 = vpack.c.b16 %v1902, %v1901
        %v1920 = vpack.c.b16 %v1904, %v1903
        %1937 = vmatpush.bf16.msra.mxu0 %v1912
        %1938 = vmatpush.bf16.msra.mxu0 %v1911
        %1939 = vmatpush.bf16.msra.mxu0 %v1910
        %1940 = vmatpush.bf16.msra.mxu0 %v1909
        %1941 = vmatpush.bf16.msra.mxu0 %v1908
        %1942 = vmatpush.bf16.msra.mxu0 %v1907
        %1943 = vmatpush.bf16.msra.mxu0 %v1906
        %1944 = vmatpush.bf16.msra.mxu0 %v1905
        %1945 = vmatmul.bf16.gmra.mxu0 %v1741
        %v1946 = vpop.f32.mrf.mxu0
        %v1947 = vadd.f32 %v1839, %v1946
        %v1948 = vpop.f32.mrf.mxu0
        %v1949 = vadd.f32 %v1839, %v1948
        %1950 = vmatmul.bf16.gmra.mxu0 %v1743
        %v1951 = vpop.f32.mrf.mxu0
        %v1952 = vadd.f32 %v1839, %v1951
        %v1953 = vpop.f32.mrf.mxu0
        %v1954 = vadd.f32 %v1839, %v1953
        %1955 = vmatmul.bf16.gmra.mxu0 %v1745
        %v1956 = vpop.f32.mrf.mxu0
        %v1957 = vadd.f32 %v1839, %v1956
        %v1958 = vpop.f32.mrf.mxu0
        %v1959 = vadd.f32 %v1839, %v1958
        %1960 = vmatmul.bf16.gmra.mxu0 %v1747
        %v1961 = vpop.f32.mrf.mxu0
        %v1962 = vadd.f32 %v1839, %v1961
        %v1963 = vpop.f32.mrf.mxu0
        %v1964 = vadd.f32 %v1839, %v1963
        %1965 = vmatmul.bf16.gmra.mxu0 %v1749
        %v1966 = vpop.f32.mrf.mxu0
        %v1967 = vadd.f32 %v1839, %v1966
        %v1968 = vpop.f32.mrf.mxu0
        %v1969 = vadd.f32 %v1839, %v1968
        %1970 = vmatmul.bf16.gmra.mxu0 %v1751
        %v1971 = vpop.f32.mrf.mxu0
        %v1972 = vadd.f32 %v1839, %v1971
        %v1973 = vpop.f32.mrf.mxu0
        %v1974 = vadd.f32 %v1839, %v1973
        %1975 = vmatmul.bf16.gmra.mxu0 %v1753
        %v1976 = vpop.f32.mrf.mxu0
        %v1977 = vadd.f32 %v1839, %v1976
        %v1978 = vpop.f32.mrf.mxu0
        %v1979 = vadd.f32 %v1839, %v1978
        %1980 = vmatmul.bf16.gmra.mxu0 %v1755
        %v1981 = vpop.f32.mrf.mxu0
        %v1982 = vadd.f32 %v1839, %v1981
        %v1983 = vpop.f32.mrf.mxu0
        %v1984 = vadd.f32 %v1839, %v1983
        %1985 = vmatmul.bf16.gmra.mxu0 %v1757
        %v1986 = vpop.f32.mrf.mxu0
        %v1987 = vadd.f32 %v1839, %v1986
        %v1988 = vpop.f32.mrf.mxu0
        %v1989 = vadd.f32 %v1839, %v1988
        %1990 = vmatmul.bf16.gmra.mxu0 %v1759
        %v1991 = vpop.f32.mrf.mxu0
        %v1992 = vadd.f32 %v1839, %v1991
        %v1993 = vpop.f32.mrf.mxu0
        %v1994 = vadd.f32 %v1839, %v1993
        %1995 = vmatmul.bf16.gmra.mxu0 %v1761
        %v1996 = vpop.f32.mrf.mxu0
        %v1997 = vadd.f32 %v1839, %v1996
        %v1998 = vpop.f32.mrf.mxu0
        %v1999 = vadd.f32 %v1839, %v1998
        %2000 = vmatmul.bf16.gmra.mxu0 %v1763
        %v2001 = vpop.f32.mrf.mxu0
        %v2002 = vadd.f32 %v1839, %v2001
        %v2003 = vpop.f32.mrf.mxu0
        %v2004 = vadd.f32 %v1839, %v2003
        %2005 = vmatmul.bf16.gmra.mxu0 %v1765
        %v2006 = vpop.f32.mrf.mxu0
        %v2007 = vadd.f32 %v1839, %v2006
        %v2008 = vpop.f32.mrf.mxu0
        %v2009 = vadd.f32 %v1839, %v2008
        %2010 = vmatmul.bf16.gmra.mxu0 %v1767
        %v2011 = vpop.f32.mrf.mxu0
        %v2012 = vadd.f32 %v1839, %v2011
        %v2013 = vpop.f32.mrf.mxu0
        %v2014 = vadd.f32 %v1839, %v2013
        %2015 = vmatmul.bf16.gmra.mxu0 %v1769
        %v2016 = vpop.f32.mrf.mxu0
        %v2017 = vadd.f32 %v1839, %v2016
        %v2018 = vpop.f32.mrf.mxu0
        %v2019 = vadd.f32 %v1839, %v2018
        %2020 = vmatmul.bf16.gmra.mxu0 %v1771
        %v2021 = vpop.f32.mrf.mxu0
        %v2022 = vadd.f32 %v1839, %v2021
        %v2023 = vpop.f32.mrf.mxu0
        %v2024 = vadd.f32 %v1839, %v2023
        %2025 = vmatmul.bf16.gmra.mxu0 %v1773
        %v2026 = vpop.f32.mrf.mxu0
        %v2027 = vadd.f32 %v1839, %v2026
        %v2028 = vpop.f32.mrf.mxu0
        %v2029 = vadd.f32 %v1839, %v2028
        %2030 = vmatmul.bf16.gmra.mxu0 %v1775
        %v2031 = vpop.f32.mrf.mxu0
        %v2032 = vadd.f32 %v1839, %v2031
        %v2033 = vpop.f32.mrf.mxu0
        %v2034 = vadd.f32 %v1839, %v2033
        %2035 = vmatmul.bf16.gmra.mxu0 %v1777
        %v2036 = vpop.f32.mrf.mxu0
        %v2037 = vadd.f32 %v1839, %v2036
        %v2038 = vpop.f32.mrf.mxu0
        %v2039 = vadd.f32 %v1839, %v2038
        %2040 = vmatmul.bf16.gmra.mxu0 %v1779
        %v2041 = vpop.f32.mrf.mxu0
        %v2042 = vadd.f32 %v1839, %v2041
        %v2043 = vpop.f32.mrf.mxu0
        %v2044 = vadd.f32 %v1839, %v2043
        %2045 = vmatmul.bf16.gmra.mxu0 %v1781
        %v2046 = vpop.f32.mrf.mxu0
        %v2047 = vadd.f32 %v1839, %v2046
        %v2048 = vpop.f32.mrf.mxu0
        %v2049 = vadd.f32 %v1839, %v2048
        %2050 = vmatmul.bf16.gmra.mxu0 %v1783
        %v2051 = vpop.f32.mrf.mxu0
        %v2052 = vadd.f32 %v1839, %v2051
        %v2053 = vpop.f32.mrf.mxu0
        %v2054 = vadd.f32 %v1839, %v2053
        %2055 = vmatmul.bf16.gmra.mxu0 %v1785
        %v2056 = vpop.f32.mrf.mxu0
        %v2057 = vadd.f32 %v1839, %v2056
        %v2058 = vpop.f32.mrf.mxu0
        %v2059 = vadd.f32 %v1839, %v2058
        %2060 = vmatmul.bf16.gmra.mxu0 %v1787
        %v2061 = vpop.f32.mrf.mxu0
        %v2062 = vadd.f32 %v1839, %v2061
        %v2063 = vpop.f32.mrf.mxu0
        %v2064 = vadd.f32 %v1839, %v2063
        %2065 = vmatmul.bf16.gmra.mxu0 %v1789
        %v2066 = vpop.f32.mrf.mxu0
        %v2067 = vadd.f32 %v1839, %v2066
        %v2068 = vpop.f32.mrf.mxu0
        %v2069 = vadd.f32 %v1839, %v2068
        %2070 = vmatmul.bf16.gmra.mxu0 %v1791
        %v2071 = vpop.f32.mrf.mxu0
        %v2072 = vadd.f32 %v1839, %v2071
        %v2073 = vpop.f32.mrf.mxu0
        %v2074 = vadd.f32 %v1839, %v2073
        %2075 = vmatmul.bf16.gmra.mxu0 %v1793
        %v2076 = vpop.f32.mrf.mxu0
        %v2077 = vadd.f32 %v1839, %v2076
        %v2078 = vpop.f32.mrf.mxu0
        %v2079 = vadd.f32 %v1839, %v2078
        %2080 = vmatmul.bf16.gmra.mxu0 %v1795
        %v2081 = vpop.f32.mrf.mxu0
        %v2082 = vadd.f32 %v1839, %v2081
        %v2083 = vpop.f32.mrf.mxu0
        %v2084 = vadd.f32 %v1839, %v2083
        %2085 = vmatmul.bf16.gmra.mxu0 %v1797
        %v2086 = vpop.f32.mrf.mxu0
        %v2087 = vadd.f32 %v1839, %v2086
        %v2088 = vpop.f32.mrf.mxu0
        %v2089 = vadd.f32 %v1839, %v2088
        %2090 = vmatmul.bf16.gmra.mxu0 %v1799
        %v2091 = vpop.f32.mrf.mxu0
        %v2092 = vadd.f32 %v1839, %v2091
        %v2093 = vpop.f32.mrf.mxu0
        %v2094 = vadd.f32 %v1839, %v2093
        %2095 = vmatmul.bf16.gmra.mxu0 %v1801
        %v2096 = vpop.f32.mrf.mxu0
        %v2097 = vadd.f32 %v1839, %v2096
        %v2098 = vpop.f32.mrf.mxu0
        %v2099 = vadd.f32 %v1839, %v2098
        %2100 = vmatmul.bf16.gmra.mxu0 %v1803
        %v2101 = vpop.f32.mrf.mxu0
        %v2102 = vadd.f32 %v1839, %v2101
        %v2103 = vpop.f32.mrf.mxu0
        %v2104 = vadd.f32 %v1839, %v2103
        %2105 = vdwg.mxu0
        %2106 = vmatpush.bf16.msra.mxu0 %v1920
        %2107 = vmatpush.bf16.msra.mxu0 %v1919
        %2108 = vmatpush.bf16.msra.mxu0 %v1918
        %2109 = vmatpush.bf16.msra.mxu0 %v1917
        %2110 = vmatpush.bf16.msra.mxu0 %v1916
        %2111 = vmatpush.bf16.msra.mxu0 %v1915
        %2112 = vmatpush.bf16.msra.mxu0 %v1914
        %2113 = vmatpush.bf16.msra.mxu0 %v1913
        %2114 = vmatmul.bf16.gmra.mxu0 %v1742
        %v2115 = vpop.f32.mrf.mxu0
        %v2116 = vadd.f32 %v1947, %v2115
        %v2117 = vpop.f32.mrf.mxu0
        %v2118 = vadd.f32 %v1949, %v2117
        %2119 = vmatmul.bf16.gmra.mxu0 %v1744
        %v2120 = vpop.f32.mrf.mxu0
        %v2121 = vadd.f32 %v1952, %v2120
        %v2122 = vpop.f32.mrf.mxu0
        %v2123 = vadd.f32 %v1954, %v2122
        %2124 = vmatmul.bf16.gmra.mxu0 %v1746
        %v2125 = vpop.f32.mrf.mxu0
        %v2126 = vadd.f32 %v1957, %v2125
        %v2127 = vpop.f32.mrf.mxu0
        %v2128 = vadd.f32 %v1959, %v2127
        %2129 = vmatmul.bf16.gmra.mxu0 %v1748
        %v2130 = vpop.f32.mrf.mxu0
        %v2131 = vadd.f32 %v1962, %v2130
        %v2132 = vpop.f32.mrf.mxu0
        %v2133 = vadd.f32 %v1964, %v2132
        %2134 = vmatmul.bf16.gmra.mxu0 %v1750
        %v2135 = vpop.f32.mrf.mxu0
        %v2136 = vadd.f32 %v1967, %v2135
        %v2137 = vpop.f32.mrf.mxu0
        %v2138 = vadd.f32 %v1969, %v2137
        %2139 = vmatmul.bf16.gmra.mxu0 %v1752
        %v2140 = vpop.f32.mrf.mxu0
        %v2141 = vadd.f32 %v1972, %v2140
        %v2142 = vpop.f32.mrf.mxu0
        %v2143 = vadd.f32 %v1974, %v2142
        %2144 = vmatmul.bf16.gmra.mxu0 %v1754
        %v2145 = vpop.f32.mrf.mxu0
        %v2146 = vadd.f32 %v1977, %v2145
        %v2147 = vpop.f32.mrf.mxu0
        %v2148 = vadd.f32 %v1979, %v2147
        %2149 = vmatmul.bf16.gmra.mxu0 %v1756
        %v2150 = vpop.f32.mrf.mxu0
        %v2151 = vadd.f32 %v1982, %v2150
        %v2152 = vpop.f32.mrf.mxu0
        %v2153 = vadd.f32 %v1984, %v2152
        %2154 = vmatmul.bf16.gmra.mxu0 %v1758
        %v2155 = vpop.f32.mrf.mxu0
        %v2156 = vadd.f32 %v1987, %v2155
        %v2157 = vpop.f32.mrf.mxu0
        %v2158 = vadd.f32 %v1989, %v2157
        %2159 = vmatmul.bf16.gmra.mxu0 %v1760
        %v2160 = vpop.f32.mrf.mxu0
        %v2161 = vadd.f32 %v1992, %v2160
        %v2162 = vpop.f32.mrf.mxu0
        %v2163 = vadd.f32 %v1994, %v2162
        %2164 = vmatmul.bf16.gmra.mxu0 %v1762
        %v2165 = vpop.f32.mrf.mxu0
        %v2166 = vadd.f32 %v1997, %v2165
        %v2167 = vpop.f32.mrf.mxu0
        %v2168 = vadd.f32 %v1999, %v2167
        %2169 = vmatmul.bf16.gmra.mxu0 %v1764
        %v2170 = vpop.f32.mrf.mxu0
        %v2171 = vadd.f32 %v2002, %v2170
        %v2172 = vpop.f32.mrf.mxu0
        %v2173 = vadd.f32 %v2004, %v2172
        %2174 = vmatmul.bf16.gmra.mxu0 %v1766
        %v2175 = vpop.f32.mrf.mxu0
        %v2176 = vadd.f32 %v2007, %v2175
        %v2177 = vpop.f32.mrf.mxu0
        %v2178 = vadd.f32 %v2009, %v2177
        %2179 = vmatmul.bf16.gmra.mxu0 %v1768
        %v2180 = vpop.f32.mrf.mxu0
        %v2181 = vadd.f32 %v2012, %v2180
        %v2182 = vpop.f32.mrf.mxu0
        %v2183 = vadd.f32 %v2014, %v2182
        %2184 = vmatmul.bf16.gmra.mxu0 %v1770
        %v2185 = vpop.f32.mrf.mxu0
        %v2186 = vadd.f32 %v2017, %v2185
        %v2187 = vpop.f32.mrf.mxu0
        %v2188 = vadd.f32 %v2019, %v2187
        %2189 = vmatmul.bf16.gmra.mxu0 %v1772
        %v2190 = vpop.f32.mrf.mxu0
        %v2191 = vadd.f32 %v2022, %v2190
        %v2192 = vpop.f32.mrf.mxu0
        %v2193 = vadd.f32 %v2024, %v2192
        %2194 = vmatmul.bf16.gmra.mxu0 %v1774
        %v2195 = vpop.f32.mrf.mxu0
        %v2196 = vadd.f32 %v2027, %v2195
        %v2197 = vpop.f32.mrf.mxu0
        %v2198 = vadd.f32 %v2029, %v2197
        %2199 = vmatmul.bf16.gmra.mxu0 %v1776
        %v2200 = vpop.f32.mrf.mxu0
        %v2201 = vadd.f32 %v2032, %v2200
        %v2202 = vpop.f32.mrf.mxu0
        %v2203 = vadd.f32 %v2034, %v2202
        %2204 = vmatmul.bf16.gmra.mxu0 %v1778
        %v2205 = vpop.f32.mrf.mxu0
        %v2206 = vadd.f32 %v2037, %v2205
        %v2207 = vpop.f32.mrf.mxu0
        %v2208 = vadd.f32 %v2039, %v2207
        %2209 = vmatmul.bf16.gmra.mxu0 %v1780
        %v2210 = vpop.f32.mrf.mxu0
        %v2211 = vadd.f32 %v2042, %v2210
        %v2212 = vpop.f32.mrf.mxu0
        %v2213 = vadd.f32 %v2044, %v2212
        %2214 = vmatmul.bf16.gmra.mxu0 %v1782
        %v2215 = vpop.f32.mrf.mxu0
        %v2216 = vadd.f32 %v2047, %v2215
        %v2217 = vpop.f32.mrf.mxu0
        %v2218 = vadd.f32 %v2049, %v2217
        %2219 = vmatmul.bf16.gmra.mxu0 %v1784
        %v2220 = vpop.f32.mrf.mxu0
        %v2221 = vadd.f32 %v2052, %v2220
        %v2222 = vpop.f32.mrf.mxu0
        %v2223 = vadd.f32 %v2054, %v2222
        %2224 = vmatmul.bf16.gmra.mxu0 %v1786
        %v2225 = vpop.f32.mrf.mxu0
        %v2226 = vadd.f32 %v2057, %v2225
        %v2227 = vpop.f32.mrf.mxu0
        %v2228 = vadd.f32 %v2059, %v2227
        %2229 = vmatmul.bf16.gmra.mxu0 %v1788
        %v2230 = vpop.f32.mrf.mxu0
        %v2231 = vadd.f32 %v2062, %v2230
        %v2232 = vpop.f32.mrf.mxu0
        %v2233 = vadd.f32 %v2064, %v2232
        %2234 = vmatmul.bf16.gmra.mxu0 %v1790
        %v2235 = vpop.f32.mrf.mxu0
        %v2236 = vadd.f32 %v2067, %v2235
        %v2237 = vpop.f32.mrf.mxu0
        %v2238 = vadd.f32 %v2069, %v2237
        %2239 = vmatmul.bf16.gmra.mxu0 %v1792
        %v2240 = vpop.f32.mrf.mxu0
        %v2241 = vadd.f32 %v2072, %v2240
        %v2242 = vpop.f32.mrf.mxu0
        %v2243 = vadd.f32 %v2074, %v2242
        %2244 = vmatmul.bf16.gmra.mxu0 %v1794
        %v2245 = vpop.f32.mrf.mxu0
        %v2246 = vadd.f32 %v2077, %v2245
        %v2247 = vpop.f32.mrf.mxu0
        %v2248 = vadd.f32 %v2079, %v2247
        %2249 = vmatmul.bf16.gmra.mxu0 %v1796
        %v2250 = vpop.f32.mrf.mxu0
        %v2251 = vadd.f32 %v2082, %v2250
        %v2252 = vpop.f32.mrf.mxu0
        %v2253 = vadd.f32 %v2084, %v2252
        %2254 = vmatmul.bf16.gmra.mxu0 %v1798
        %v2255 = vpop.f32.mrf.mxu0
        %v2256 = vadd.f32 %v2087, %v2255
        %v2257 = vpop.f32.mrf.mxu0
        %v2258 = vadd.f32 %v2089, %v2257
        %2259 = vmatmul.bf16.gmra.mxu0 %v1800
        %v2260 = vpop.f32.mrf.mxu0
        %v2261 = vadd.f32 %v2092, %v2260
        %v2262 = vpop.f32.mrf.mxu0
        %v2263 = vadd.f32 %v2094, %v2262
        %2264 = vmatmul.bf16.gmra.mxu0 %v1802
        %v2265 = vpop.f32.mrf.mxu0
        %v2266 = vadd.f32 %v2097, %v2265
        %v2267 = vpop.f32.mrf.mxu0
        %v2268 = vadd.f32 %v2099, %v2267
        %2269 = vmatmul.bf16.gmra.mxu0 %v1804
        %v2270 = vpop.f32.mrf.mxu0
        %v2271 = vadd.f32 %v2102, %v2270
        %v2272 = vpop.f32.mrf.mxu0
        %v2273 = vadd.f32 %v2104, %v2272
        %2274 = vdwg.mxu0
        %v2275 = vmax.f32 %v2116, 0.0
        %v2276 = vmax.f32 %v2118, 0.0
        %v2277 = vmax.f32 %v2121, 0.0
        %v2278 = vmax.f32 %v2123, 0.0
        %v2279 = vmax.f32 %v2126, 0.0
        %v2280 = vmax.f32 %v2128, 0.0
        %v2281 = vmax.f32 %v2131, 0.0
        %v2282 = vmax.f32 %v2133, 0.0
        %v2283 = vmax.f32 %v2136, 0.0
        %v2284 = vmax.f32 %v2138, 0.0
        %v2285 = vmax.f32 %v2141, 0.0
        %v2286 = vmax.f32 %v2143, 0.0
        %v2287 = vmax.f32 %v2146, 0.0
        %v2288 = vmax.f32 %v2148, 0.0
        %v2289 = vmax.f32 %v2151, 0.0
        %v2290 = vmax.f32 %v2153, 0.0
        %v2291 = vmax.f32 %v2156, 0.0
        %v2292 = vmax.f32 %v2158, 0.0
        %v2293 = vmax.f32 %v2161, 0.0
        %v2294 = vmax.f32 %v2163, 0.0
        %v2295 = vmax.f32 %v2166, 0.0
        %v2296 = vmax.f32 %v2168, 0.0
        %v2297 = vmax.f32 %v2171, 0.0
        %v2298 = vmax.f32 %v2173, 0.0
        %v2299 = vmax.f32 %v2176, 0.0
        %v2300 = vmax.f32 %v2178, 0.0
        %v2301 = vmax.f32 %v2181, 0.0
        %v2302 = vmax.f32 %v2183, 0.0
        %v2303 = vmax.f32 %v2186, 0.0
        %v2304 = vmax.f32 %v2188, 0.0
        %v2305 = vmax.f32 %v2191, 0.0
        %v2306 = vmax.f32 %v2193, 0.0
        %v2307 = vmax.f32 %v2196, 0.0
        %v2308 = vmax.f32 %v2198, 0.0
        %v2309 = vmax.f32 %v2201, 0.0
        %v2310 = vmax.f32 %v2203, 0.0
        %v2311 = vmax.f32 %v2206, 0.0
        %v2312 = vmax.f32 %v2208, 0.0
        %v2313 = vmax.f32 %v2211, 0.0
        %v2314 = vmax.f32 %v2213, 0.0
        %v2315 = vmax.f32 %v2216, 0.0
        %v2316 = vmax.f32 %v2218, 0.0
        %v2317 = vmax.f32 %v2221, 0.0
        %v2318 = vmax.f32 %v2223, 0.0
        %v2319 = vmax.f32 %v2226, 0.0
        %v2320 = vmax.f32 %v2228, 0.0
        %v2321 = vmax.f32 %v2231, 0.0
        %v2322 = vmax.f32 %v2233, 0.0
        %v2323 = vmax.f32 %v2236, 0.0
        %v2324 = vmax.f32 %v2238, 0.0
        %v2325 = vmax.f32 %v2241, 0.0
        %v2326 = vmax.f32 %v2243, 0.0
        %v2327 = vmax.f32 %v2246, 0.0
        %v2328 = vmax.f32 %v2248, 0.0
        %v2329 = vmax.f32 %v2251, 0.0
        %v2330 = vmax.f32 %v2253, 0.0
        %v2331 = vmax.f32 %v2256, 0.0
        %v2332 = vmax.f32 %v2258, 0.0
        %v2333 = vmax.f32 %v2261, 0.0
        %v2334 = vmax.f32 %v2263, 0.0
        %v2335 = vmax.f32 %v2266, 0.0
        %v2336 = vmax.f32 %v2268, 0.0
        %v2337 = vmax.f32 %v2271, 0.0
        %v2338 = vmax.f32 %v2273, 0.0
        %v2339 = vpack.c.bf16 %v2275, %v2275
        %v2340 = vpack.c.bf16 %v2276, %v2276
        %v2341 = vpack.c.bf16 %v2277, %v2277
        %v2342 = vpack.c.bf16 %v2278, %v2278
        %v2343 = vpack.c.bf16 %v2279, %v2279
        %v2344 = vpack.c.bf16 %v2280, %v2280
        %v2345 = vpack.c.bf16 %v2281, %v2281
        %v2346 = vpack.c.bf16 %v2282, %v2282
        %v2347 = vpack.c.bf16 %v2283, %v2283
        %v2348 = vpack.c.bf16 %v2284, %v2284
        %v2349 = vpack.c.bf16 %v2285, %v2285
        %v2350 = vpack.c.bf16 %v2286, %v2286
        %v2351 = vpack.c.bf16 %v2287, %v2287
        %v2352 = vpack.c.bf16 %v2288, %v2288
        %v2353 = vpack.c.bf16 %v2289, %v2289
        %v2354 = vpack.c.bf16 %v2290, %v2290
        %v2355 = vpack.c.bf16 %v2291, %v2291
        %v2356 = vpack.c.bf16 %v2292, %v2292
        %v2357 = vpack.c.bf16 %v2293, %v2293
        %v2358 = vpack.c.bf16 %v2294, %v2294
        %v2359 = vpack.c.bf16 %v2295, %v2295
        %v2360 = vpack.c.bf16 %v2296, %v2296
        %v2361 = vpack.c.bf16 %v2297, %v2297
        %v2362 = vpack.c.bf16 %v2298, %v2298
        %v2363 = vpack.c.bf16 %v2299, %v2299
        %v2364 = vpack.c.bf16 %v2300, %v2300
        %v2365 = vpack.c.bf16 %v2301, %v2301
        %v2366 = vpack.c.bf16 %v2302, %v2302
        %v2367 = vpack.c.bf16 %v2303, %v2303
        %v2368 = vpack.c.bf16 %v2304, %v2304
        %v2369 = vpack.c.bf16 %v2305, %v2305
        %v2370 = vpack.c.bf16 %v2306, %v2306
        %v2371 = vpack.c.bf16 %v2307, %v2307
        %v2372 = vpack.c.bf16 %v2308, %v2308
        %v2373 = vpack.c.bf16 %v2309, %v2309
        %v2374 = vpack.c.bf16 %v2310, %v2310
        %v2375 = vpack.c.bf16 %v2311, %v2311
        %v2376 = vpack.c.bf16 %v2312, %v2312
        %v2377 = vpack.c.bf16 %v2313, %v2313
        %v2378 = vpack.c.bf16 %v2314, %v2314
        %v2379 = vpack.c.bf16 %v2315, %v2315
        %v2380 = vpack.c.bf16 %v2316, %v2316
        %v2381 = vpack.c.bf16 %v2317, %v2317
        %v2382 = vpack.c.bf16 %v2318, %v2318
        %v2383 = vpack.c.bf16 %v2319, %v2319
        %v2384 = vpack.c.bf16 %v2320, %v2320
        %v2385 = vpack.c.bf16 %v2321, %v2321
        %v2386 = vpack.c.bf16 %v2322, %v2322
        %v2387 = vpack.c.bf16 %v2323, %v2323
        %v2388 = vpack.c.bf16 %v2324, %v2324
        %v2389 = vpack.c.bf16 %v2325, %v2325
        %v2390 = vpack.c.bf16 %v2326, %v2326
        %v2391 = vpack.c.bf16 %v2327, %v2327
        %v2392 = vpack.c.bf16 %v2328, %v2328
        %v2393 = vpack.c.bf16 %v2329, %v2329
        %v2394 = vpack.c.bf16 %v2330, %v2330
        %v2395 = vpack.c.bf16 %v2331, %v2331
        %v2396 = vpack.c.bf16 %v2332, %v2332
        %v2397 = vpack.c.bf16 %v2333, %v2333
        %v2398 = vpack.c.bf16 %v2334, %v2334
        %v2399 = vpack.c.bf16 %v2335, %v2335
        %v2400 = vpack.c.bf16 %v2336, %v2336
        %v2401 = vpack.c.bf16 %v2337, %v2337
        %v2402 = vpack.c.bf16 %v2338, %v2338
        %2403 = vst [vmem:[%s517] sm:$0xf] %v2339
        %2404 = vst [vmem:[%s517 + $0x4] sm:$0xf] %v2340
        %2405 = vst [vmem:[%s517 + $0x8] sm:$0xf] %v2341
        %2406 = vst [vmem:[%s517 + $0xc] sm:$0xf] %v2342
        %2407 = vst [vmem:[%s517 + $0x10] sm:$0xf] %v2343
        %2408 = vst [vmem:[%s517 + $0x14] sm:$0xf] %v2344
        %2409 = vst [vmem:[%s517 + $0x18] sm:$0xf] %v2345
        %2410 = vst [vmem:[%s517 + $0x1c] sm:$0xf] %v2346
        %2411 = vst [vmem:[%s517 + $0x20] sm:$0xf] %v2347
        %2412 = vst [vmem:[%s517 + $0x24] sm:$0xf] %v2348
        %2413 = vst [vmem:[%s517 + $0x28] sm:$0xf] %v2349
        %2414 = vst [vmem:[%s517 + $0x2c] sm:$0xf] %v2350
        %2415 = vst [vmem:[%s517 + $0x30] sm:$0xf] %v2351
        %2416 = vst [vmem:[%s517 + $0x34] sm:$0xf] %v2352
        %2417 = vst [vmem:[%s517 + $0x38] sm:$0xf] %v2353
        %2418 = vst [vmem:[%s517 + $0x3c] sm:$0xf] %v2354
        %2419 = vst [vmem:[%s517 + $0x40] sm:$0xf] %v2355
        %2420 = vst [vmem:[%s517 + $0x44] sm:$0xf] %v2356
        %2421 = vst [vmem:[%s517 + $0x48] sm:$0xf] %v2357
        %2422 = vst [vmem:[%s517 + $0x4c] sm:$0xf] %v2358
        %2423 = vst [vmem:[%s517 + $0x50] sm:$0xf] %v2359
        %2424 = vst [vmem:[%s517 + $0x54] sm:$0xf] %v2360
        %2425 = vst [vmem:[%s517 + $0x58] sm:$0xf] %v2361
        %2426 = vst [vmem:[%s517 + $0x5c] sm:$0xf] %v2362
        %2427 = vst [vmem:[%s517 + $0x60] sm:$0xf] %v2363
        %2428 = vst [vmem:[%s517 + $0x64] sm:$0xf] %v2364
        %2429 = vst [vmem:[%s517 + $0x68] sm:$0xf] %v2365
        %2430 = vst [vmem:[%s517 + $0x6c] sm:$0xf] %v2366
        %2431 = vst [vmem:[%s517 + $0x70] sm:$0xf] %v2367
        %2432 = vst [vmem:[%s517 + $0x74] sm:$0xf] %v2368
        %2433 = vst [vmem:[%s517 + $0x78] sm:$0xf] %v2369
        %2434 = vst [vmem:[%s517 + $0x7c] sm:$0xf] %v2370
        %2435 = vst [vmem:[%s517 + $0x80] sm:$0xf] %v2371
        %2436 = vst [vmem:[%s517 + $0x84] sm:$0xf] %v2372
        %2437 = vst [vmem:[%s517 + $0x88] sm:$0xf] %v2373
        %2438 = vst [vmem:[%s517 + $0x8c] sm:$0xf] %v2374
        %2439 = vst [vmem:[%s517 + $0x90] sm:$0xf] %v2375
        %2440 = vst [vmem:[%s517 + $0x94] sm:$0xf] %v2376
        %2441 = vst [vmem:[%s517 + $0x98] sm:$0xf] %v2377
        %2442 = vst [vmem:[%s517 + $0x9c] sm:$0xf] %v2378
        %2443 = vst [vmem:[%s517 + $0xa0] sm:$0xf] %v2379
        %2444 = vst [vmem:[%s517 + $0xa4] sm:$0xf] %v2380
        %2445 = vst [vmem:[%s517 + $0xa8] sm:$0xf] %v2381
        %2446 = vst [vmem:[%s517 + $0xac] sm:$0xf] %v2382
        %2447 = vst [vmem:[%s517 + $0xb0] sm:$0xf] %v2383
        %2448 = vst [vmem:[%s517 + $0xb4] sm:$0xf] %v2384
        %2449 = vst [vmem:[%s517 + $0xb8] sm:$0xf] %v2385
        %2450 = vst [vmem:[%s517 + $0xbc] sm:$0xf] %v2386
        %2451 = vst [vmem:[%s517 + $0xc0] sm:$0xf] %v2387
        %2452 = vst [vmem:[%s517 + $0xc4] sm:$0xf] %v2388
        %2453 = vst [vmem:[%s517 + $0xc8] sm:$0xf] %v2389
        %2454 = vst [vmem:[%s517 + $0xcc] sm:$0xf] %v2390
        %2455 = vst [vmem:[%s517 + $0xd0] sm:$0xf] %v2391
        %2456 = vst [vmem:[%s517 + $0xd4] sm:$0xf] %v2392
        %2457 = vst [vmem:[%s517 + $0xd8] sm:$0xf] %v2393
        %2458 = vst [vmem:[%s517 + $0xdc] sm:$0xf] %v2394
        %2459 = vst [vmem:[%s517 + $0xe0] sm:$0xf] %v2395
        %2460 = vst [vmem:[%s517 + $0xe4] sm:$0xf] %v2396
        %2461 = vst [vmem:[%s517 + $0xe8] sm:$0xf] %v2397
        %2462 = vst [vmem:[%s517 + $0xec] sm:$0xf] %v2398
        %2463 = vst [vmem:[%s517 + $0xf0] sm:$0xf] %v2399
        %2464 = vst [vmem:[%s517 + $0xf4] sm:$0xf] %v2400
        %2465 = vst [vmem:[%s517 + $0xf8] sm:$0xf] %v2401
        %2466 = vst [vmem:[%s517 + $0xfc] sm:$0xf] %v2402
        %v2467 = vld [vmem:[%s8] sm:$0xff]
        %v2468 = vld [vmem:[%s8 + $0x8] sm:$0xff]
        %v2469 = vld [vmem:[%s8 + $0x10] sm:$0xff]
        %v2470 = vld [vmem:[%s8 + $0x18] sm:$0xff]
        %v2471 = vld [vmem:[%s8 + $0x20] sm:$0xff]
        %v2472 = vld [vmem:[%s8 + $0x28] sm:$0xff]
        %v2473 = vld [vmem:[%s8 + $0x30] sm:$0xff]
        %v2474 = vld [vmem:[%s8 + $0x38] sm:$0xff]
        %v2475 = vld [vmem:[%s8 + $0x40] sm:$0xff]
        %v2476 = vld [vmem:[%s8 + $0x48] sm:$0xff]
        %v2477 = vld [vmem:[%s8 + $0x50] sm:$0xff]
        %v2478 = vld [vmem:[%s8 + $0x58] sm:$0xff]
        %v2479 = vld [vmem:[%s8 + $0x60] sm:$0xff]
        %v2480 = vld [vmem:[%s8 + $0x68] sm:$0xff]
        %v2481 = vld [vmem:[%s8 + $0x70] sm:$0xff]
        %v2482 = vld [vmem:[%s8 + $0x78] sm:$0xff]
        %v2483 = vld [vmem:[%s9] sm:$0x3]
        %v2485 = vperm.slane %v2483, 0
        %v2486 = vperm.slane %v2483, 1
        %v2553 = vunpack.c.l.b16 %v2339
        %v2554 = vunpack.c.l.b16 %v2340
        %v2555 = vunpack.c.l.b16 %v2341
        %v2556 = vunpack.c.l.b16 %v2342
        %v2557 = vunpack.c.l.b16 %v2343
        %v2558 = vunpack.c.l.b16 %v2344
        %v2559 = vunpack.c.l.b16 %v2345
        %v2560 = vunpack.c.l.b16 %v2346
        %v2561 = vunpack.c.l.b16 %v2347
        %v2562 = vunpack.c.l.b16 %v2348
        %v2563 = vunpack.c.l.b16 %v2349
        %v2564 = vunpack.c.l.b16 %v2350
        %v2565 = vunpack.c.l.b16 %v2351
        %v2566 = vunpack.c.l.b16 %v2352
        %v2567 = vunpack.c.l.b16 %v2353
        %v2568 = vunpack.c.l.b16 %v2354
        %v2569 = vunpack.c.l.b16 %v2355
        %v2570 = vunpack.c.l.b16 %v2356
        %v2571 = vunpack.c.l.b16 %v2357
        %v2572 = vunpack.c.l.b16 %v2358
        %v2573 = vunpack.c.l.b16 %v2359
        %v2574 = vunpack.c.l.b16 %v2360
        %v2575 = vunpack.c.l.b16 %v2361
        %v2576 = vunpack.c.l.b16 %v2362
        %v2577 = vunpack.c.l.b16 %v2363
        %v2578 = vunpack.c.l.b16 %v2364
        %v2579 = vunpack.c.l.b16 %v2365
        %v2580 = vunpack.c.l.b16 %v2366
        %v2581 = vunpack.c.l.b16 %v2367
        %v2582 = vunpack.c.l.b16 %v2368
        %v2583 = vunpack.c.l.b16 %v2369
        %v2584 = vunpack.c.l.b16 %v2370
        %v2585 = vunpack.c.l.b16 %v2371
        %v2586 = vunpack.c.l.b16 %v2372
        %v2587 = vunpack.c.l.b16 %v2373
        %v2588 = vunpack.c.l.b16 %v2374
        %v2589 = vunpack.c.l.b16 %v2375
        %v2590 = vunpack.c.l.b16 %v2376
        %v2591 = vunpack.c.l.b16 %v2377
        %v2592 = vunpack.c.l.b16 %v2378
        %v2593 = vunpack.c.l.b16 %v2379
        %v2594 = vunpack.c.l.b16 %v2380
        %v2595 = vunpack.c.l.b16 %v2381
        %v2596 = vunpack.c.l.b16 %v2382
        %v2597 = vunpack.c.l.b16 %v2383
        %v2598 = vunpack.c.l.b16 %v2384
        %v2599 = vunpack.c.l.b16 %v2385
        %v2600 = vunpack.c.l.b16 %v2386
        %v2601 = vunpack.c.l.b16 %v2387
        %v2602 = vunpack.c.l.b16 %v2388
        %v2603 = vunpack.c.l.b16 %v2389
        %v2604 = vunpack.c.l.b16 %v2390
        %v2605 = vunpack.c.l.b16 %v2391
        %v2606 = vunpack.c.l.b16 %v2392
        %v2607 = vunpack.c.l.b16 %v2393
        %v2608 = vunpack.c.l.b16 %v2394
        %v2609 = vunpack.c.l.b16 %v2395
        %v2610 = vunpack.c.l.b16 %v2396
        %v2611 = vunpack.c.l.b16 %v2397
        %v2612 = vunpack.c.l.b16 %v2398
        %v2613 = vunpack.c.l.b16 %v2399
        %v2614 = vunpack.c.l.b16 %v2400
        %v2615 = vunpack.c.l.b16 %v2401
        %v2616 = vunpack.c.l.b16 %v2402
        %v2617 = vpack.c.b16 %v2554, %v2553
        %v2618 = vpack.c.b16 %v2556, %v2555
        %v2619 = vpack.c.b16 %v2558, %v2557
        %v2620 = vpack.c.b16 %v2560, %v2559
        %v2621 = vpack.c.b16 %v2562, %v2561
        %v2622 = vpack.c.b16 %v2564, %v2563
        %v2623 = vpack.c.b16 %v2566, %v2565
        %v2624 = vpack.c.b16 %v2568, %v2567
        %v2625 = vpack.c.b16 %v2570, %v2569
        %v2626 = vpack.c.b16 %v2572, %v2571
        %v2627 = vpack.c.b16 %v2574, %v2573
        %v2628 = vpack.c.b16 %v2576, %v2575
        %v2629 = vpack.c.b16 %v2578, %v2577
        %v2630 = vpack.c.b16 %v2580, %v2579
        %v2631 = vpack.c.b16 %v2582, %v2581
        %v2632 = vpack.c.b16 %v2584, %v2583
        %v2633 = vpack.c.b16 %v2586, %v2585
        %v2634 = vpack.c.b16 %v2588, %v2587
        %v2635 = vpack.c.b16 %v2590, %v2589
        %v2636 = vpack.c.b16 %v2592, %v2591
        %v2637 = vpack.c.b16 %v2594, %v2593
        %v2638 = vpack.c.b16 %v2596, %v2595
        %v2639 = vpack.c.b16 %v2598, %v2597
        %v2640 = vpack.c.b16 %v2600, %v2599
        %v2641 = vpack.c.b16 %v2602, %v2601
        %v2642 = vpack.c.b16 %v2604, %v2603
        %v2643 = vpack.c.b16 %v2606, %v2605
        %v2644 = vpack.c.b16 %v2608, %v2607
        %v2645 = vpack.c.b16 %v2610, %v2609
        %v2646 = vpack.c.b16 %v2612, %v2611
        %v2647 = vpack.c.b16 %v2614, %v2613
        %v2648 = vpack.c.b16 %v2616, %v2615
        %v2697 = vunpack.c.l.b16 %v2467
        %v2698 = vunpack.c.h.b16 %v2467
        %v2699 = vunpack.c.l.b16 %v2468
        %v2700 = vunpack.c.h.b16 %v2468
        %v2701 = vunpack.c.l.b16 %v2469
        %v2702 = vunpack.c.h.b16 %v2469
        %v2703 = vunpack.c.l.b16 %v2470
        %v2704 = vunpack.c.h.b16 %v2470
        %v2705 = vunpack.c.l.b16 %v2471
        %v2706 = vunpack.c.h.b16 %v2471
        %v2707 = vunpack.c.l.b16 %v2472
        %v2708 = vunpack.c.h.b16 %v2472
        %v2709 = vunpack.c.l.b16 %v2473
        %v2710 = vunpack.c.h.b16 %v2473
        %v2711 = vunpack.c.l.b16 %v2474
        %v2712 = vunpack.c.h.b16 %v2474
        %v2713 = vunpack.c.l.b16 %v2475
        %v2714 = vunpack.c.h.b16 %v2475
        %v2715 = vunpack.c.l.b16 %v2476
        %v2716 = vunpack.c.h.b16 %v2476
        %v2717 = vunpack.c.l.b16 %v2477
        %v2718 = vunpack.c.h.b16 %v2477
        %v2719 = vunpack.c.l.b16 %v2478
        %v2720 = vunpack.c.h.b16 %v2478
        %v2721 = vunpack.c.l.b16 %v2479
        %v2722 = vunpack.c.h.b16 %v2479
        %v2723 = vunpack.c.l.b16 %v2480
        %v2724 = vunpack.c.h.b16 %v2480
        %v2725 = vunpack.c.l.b16 %v2481
        %v2726 = vunpack.c.h.b16 %v2481
        %v2727 = vunpack.c.l.b16 %v2482
        %v2728 = vunpack.c.h.b16 %v2482
        %v2729 = vpack.c.b16 %v2699, %v2697
        %v2730 = vpack.c.b16 %v2700, %v2698
        %v2731 = vpack.c.b16 %v2703, %v2701
        %v2732 = vpack.c.b16 %v2704, %v2702
        %v2733 = vpack.c.b16 %v2707, %v2705
        %v2734 = vpack.c.b16 %v2708, %v2706
        %v2735 = vpack.c.b16 %v2711, %v2709
        %v2736 = vpack.c.b16 %v2712, %v2710
        %v2737 = vpack.c.b16 %v2715, %v2713
        %v2738 = vpack.c.b16 %v2716, %v2714
        %v2739 = vpack.c.b16 %v2719, %v2717
        %v2740 = vpack.c.b16 %v2720, %v2718
        %v2741 = vpack.c.b16 %v2723, %v2721
        %v2742 = vpack.c.b16 %v2724, %v2722
        %v2743 = vpack.c.b16 %v2727, %v2725
        %v2744 = vpack.c.b16 %v2728, %v2726
        %2761 = vmatpush.bf16.msra.mxu0 %v2743
        %2762 = vmatpush.bf16.msra.mxu0 %v2741
        %2763 = vmatpush.bf16.msra.mxu0 %v2739
        %2764 = vmatpush.bf16.msra.mxu0 %v2737
        %2765 = vmatpush.bf16.msra.mxu0 %v2735
        %2766 = vmatpush.bf16.msra.mxu0 %v2733
        %2767 = vmatpush.bf16.msra.mxu0 %v2731
        %2768 = vmatpush.bf16.msra.mxu0 %v2729
        %2769 = vmatmul.bf16.gmra.mxu0 %v2617
        %v2770 = vpop.f32.mrf.mxu0
        %v2771 = vadd.f32 %v2485, %v2770
        %v2772 = vpop.f32.mrf.mxu0
        %v2773 = vadd.f32 %v2485, %v2772
        %2774 = vmatmul.bf16.gmra.mxu0 %v2618
        %v2775 = vpop.f32.mrf.mxu0
        %v2776 = vadd.f32 %v2485, %v2775
        %v2777 = vpop.f32.mrf.mxu0
        %v2778 = vadd.f32 %v2485, %v2777
        %2779 = vmatmul.bf16.gmra.mxu0 %v2619
        %v2780 = vpop.f32.mrf.mxu0
        %v2781 = vadd.f32 %v2485, %v2780
        %v2782 = vpop.f32.mrf.mxu0
        %v2783 = vadd.f32 %v2485, %v2782
        %2784 = vmatmul.bf16.gmra.mxu0 %v2620
        %v2785 = vpop.f32.mrf.mxu0
        %v2786 = vadd.f32 %v2485, %v2785
        %v2787 = vpop.f32.mrf.mxu0
        %v2788 = vadd.f32 %v2485, %v2787
        %2789 = vmatmul.bf16.gmra.mxu0 %v2621
        %v2790 = vpop.f32.mrf.mxu0
        %v2791 = vadd.f32 %v2485, %v2790
        %v2792 = vpop.f32.mrf.mxu0
        %v2793 = vadd.f32 %v2485, %v2792
        %2794 = vmatmul.bf16.gmra.mxu0 %v2622
        %v2795 = vpop.f32.mrf.mxu0
        %v2796 = vadd.f32 %v2485, %v2795
        %v2797 = vpop.f32.mrf.mxu0
        %v2798 = vadd.f32 %v2485, %v2797
        %2799 = vmatmul.bf16.gmra.mxu0 %v2623
        %v2800 = vpop.f32.mrf.mxu0
        %v2801 = vadd.f32 %v2485, %v2800
        %v2802 = vpop.f32.mrf.mxu0
        %v2803 = vadd.f32 %v2485, %v2802
        %2804 = vmatmul.bf16.gmra.mxu0 %v2624
        %v2805 = vpop.f32.mrf.mxu0
        %v2806 = vadd.f32 %v2485, %v2805
        %v2807 = vpop.f32.mrf.mxu0
        %v2808 = vadd.f32 %v2485, %v2807
        %2809 = vmatmul.bf16.gmra.mxu0 %v2625
        %v2810 = vpop.f32.mrf.mxu0
        %v2811 = vadd.f32 %v2485, %v2810
        %v2812 = vpop.f32.mrf.mxu0
        %v2813 = vadd.f32 %v2485, %v2812
        %2814 = vmatmul.bf16.gmra.mxu0 %v2626
        %v2815 = vpop.f32.mrf.mxu0
        %v2816 = vadd.f32 %v2485, %v2815
        %v2817 = vpop.f32.mrf.mxu0
        %v2818 = vadd.f32 %v2485, %v2817
        %2819 = vmatmul.bf16.gmra.mxu0 %v2627
        %v2820 = vpop.f32.mrf.mxu0
        %v2821 = vadd.f32 %v2485, %v2820
        %v2822 = vpop.f32.mrf.mxu0
        %v2823 = vadd.f32 %v2485, %v2822
        %2824 = vmatmul.bf16.gmra.mxu0 %v2628
        %v2825 = vpop.f32.mrf.mxu0
        %v2826 = vadd.f32 %v2485, %v2825
        %v2827 = vpop.f32.mrf.mxu0
        %v2828 = vadd.f32 %v2485, %v2827
        %2829 = vmatmul.bf16.gmra.mxu0 %v2629
        %v2830 = vpop.f32.mrf.mxu0
        %v2831 = vadd.f32 %v2485, %v2830
        %v2832 = vpop.f32.mrf.mxu0
        %v2833 = vadd.f32 %v2485, %v2832
        %2834 = vmatmul.bf16.gmra.mxu0 %v2630
        %v2835 = vpop.f32.mrf.mxu0
        %v2836 = vadd.f32 %v2485, %v2835
        %v2837 = vpop.f32.mrf.mxu0
        %v2838 = vadd.f32 %v2485, %v2837
        %2839 = vmatmul.bf16.gmra.mxu0 %v2631
        %v2840 = vpop.f32.mrf.mxu0
        %v2841 = vadd.f32 %v2485, %v2840
        %v2842 = vpop.f32.mrf.mxu0
        %v2843 = vadd.f32 %v2485, %v2842
        %2844 = vmatmul.bf16.gmra.mxu0 %v2632
        %v2845 = vpop.f32.mrf.mxu0
        %v2846 = vadd.f32 %v2485, %v2845
        %v2847 = vpop.f32.mrf.mxu0
        %v2848 = vadd.f32 %v2485, %v2847
        %2849 = vmatmul.bf16.gmra.mxu0 %v2633
        %v2850 = vpop.f32.mrf.mxu0
        %v2851 = vadd.f32 %v2485, %v2850
        %v2852 = vpop.f32.mrf.mxu0
        %v2853 = vadd.f32 %v2485, %v2852
        %2854 = vmatmul.bf16.gmra.mxu0 %v2634
        %v2855 = vpop.f32.mrf.mxu0
        %v2856 = vadd.f32 %v2485, %v2855
        %v2857 = vpop.f32.mrf.mxu0
        %v2858 = vadd.f32 %v2485, %v2857
        %2859 = vmatmul.bf16.gmra.mxu0 %v2635
        %v2860 = vpop.f32.mrf.mxu0
        %v2861 = vadd.f32 %v2485, %v2860
        %v2862 = vpop.f32.mrf.mxu0
        %v2863 = vadd.f32 %v2485, %v2862
        %2864 = vmatmul.bf16.gmra.mxu0 %v2636
        %v2865 = vpop.f32.mrf.mxu0
        %v2866 = vadd.f32 %v2485, %v2865
        %v2867 = vpop.f32.mrf.mxu0
        %v2868 = vadd.f32 %v2485, %v2867
        %2869 = vmatmul.bf16.gmra.mxu0 %v2637
        %v2870 = vpop.f32.mrf.mxu0
        %v2871 = vadd.f32 %v2485, %v2870
        %v2872 = vpop.f32.mrf.mxu0
        %v2873 = vadd.f32 %v2485, %v2872
        %2874 = vmatmul.bf16.gmra.mxu0 %v2638
        %v2875 = vpop.f32.mrf.mxu0
        %v2876 = vadd.f32 %v2485, %v2875
        %v2877 = vpop.f32.mrf.mxu0
        %v2878 = vadd.f32 %v2485, %v2877
        %2879 = vmatmul.bf16.gmra.mxu0 %v2639
        %v2880 = vpop.f32.mrf.mxu0
        %v2881 = vadd.f32 %v2485, %v2880
        %v2882 = vpop.f32.mrf.mxu0
        %v2883 = vadd.f32 %v2485, %v2882
        %2884 = vmatmul.bf16.gmra.mxu0 %v2640
        %v2885 = vpop.f32.mrf.mxu0
        %v2886 = vadd.f32 %v2485, %v2885
        %v2887 = vpop.f32.mrf.mxu0
        %v2888 = vadd.f32 %v2485, %v2887
        %2889 = vmatmul.bf16.gmra.mxu0 %v2641
        %v2890 = vpop.f32.mrf.mxu0
        %v2891 = vadd.f32 %v2485, %v2890
        %v2892 = vpop.f32.mrf.mxu0
        %v2893 = vadd.f32 %v2485, %v2892
        %2894 = vmatmul.bf16.gmra.mxu0 %v2642
        %v2895 = vpop.f32.mrf.mxu0
        %v2896 = vadd.f32 %v2485, %v2895
        %v2897 = vpop.f32.mrf.mxu0
        %v2898 = vadd.f32 %v2485, %v2897
        %2899 = vmatmul.bf16.gmra.mxu0 %v2643
        %v2900 = vpop.f32.mrf.mxu0
        %v2901 = vadd.f32 %v2485, %v2900
        %v2902 = vpop.f32.mrf.mxu0
        %v2903 = vadd.f32 %v2485, %v2902
        %2904 = vmatmul.bf16.gmra.mxu0 %v2644
        %v2905 = vpop.f32.mrf.mxu0
        %v2906 = vadd.f32 %v2485, %v2905
        %v2907 = vpop.f32.mrf.mxu0
        %v2908 = vadd.f32 %v2485, %v2907
        %2909 = vmatmul.bf16.gmra.mxu0 %v2645
        %v2910 = vpop.f32.mrf.mxu0
        %v2911 = vadd.f32 %v2485, %v2910
        %v2912 = vpop.f32.mrf.mxu0
        %v2913 = vadd.f32 %v2485, %v2912
        %2914 = vmatmul.bf16.gmra.mxu0 %v2646
        %v2915 = vpop.f32.mrf.mxu0
        %v2916 = vadd.f32 %v2485, %v2915
        %v2917 = vpop.f32.mrf.mxu0
        %v2918 = vadd.f32 %v2485, %v2917
        %2919 = vmatmul.bf16.gmra.mxu0 %v2647
        %v2920 = vpop.f32.mrf.mxu0
        %v2921 = vadd.f32 %v2485, %v2920
        %v2922 = vpop.f32.mrf.mxu0
        %v2923 = vadd.f32 %v2485, %v2922
        %2924 = vmatmul.bf16.gmra.mxu0 %v2648
        %v2925 = vpop.f32.mrf.mxu0
        %v2926 = vadd.f32 %v2485, %v2925
        %v2927 = vpop.f32.mrf.mxu0
        %v2928 = vadd.f32 %v2485, %v2927
        %2929 = vdwg.mxu0
        %2930 = vmatpush.bf16.msra.mxu0 %v2744
        %2931 = vmatpush.bf16.msra.mxu0 %v2742
        %2932 = vmatpush.bf16.msra.mxu0 %v2740
        %2933 = vmatpush.bf16.msra.mxu0 %v2738
        %2934 = vmatpush.bf16.msra.mxu0 %v2736
        %2935 = vmatpush.bf16.msra.mxu0 %v2734
        %2936 = vmatpush.bf16.msra.mxu0 %v2732
        %2937 = vmatpush.bf16.msra.mxu0 %v2730
        %2938 = vmatmul.bf16.gmra.mxu0 %v2617
        %v2939 = vpop.f32.mrf.mxu0
        %v2940 = vadd.f32 %v2486, %v2939
        %v2941 = vpop.f32.mrf.mxu0
        %v2942 = vadd.f32 %v2486, %v2941
        %2943 = vmatmul.bf16.gmra.mxu0 %v2618
        %v2944 = vpop.f32.mrf.mxu0
        %v2945 = vadd.f32 %v2486, %v2944
        %v2946 = vpop.f32.mrf.mxu0
        %v2947 = vadd.f32 %v2486, %v2946
        %2948 = vmatmul.bf16.gmra.mxu0 %v2619
        %v2949 = vpop.f32.mrf.mxu0
        %v2950 = vadd.f32 %v2486, %v2949
        %v2951 = vpop.f32.mrf.mxu0
        %v2952 = vadd.f32 %v2486, %v2951
        %2953 = vmatmul.bf16.gmra.mxu0 %v2620
        %v2954 = vpop.f32.mrf.mxu0
        %v2955 = vadd.f32 %v2486, %v2954
        %v2956 = vpop.f32.mrf.mxu0
        %v2957 = vadd.f32 %v2486, %v2956
        %2958 = vmatmul.bf16.gmra.mxu0 %v2621
        %v2959 = vpop.f32.mrf.mxu0
        %v2960 = vadd.f32 %v2486, %v2959
        %v2961 = vpop.f32.mrf.mxu0
        %v2962 = vadd.f32 %v2486, %v2961
        %2963 = vmatmul.bf16.gmra.mxu0 %v2622
        %v2964 = vpop.f32.mrf.mxu0
        %v2965 = vadd.f32 %v2486, %v2964
        %v2966 = vpop.f32.mrf.mxu0
        %v2967 = vadd.f32 %v2486, %v2966
        %2968 = vmatmul.bf16.gmra.mxu0 %v2623
        %v2969 = vpop.f32.mrf.mxu0
        %v2970 = vadd.f32 %v2486, %v2969
        %v2971 = vpop.f32.mrf.mxu0
        %v2972 = vadd.f32 %v2486, %v2971
        %2973 = vmatmul.bf16.gmra.mxu0 %v2624
        %v2974 = vpop.f32.mrf.mxu0
        %v2975 = vadd.f32 %v2486, %v2974
        %v2976 = vpop.f32.mrf.mxu0
        %v2977 = vadd.f32 %v2486, %v2976
        %2978 = vmatmul.bf16.gmra.mxu0 %v2625
        %v2979 = vpop.f32.mrf.mxu0
        %v2980 = vadd.f32 %v2486, %v2979
        %v2981 = vpop.f32.mrf.mxu0
        %v2982 = vadd.f32 %v2486, %v2981
        %2983 = vmatmul.bf16.gmra.mxu0 %v2626
        %v2984 = vpop.f32.mrf.mxu0
        %v2985 = vadd.f32 %v2486, %v2984
        %v2986 = vpop.f32.mrf.mxu0
        %v2987 = vadd.f32 %v2486, %v2986
        %2988 = vmatmul.bf16.gmra.mxu0 %v2627
        %v2989 = vpop.f32.mrf.mxu0
        %v2990 = vadd.f32 %v2486, %v2989
        %v2991 = vpop.f32.mrf.mxu0
        %v2992 = vadd.f32 %v2486, %v2991
        %2993 = vmatmul.bf16.gmra.mxu0 %v2628
        %v2994 = vpop.f32.mrf.mxu0
        %v2995 = vadd.f32 %v2486, %v2994
        %v2996 = vpop.f32.mrf.mxu0
        %v2997 = vadd.f32 %v2486, %v2996
        %2998 = vmatmul.bf16.gmra.mxu0 %v2629
        %v2999 = vpop.f32.mrf.mxu0
        %v3000 = vadd.f32 %v2486, %v2999
        %v3001 = vpop.f32.mrf.mxu0
        %v3002 = vadd.f32 %v2486, %v3001
        %3003 = vmatmul.bf16.gmra.mxu0 %v2630
        %v3004 = vpop.f32.mrf.mxu0
        %v3005 = vadd.f32 %v2486, %v3004
        %v3006 = vpop.f32.mrf.mxu0
        %v3007 = vadd.f32 %v2486, %v3006
        %3008 = vmatmul.bf16.gmra.mxu0 %v2631
        %v3009 = vpop.f32.mrf.mxu0
        %v3010 = vadd.f32 %v2486, %v3009
        %v3011 = vpop.f32.mrf.mxu0
        %v3012 = vadd.f32 %v2486, %v3011
        %3013 = vmatmul.bf16.gmra.mxu0 %v2632
        %v3014 = vpop.f32.mrf.mxu0
        %v3015 = vadd.f32 %v2486, %v3014
        %v3016 = vpop.f32.mrf.mxu0
        %v3017 = vadd.f32 %v2486, %v3016
        %3018 = vmatmul.bf16.gmra.mxu0 %v2633
        %v3019 = vpop.f32.mrf.mxu0
        %v3020 = vadd.f32 %v2486, %v3019
        %v3021 = vpop.f32.mrf.mxu0
        %v3022 = vadd.f32 %v2486, %v3021
        %3023 = vmatmul.bf16.gmra.mxu0 %v2634
        %v3024 = vpop.f32.mrf.mxu0
        %v3025 = vadd.f32 %v2486, %v3024
        %v3026 = vpop.f32.mrf.mxu0
        %v3027 = vadd.f32 %v2486, %v3026
        %3028 = vmatmul.bf16.gmra.mxu0 %v2635
        %v3029 = vpop.f32.mrf.mxu0
        %v3030 = vadd.f32 %v2486, %v3029
        %v3031 = vpop.f32.mrf.mxu0
        %v3032 = vadd.f32 %v2486, %v3031
        %3033 = vmatmul.bf16.gmra.mxu0 %v2636
        %v3034 = vpop.f32.mrf.mxu0
        %v3035 = vadd.f32 %v2486, %v3034
        %v3036 = vpop.f32.mrf.mxu0
        %v3037 = vadd.f32 %v2486, %v3036
        %3038 = vmatmul.bf16.gmra.mxu0 %v2637
        %v3039 = vpop.f32.mrf.mxu0
        %v3040 = vadd.f32 %v2486, %v3039
        %v3041 = vpop.f32.mrf.mxu0
        %v3042 = vadd.f32 %v2486, %v3041
        %3043 = vmatmul.bf16.gmra.mxu0 %v2638
        %v3044 = vpop.f32.mrf.mxu0
        %v3045 = vadd.f32 %v2486, %v3044
        %v3046 = vpop.f32.mrf.mxu0
        %v3047 = vadd.f32 %v2486, %v3046
        %3048 = vmatmul.bf16.gmra.mxu0 %v2639
        %v3049 = vpop.f32.mrf.mxu0
        %v3050 = vadd.f32 %v2486, %v3049
        %v3051 = vpop.f32.mrf.mxu0
        %v3052 = vadd.f32 %v2486, %v3051
        %3053 = vmatmul.bf16.gmra.mxu0 %v2640
        %v3054 = vpop.f32.mrf.mxu0
        %v3055 = vadd.f32 %v2486, %v3054
        %v3056 = vpop.f32.mrf.mxu0
        %v3057 = vadd.f32 %v2486, %v3056
        %3058 = vmatmul.bf16.gmra.mxu0 %v2641
        %v3059 = vpop.f32.mrf.mxu0
        %v3060 = vadd.f32 %v2486, %v3059
        %v3061 = vpop.f32.mrf.mxu0
        %v3062 = vadd.f32 %v2486, %v3061
        %3063 = vmatmul.bf16.gmra.mxu0 %v2642
        %v3064 = vpop.f32.mrf.mxu0
        %v3065 = vadd.f32 %v2486, %v3064
        %v3066 = vpop.f32.mrf.mxu0
        %v3067 = vadd.f32 %v2486, %v3066
        %3068 = vmatmul.bf16.gmra.mxu0 %v2643
        %v3069 = vpop.f32.mrf.mxu0
        %v3070 = vadd.f32 %v2486, %v3069
        %v3071 = vpop.f32.mrf.mxu0
        %v3072 = vadd.f32 %v2486, %v3071
        %3073 = vmatmul.bf16.gmra.mxu0 %v2644
        %v3074 = vpop.f32.mrf.mxu0
        %v3075 = vadd.f32 %v2486, %v3074
        %v3076 = vpop.f32.mrf.mxu0
        %v3077 = vadd.f32 %v2486, %v3076
        %3078 = vmatmul.bf16.gmra.mxu0 %v2645
        %v3079 = vpop.f32.mrf.mxu0
        %v3080 = vadd.f32 %v2486, %v3079
        %v3081 = vpop.f32.mrf.mxu0
        %v3082 = vadd.f32 %v2486, %v3081
        %3083 = vmatmul.bf16.gmra.mxu0 %v2646
        %v3084 = vpop.f32.mrf.mxu0
        %v3085 = vadd.f32 %v2486, %v3084
        %v3086 = vpop.f32.mrf.mxu0
        %v3087 = vadd.f32 %v2486, %v3086
        %3088 = vmatmul.bf16.gmra.mxu0 %v2647
        %v3089 = vpop.f32.mrf.mxu0
        %v3090 = vadd.f32 %v2486, %v3089
        %v3091 = vpop.f32.mrf.mxu0
        %v3092 = vadd.f32 %v2486, %v3091
        %3093 = vmatmul.bf16.gmra.mxu0 %v2648
        %v3094 = vpop.f32.mrf.mxu0
        %v3095 = vadd.f32 %v2486, %v3094
        %v3096 = vpop.f32.mrf.mxu0
        %v3097 = vadd.f32 %v2486, %v3096
        %3098 = vdwg.mxu0
        %v3099 = vtanh.pop %v2771
        %v3100 = vtanh.pop %v2773
        %v3101 = vtanh.pop %v2776
        %v3102 = vtanh.pop %v2778
        %v3103 = vtanh.pop %v2781
        %v3104 = vtanh.pop %v2783
        %v3105 = vtanh.pop %v2786
        %v3106 = vtanh.pop %v2788
        %v3107 = vtanh.pop %v2791
        %v3108 = vtanh.pop %v2793
        %v3109 = vtanh.pop %v2796
        %v3110 = vtanh.pop %v2798
        %v3111 = vtanh.pop %v2801
        %v3112 = vtanh.pop %v2803
        %v3113 = vtanh.pop %v2806
        %v3114 = vtanh.pop %v2808
        %v3115 = vtanh.pop %v2811
        %v3116 = vtanh.pop %v2813
        %v3117 = vtanh.pop %v2816
        %v3118 = vtanh.pop %v2818
        %v3119 = vtanh.pop %v2821
        %v3120 = vtanh.pop %v2823
        %v3121 = vtanh.pop %v2826
        %v3122 = vtanh.pop %v2828
        %v3123 = vtanh.pop %v2831
        %v3124 = vtanh.pop %v2833
        %v3125 = vtanh.pop %v2836
        %v3126 = vtanh.pop %v2838
        %v3127 = vtanh.pop %v2841
        %v3128 = vtanh.pop %v2843
        %v3129 = vtanh.pop %v2846
        %v3130 = vtanh.pop %v2848
        %v3131 = vtanh.pop %v2851
        %v3132 = vtanh.pop %v2853
        %v3133 = vtanh.pop %v2856
        %v3134 = vtanh.pop %v2858
        %v3135 = vtanh.pop %v2861
        %v3136 = vtanh.pop %v2863
        %v3137 = vtanh.pop %v2866
        %v3138 = vtanh.pop %v2868
        %v3139 = vtanh.pop %v2871
        %v3140 = vtanh.pop %v2873
        %v3141 = vtanh.pop %v2876
        %v3142 = vtanh.pop %v2878
        %v3143 = vtanh.pop %v2881
        %v3144 = vtanh.pop %v2883
        %v3145 = vtanh.pop %v2886
        %v3146 = vtanh.pop %v2888
        %v3147 = vtanh.pop %v2891
        %v3148 = vtanh.pop %v2893
        %v3149 = vtanh.pop %v2896
        %v3150 = vtanh.pop %v2898
        %v3151 = vtanh.pop %v2901
        %v3152 = vtanh.pop %v2903
        %v3153 = vtanh.pop %v2906
        %v3154 = vtanh.pop %v2908
        %v3155 = vtanh.pop %v2911
        %v3156 = vtanh.pop %v2913
        %v3157 = vtanh.pop %v2916
        %v3158 = vtanh.pop %v2918
        %v3159 = vtanh.pop %v2921
        %v3160 = vtanh.pop %v2923
        %v3161 = vtanh.pop %v2926
        %v3162 = vtanh.pop %v2928
        %v3163 = vxor.u32 %v2940, 2147483648
        %v3164 = vxor.u32 %v2942, 2147483648
        %v3165 = vxor.u32 %v2945, 2147483648
        %v3166 = vxor.u32 %v2947, 2147483648
        %v3167 = vxor.u32 %v2950, 2147483648
        %v3168 = vxor.u32 %v2952, 2147483648
        %v3169 = vxor.u32 %v2955, 2147483648
        %v3170 = vxor.u32 %v2957, 2147483648
        %v3171 = vxor.u32 %v2960, 2147483648
        %v3172 = vxor.u32 %v2962, 2147483648
        %v3173 = vxor.u32 %v2965, 2147483648
        %v3174 = vxor.u32 %v2967, 2147483648
        %v3175 = vxor.u32 %v2970, 2147483648
        %v3176 = vxor.u32 %v2972, 2147483648
        %v3177 = vxor.u32 %v2975, 2147483648
        %v3178 = vxor.u32 %v2977, 2147483648
        %v3179 = vxor.u32 %v2980, 2147483648
        %v3180 = vxor.u32 %v2982, 2147483648
        %v3181 = vxor.u32 %v2985, 2147483648
        %v3182 = vxor.u32 %v2987, 2147483648
        %v3183 = vxor.u32 %v2990, 2147483648
        %v3184 = vxor.u32 %v2992, 2147483648
        %v3185 = vxor.u32 %v2995, 2147483648
        %v3186 = vxor.u32 %v2997, 2147483648
        %v3187 = vxor.u32 %v3000, 2147483648
        %v3188 = vxor.u32 %v3002, 2147483648
        %v3189 = vxor.u32 %v3005, 2147483648
        %v3190 = vxor.u32 %v3007, 2147483648
        %v3191 = vxor.u32 %v3010, 2147483648
        %v3192 = vxor.u32 %v3012, 2147483648
        %v3193 = vxor.u32 %v3015, 2147483648
        %v3194 = vxor.u32 %v3017, 2147483648
        %v3195 = vxor.u32 %v3020, 2147483648
        %v3196 = vxor.u32 %v3022, 2147483648
        %v3197 = vxor.u32 %v3025, 2147483648
        %v3198 = vxor.u32 %v3027, 2147483648
        %v3199 = vxor.u32 %v3030, 2147483648
        %v3200 = vxor.u32 %v3032, 2147483648
        %v3201 = vxor.u32 %v3035, 2147483648
        %v3202 = vxor.u32 %v3037, 2147483648
        %v3203 = vxor.u32 %v3040, 2147483648
        %v3204 = vxor.u32 %v3042, 2147483648
        %v3205 = vxor.u32 %v3045, 2147483648
        %v3206 = vxor.u32 %v3047, 2147483648
        %v3207 = vxor.u32 %v3050, 2147483648
        %v3208 = vxor.u32 %v3052, 2147483648
        %v3209 = vxor.u32 %v3055, 2147483648
        %v3210 = vxor.u32 %v3057, 2147483648
        %v3211 = vxor.u32 %v3060, 2147483648
        %v3212 = vxor.u32 %v3062, 2147483648
        %v3213 = vxor.u32 %v3065, 2147483648
        %v3214 = vxor.u32 %v3067, 2147483648
        %v3215 = vxor.u32 %v3070, 2147483648
        %v3216 = vxor.u32 %v3072, 2147483648
        %v3217 = vxor.u32 %v3075, 2147483648
        %v3218 = vxor.u32 %v3077, 2147483648
        %v3219 = vxor.u32 %v3080, 2147483648
        %v3220 = vxor.u32 %v3082, 2147483648
        %v3221 = vxor.u32 %v3085, 2147483648
        %v3222 = vxor.u32 %v3087, 2147483648
        %v3223 = vxor.u32 %v3090, 2147483648
        %v3224 = vxor.u32 %v3092, 2147483648
        %v3225 = vxor.u32 %v3095, 2147483648
        %v3226 = vxor.u32 %v3097, 2147483648
        %v3227 = vmul.f32 %v3163, 1.442695
        %v3228 = vpow.pop %v3227
        %v3229 = vmul.f32 %v3164, 1.442695
        %v3230 = vpow.pop %v3229
        %v3231 = vmul.f32 %v3165, 1.442695
        %v3232 = vpow.pop %v3231
        %v3233 = vmul.f32 %v3166, 1.442695
        %v3234 = vpow.pop %v3233
        %v3235 = vmul.f32 %v3167, 1.442695
        %v3236 = vpow.pop %v3235
        %v3237 = vmul.f32 %v3168, 1.442695
        %v3238 = vpow.pop %v3237
        %v3239 = vmul.f32 %v3169, 1.442695
        %v3240 = vpow.pop %v3239
        %v3241 = vmul.f32 %v3170, 1.442695
        %v3242 = vpow.pop %v3241
        %v3243 = vmul.f32 %v3171, 1.442695
        %v3244 = vpow.pop %v3243
        %v3245 = vmul.f32 %v3172, 1.442695
        %v3246 = vpow.pop %v3245
        %v3247 = vmul.f32 %v3173, 1.442695
        %v3248 = vpow.pop %v3247
        %v3249 = vmul.f32 %v3174, 1.442695
        %v3250 = vpow.pop %v3249
        %v3251 = vmul.f32 %v3175, 1.442695
        %v3252 = vpow.pop %v3251
        %v3253 = vmul.f32 %v3176, 1.442695
        %v3254 = vpow.pop %v3253
        %v3255 = vmul.f32 %v3177, 1.442695
        %v3256 = vpow.pop %v3255
        %v3257 = vmul.f32 %v3178, 1.442695
        %v3258 = vpow.pop %v3257
        %v3259 = vmul.f32 %v3179, 1.442695
        %v3260 = vpow.pop %v3259
        %v3261 = vmul.f32 %v3180, 1.442695
        %v3262 = vpow.pop %v3261
        %v3263 = vmul.f32 %v3181, 1.442695
        %v3264 = vpow.pop %v3263
        %v3265 = vmul.f32 %v3182, 1.442695
        %v3266 = vpow.pop %v3265
        %v3267 = vmul.f32 %v3183, 1.442695
        %v3268 = vpow.pop %v3267
        %v3269 = vmul.f32 %v3184, 1.442695
        %v3270 = vpow.pop %v3269
        %v3271 = vmul.f32 %v3185, 1.442695
        %v3272 = vpow.pop %v3271
        %v3273 = vmul.f32 %v3186, 1.442695
        %v3274 = vpow.pop %v3273
        %v3275 = vmul.f32 %v3187, 1.442695
        %v3276 = vpow.pop %v3275
        %v3277 = vmul.f32 %v3188, 1.442695
        %v3278 = vpow.pop %v3277
        %v3279 = vmul.f32 %v3189, 1.442695
        %v3280 = vpow.pop %v3279
        %v3281 = vmul.f32 %v3190, 1.442695
        %v3282 = vpow.pop %v3281
        %v3283 = vmul.f32 %v3191, 1.442695
        %v3284 = vpow.pop %v3283
        %v3285 = vmul.f32 %v3192, 1.442695
        %v3286 = vpow.pop %v3285
        %v3287 = vmul.f32 %v3193, 1.442695
        %v3288 = vpow.pop %v3287
        %v3289 = vmul.f32 %v3194, 1.442695
        %v3290 = vpow.pop %v3289
        %v3291 = vmul.f32 %v3195, 1.442695
        %v3292 = vpow.pop %v3291
        %v3293 = vmul.f32 %v3196, 1.442695
        %v3294 = vpow.pop %v3293
        %v3295 = vmul.f32 %v3197, 1.442695
        %v3296 = vpow.pop %v3295
        %v3297 = vmul.f32 %v3198, 1.442695
        %v3298 = vpow.pop %v3297
        %v3299 = vmul.f32 %v3199, 1.442695
        %v3300 = vpow.pop %v3299
        %v3301 = vmul.f32 %v3200, 1.442695
        %v3302 = vpow.pop %v3301
        %v3303 = vmul.f32 %v3201, 1.442695
        %v3304 = vpow.pop %v3303
        %v3305 = vmul.f32 %v3202, 1.442695
        %v3306 = vpow.pop %v3305
        %v3307 = vmul.f32 %v3203, 1.442695
        %v3308 = vpow.pop %v3307
        %v3309 = vmul.f32 %v3204, 1.442695
        %v3310 = vpow.pop %v3309
        %v3311 = vmul.f32 %v3205, 1.442695
        %v3312 = vpow.pop %v3311
        %v3313 = vmul.f32 %v3206, 1.442695
        %v3314 = vpow.pop %v3313
        %v3315 = vmul.f32 %v3207, 1.442695
        %v3316 = vpow.pop %v3315
        %v3317 = vmul.f32 %v3208, 1.442695
        %v3318 = vpow.pop %v3317
        %v3319 = vmul.f32 %v3209, 1.442695
        %v3320 = vpow.pop %v3319
        %v3321 = vmul.f32 %v3210, 1.442695
        %v3322 = vpow.pop %v3321
        %v3323 = vmul.f32 %v3211, 1.442695
        %v3324 = vpow.pop %v3323
        %v3325 = vmul.f32 %v3212, 1.442695
        %v3326 = vpow.pop %v3325
        %v3327 = vmul.f32 %v3213, 1.442695
        %v3328 = vpow.pop %v3327
        %v3329 = vmul.f32 %v3214, 1.442695
        %v3330 = vpow.pop %v3329
        %v3331 = vmul.f32 %v3215, 1.442695
        %v3332 = vpow.pop %v3331
        %v3333 = vmul.f32 %v3216, 1.442695
        %v3334 = vpow.pop %v3333
        %v3335 = vmul.f32 %v3217, 1.442695
        %v3336 = vpow.pop %v3335
        %v3337 = vmul.f32 %v3218, 1.442695
        %v3338 = vpow.pop %v3337
        %v3339 = vmul.f32 %v3219, 1.442695
        %v3340 = vpow.pop %v3339
        %v3341 = vmul.f32 %v3220, 1.442695
        %v3342 = vpow.pop %v3341
        %v3343 = vmul.f32 %v3221, 1.442695
        %v3344 = vpow.pop %v3343
        %v3345 = vmul.f32 %v3222, 1.442695
        %v3346 = vpow.pop %v3345
        %v3347 = vmul.f32 %v3223, 1.442695
        %v3348 = vpow.pop %v3347
        %v3349 = vmul.f32 %v3224, 1.442695
        %v3350 = vpow.pop %v3349
        %v3351 = vmul.f32 %v3225, 1.442695
        %v3352 = vpow.pop %v3351
        %v3353 = vmul.f32 %v3226, 1.442695
        %v3354 = vpow.pop %v3353
        %v3355 = vadd.f32 %v3228, 1.0
        %v3356 = vadd.f32 %v3230, 1.0
        %v3357 = vadd.f32 %v3232, 1.0
        %v3358 = vadd.f32 %v3234, 1.0
        %v3359 = vadd.f32 %v3236, 1.0
        %v3360 = vadd.f32 %v3238, 1.0
        %v3361 = vadd.f32 %v3240, 1.0
        %v3362 = vadd.f32 %v3242, 1.0
        %v3363 = vadd.f32 %v3244, 1.0
        %v3364 = vadd.f32 %v3246, 1.0
        %v3365 = vadd.f32 %v3248, 1.0
        %v3366 = vadd.f32 %v3250, 1.0
        %v3367 = vadd.f32 %v3252, 1.0
        %v3368 = vadd.f32 %v3254, 1.0
        %v3369 = vadd.f32 %v3256, 1.0
        %v3370 = vadd.f32 %v3258, 1.0
        %v3371 = vadd.f32 %v3260, 1.0
        %v3372 = vadd.f32 %v3262, 1.0
        %v3373 = vadd.f32 %v3264, 1.0
        %v3374 = vadd.f32 %v3266, 1.0
        %v3375 = vadd.f32 %v3268, 1.0
        %v3376 = vadd.f32 %v3270, 1.0
        %v3377 = vadd.f32 %v3272, 1.0
        %v3378 = vadd.f32 %v3274, 1.0
        %v3379 = vadd.f32 %v3276, 1.0
        %v3380 = vadd.f32 %v3278, 1.0
        %v3381 = vadd.f32 %v3280, 1.0
        %v3382 = vadd.f32 %v3282, 1.0
        %v3383 = vadd.f32 %v3284, 1.0
        %v3384 = vadd.f32 %v3286, 1.0
        %v3385 = vadd.f32 %v3288, 1.0
        %v3386 = vadd.f32 %v3290, 1.0
        %v3387 = vadd.f32 %v3292, 1.0
        %v3388 = vadd.f32 %v3294, 1.0
        %v3389 = vadd.f32 %v3296, 1.0
        %v3390 = vadd.f32 %v3298, 1.0
        %v3391 = vadd.f32 %v3300, 1.0
        %v3392 = vadd.f32 %v3302, 1.0
        %v3393 = vadd.f32 %v3304, 1.0
        %v3394 = vadd.f32 %v3306, 1.0
        %v3395 = vadd.f32 %v3308, 1.0
        %v3396 = vadd.f32 %v3310, 1.0
        %v3397 = vadd.f32 %v3312, 1.0
        %v3398 = vadd.f32 %v3314, 1.0
        %v3399 = vadd.f32 %v3316, 1.0
        %v3400 = vadd.f32 %v3318, 1.0
        %v3401 = vadd.f32 %v3320, 1.0
        %v3402 = vadd.f32 %v3322, 1.0
        %v3403 = vadd.f32 %v3324, 1.0
        %v3404 = vadd.f32 %v3326, 1.0
        %v3405 = vadd.f32 %v3328, 1.0
        %v3406 = vadd.f32 %v3330, 1.0
        %v3407 = vadd.f32 %v3332, 1.0
        %v3408 = vadd.f32 %v3334, 1.0
        %v3409 = vadd.f32 %v3336, 1.0
        %v3410 = vadd.f32 %v3338, 1.0
        %v3411 = vadd.f32 %v3340, 1.0
        %v3412 = vadd.f32 %v3342, 1.0
        %v3413 = vadd.f32 %v3344, 1.0
        %v3414 = vadd.f32 %v3346, 1.0
        %v3415 = vadd.f32 %v3348, 1.0
        %v3416 = vadd.f32 %v3350, 1.0
        %v3417 = vadd.f32 %v3352, 1.0
        %v3418 = vadd.f32 %v3354, 1.0
        %v3419 = vrcp.pop %v3355
        %v3420 = vmul.f32 %v3355, %v3419
        %v3421 = vsub.f32 1.0, %v3420
        %v3422 = vmul.f32 %v3419, %v3421
        %v3423 = vadd.f32 %v3419, %v3422
        %vm3424 = vweird.f32 %v3355
        %vm3425 = vweird.f32 %v3419
        %vm3426 = vmor %vm3424, %vm3425
        %v3427 = vsel %vm3426, %v3419, %v3423
        %v3428 = vand.u32 2147483647, %v3355
        %vm3429 = vcmp.eq.f32.partialorder %v3428, 8.507059e+37
        %v3430 = vand.u32 %v3355, 2147483648
        %v3431 = vor.u32 1.1754944e-38, %v3430
        %v3432 = vsel %vm3429, %v3431, %v3427
        %v3433 = vmul.f32 1.0, %v3432
        %v3434 = vrcp.pop %v3356
        %v3435 = vmul.f32 %v3356, %v3434
        %v3436 = vsub.f32 1.0, %v3435
        %v3437 = vmul.f32 %v3434, %v3436
        %v3438 = vadd.f32 %v3434, %v3437
        %vm3439 = vweird.f32 %v3356
        %vm3440 = vweird.f32 %v3434
        %vm3441 = vmor %vm3439, %vm3440
        %v3442 = vsel %vm3441, %v3434, %v3438
        %v3443 = vand.u32 2147483647, %v3356
        %vm3444 = vcmp.eq.f32.partialorder %v3443, 8.507059e+37
        %v3445 = vand.u32 %v3356, 2147483648
        %v3446 = vor.u32 1.1754944e-38, %v3445
        %v3447 = vsel %vm3444, %v3446, %v3442
        %v3448 = vmul.f32 1.0, %v3447
        %v3449 = vrcp.pop %v3357
        %v3450 = vmul.f32 %v3357, %v3449
        %v3451 = vsub.f32 1.0, %v3450
        %v3452 = vmul.f32 %v3449, %v3451
        %v3453 = vadd.f32 %v3449, %v3452
        %vm3454 = vweird.f32 %v3357
        %vm3455 = vweird.f32 %v3449
        %vm3456 = vmor %vm3454, %vm3455
        %v3457 = vsel %vm3456, %v3449, %v3453
        %v3458 = vand.u32 2147483647, %v3357
        %vm3459 = vcmp.eq.f32.partialorder %v3458, 8.507059e+37
        %v3460 = vand.u32 %v3357, 2147483648
        %v3461 = vor.u32 1.1754944e-38, %v3460
        %v3462 = vsel %vm3459, %v3461, %v3457
        %v3463 = vmul.f32 1.0, %v3462
        %v3464 = vrcp.pop %v3358
        %v3465 = vmul.f32 %v3358, %v3464
        %v3466 = vsub.f32 1.0, %v3465
        %v3467 = vmul.f32 %v3464, %v3466
        %v3468 = vadd.f32 %v3464, %v3467
        %vm3469 = vweird.f32 %v3358
        %vm3470 = vweird.f32 %v3464
        %vm3471 = vmor %vm3469, %vm3470
        %v3472 = vsel %vm3471, %v3464, %v3468
        %v3473 = vand.u32 2147483647, %v3358
        %vm3474 = vcmp.eq.f32.partialorder %v3473, 8.507059e+37
        %v3475 = vand.u32 %v3358, 2147483648
        %v3476 = vor.u32 1.1754944e-38, %v3475
        %v3477 = vsel %vm3474, %v3476, %v3472
        %v3478 = vmul.f32 1.0, %v3477
        %v3479 = vrcp.pop %v3359
        %v3480 = vmul.f32 %v3359, %v3479
        %v3481 = vsub.f32 1.0, %v3480
        %v3482 = vmul.f32 %v3479, %v3481
        %v3483 = vadd.f32 %v3479, %v3482
        %vm3484 = vweird.f32 %v3359
        %vm3485 = vweird.f32 %v3479
        %vm3486 = vmor %vm3484, %vm3485
        %v3487 = vsel %vm3486, %v3479, %v3483
        %v3488 = vand.u32 2147483647, %v3359
        %vm3489 = vcmp.eq.f32.partialorder %v3488, 8.507059e+37
        %v3490 = vand.u32 %v3359, 2147483648
        %v3491 = vor.u32 1.1754944e-38, %v3490
        %v3492 = vsel %vm3489, %v3491, %v3487
        %v3493 = vmul.f32 1.0, %v3492
        %v3494 = vrcp.pop %v3360
        %v3495 = vmul.f32 %v3360, %v3494
        %v3496 = vsub.f32 1.0, %v3495
        %v3497 = vmul.f32 %v3494, %v3496
        %v3498 = vadd.f32 %v3494, %v3497
        %vm3499 = vweird.f32 %v3360
        %vm3500 = vweird.f32 %v3494
        %vm3501 = vmor %vm3499, %vm3500
        %v3502 = vsel %vm3501, %v3494, %v3498
        %v3503 = vand.u32 2147483647, %v3360
        %vm3504 = vcmp.eq.f32.partialorder %v3503, 8.507059e+37
        %v3505 = vand.u32 %v3360, 2147483648
        %v3506 = vor.u32 1.1754944e-38, %v3505
        %v3507 = vsel %vm3504, %v3506, %v3502
        %v3508 = vmul.f32 1.0, %v3507
        %v3509 = vrcp.pop %v3361
        %v3510 = vmul.f32 %v3361, %v3509
        %v3511 = vsub.f32 1.0, %v3510
        %v3512 = vmul.f32 %v3509, %v3511
        %v3513 = vadd.f32 %v3509, %v3512
        %vm3514 = vweird.f32 %v3361
        %vm3515 = vweird.f32 %v3509
        %vm3516 = vmor %vm3514, %vm3515
        %v3517 = vsel %vm3516, %v3509, %v3513
        %v3518 = vand.u32 2147483647, %v3361
        %vm3519 = vcmp.eq.f32.partialorder %v3518, 8.507059e+37
        %v3520 = vand.u32 %v3361, 2147483648
        %v3521 = vor.u32 1.1754944e-38, %v3520
        %v3522 = vsel %vm3519, %v3521, %v3517
        %v3523 = vmul.f32 1.0, %v3522
        %v3524 = vrcp.pop %v3362
        %v3525 = vmul.f32 %v3362, %v3524
        %v3526 = vsub.f32 1.0, %v3525
        %v3527 = vmul.f32 %v3524, %v3526
        %v3528 = vadd.f32 %v3524, %v3527
        %vm3529 = vweird.f32 %v3362
        %vm3530 = vweird.f32 %v3524
        %vm3531 = vmor %vm3529, %vm3530
        %v3532 = vsel %vm3531, %v3524, %v3528
        %v3533 = vand.u32 2147483647, %v3362
        %vm3534 = vcmp.eq.f32.partialorder %v3533, 8.507059e+37
        %v3535 = vand.u32 %v3362, 2147483648
        %v3536 = vor.u32 1.1754944e-38, %v3535
        %v3537 = vsel %vm3534, %v3536, %v3532
        %v3538 = vmul.f32 1.0, %v3537
        %v3539 = vrcp.pop %v3363
        %v3540 = vmul.f32 %v3363, %v3539
        %v3541 = vsub.f32 1.0, %v3540
        %v3542 = vmul.f32 %v3539, %v3541
        %v3543 = vadd.f32 %v3539, %v3542
        %vm3544 = vweird.f32 %v3363
        %vm3545 = vweird.f32 %v3539
        %vm3546 = vmor %vm3544, %vm3545
        %v3547 = vsel %vm3546, %v3539, %v3543
        %v3548 = vand.u32 2147483647, %v3363
        %vm3549 = vcmp.eq.f32.partialorder %v3548, 8.507059e+37
        %v3550 = vand.u32 %v3363, 2147483648
        %v3551 = vor.u32 1.1754944e-38, %v3550
        %v3552 = vsel %vm3549, %v3551, %v3547
        %v3553 = vmul.f32 1.0, %v3552
        %v3554 = vrcp.pop %v3364
        %v3555 = vmul.f32 %v3364, %v3554
        %v3556 = vsub.f32 1.0, %v3555
        %v3557 = vmul.f32 %v3554, %v3556
        %v3558 = vadd.f32 %v3554, %v3557
        %vm3559 = vweird.f32 %v3364
        %vm3560 = vweird.f32 %v3554
        %vm3561 = vmor %vm3559, %vm3560
        %v3562 = vsel %vm3561, %v3554, %v3558
        %v3563 = vand.u32 2147483647, %v3364
        %vm3564 = vcmp.eq.f32.partialorder %v3563, 8.507059e+37
        %v3565 = vand.u32 %v3364, 2147483648
        %v3566 = vor.u32 1.1754944e-38, %v3565
        %v3567 = vsel %vm3564, %v3566, %v3562
        %v3568 = vmul.f32 1.0, %v3567
        %v3569 = vrcp.pop %v3365
        %v3570 = vmul.f32 %v3365, %v3569
        %v3571 = vsub.f32 1.0, %v3570
        %v3572 = vmul.f32 %v3569, %v3571
        %v3573 = vadd.f32 %v3569, %v3572
        %vm3574 = vweird.f32 %v3365
        %vm3575 = vweird.f32 %v3569
        %vm3576 = vmor %vm3574, %vm3575
        %v3577 = vsel %vm3576, %v3569, %v3573
        %v3578 = vand.u32 2147483647, %v3365
        %vm3579 = vcmp.eq.f32.partialorder %v3578, 8.507059e+37
        %v3580 = vand.u32 %v3365, 2147483648
        %v3581 = vor.u32 1.1754944e-38, %v3580
        %v3582 = vsel %vm3579, %v3581, %v3577
        %v3583 = vmul.f32 1.0, %v3582
        %v3584 = vrcp.pop %v3366
        %v3585 = vmul.f32 %v3366, %v3584
        %v3586 = vsub.f32 1.0, %v3585
        %v3587 = vmul.f32 %v3584, %v3586
        %v3588 = vadd.f32 %v3584, %v3587
        %vm3589 = vweird.f32 %v3366
        %vm3590 = vweird.f32 %v3584
        %vm3591 = vmor %vm3589, %vm3590
        %v3592 = vsel %vm3591, %v3584, %v3588
        %v3593 = vand.u32 2147483647, %v3366
        %vm3594 = vcmp.eq.f32.partialorder %v3593, 8.507059e+37
        %v3595 = vand.u32 %v3366, 2147483648
        %v3596 = vor.u32 1.1754944e-38, %v3595
        %v3597 = vsel %vm3594, %v3596, %v3592
        %v3598 = vmul.f32 1.0, %v3597
        %v3599 = vrcp.pop %v3367
        %v3600 = vmul.f32 %v3367, %v3599
        %v3601 = vsub.f32 1.0, %v3600
        %v3602 = vmul.f32 %v3599, %v3601
        %v3603 = vadd.f32 %v3599, %v3602
        %vm3604 = vweird.f32 %v3367
        %vm3605 = vweird.f32 %v3599
        %vm3606 = vmor %vm3604, %vm3605
        %v3607 = vsel %vm3606, %v3599, %v3603
        %v3608 = vand.u32 2147483647, %v3367
        %vm3609 = vcmp.eq.f32.partialorder %v3608, 8.507059e+37
        %v3610 = vand.u32 %v3367, 2147483648
        %v3611 = vor.u32 1.1754944e-38, %v3610
        %v3612 = vsel %vm3609, %v3611, %v3607
        %v3613 = vmul.f32 1.0, %v3612
        %v3614 = vrcp.pop %v3368
        %v3615 = vmul.f32 %v3368, %v3614
        %v3616 = vsub.f32 1.0, %v3615
        %v3617 = vmul.f32 %v3614, %v3616
        %v3618 = vadd.f32 %v3614, %v3617
        %vm3619 = vweird.f32 %v3368
        %vm3620 = vweird.f32 %v3614
        %vm3621 = vmor %vm3619, %vm3620
        %v3622 = vsel %vm3621, %v3614, %v3618
        %v3623 = vand.u32 2147483647, %v3368
        %vm3624 = vcmp.eq.f32.partialorder %v3623, 8.507059e+37
        %v3625 = vand.u32 %v3368, 2147483648
        %v3626 = vor.u32 1.1754944e-38, %v3625
        %v3627 = vsel %vm3624, %v3626, %v3622
        %v3628 = vmul.f32 1.0, %v3627
        %v3629 = vrcp.pop %v3369
        %v3630 = vmul.f32 %v3369, %v3629
        %v3631 = vsub.f32 1.0, %v3630
        %v3632 = vmul.f32 %v3629, %v3631
        %v3633 = vadd.f32 %v3629, %v3632
        %vm3634 = vweird.f32 %v3369
        %vm3635 = vweird.f32 %v3629
        %vm3636 = vmor %vm3634, %vm3635
        %v3637 = vsel %vm3636, %v3629, %v3633
        %v3638 = vand.u32 2147483647, %v3369
        %vm3639 = vcmp.eq.f32.partialorder %v3638, 8.507059e+37
        %v3640 = vand.u32 %v3369, 2147483648
        %v3641 = vor.u32 1.1754944e-38, %v3640
        %v3642 = vsel %vm3639, %v3641, %v3637
        %v3643 = vmul.f32 1.0, %v3642
        %v3644 = vrcp.pop %v3370
        %v3645 = vmul.f32 %v3370, %v3644
        %v3646 = vsub.f32 1.0, %v3645
        %v3647 = vmul.f32 %v3644, %v3646
        %v3648 = vadd.f32 %v3644, %v3647
        %vm3649 = vweird.f32 %v3370
        %vm3650 = vweird.f32 %v3644
        %vm3651 = vmor %vm3649, %vm3650
        %v3652 = vsel %vm3651, %v3644, %v3648
        %v3653 = vand.u32 2147483647, %v3370
        %vm3654 = vcmp.eq.f32.partialorder %v3653, 8.507059e+37
        %v3655 = vand.u32 %v3370, 2147483648
        %v3656 = vor.u32 1.1754944e-38, %v3655
        %v3657 = vsel %vm3654, %v3656, %v3652
        %v3658 = vmul.f32 1.0, %v3657
        %v3659 = vrcp.pop %v3371
        %v3660 = vmul.f32 %v3371, %v3659
        %v3661 = vsub.f32 1.0, %v3660
        %v3662 = vmul.f32 %v3659, %v3661
        %v3663 = vadd.f32 %v3659, %v3662
        %vm3664 = vweird.f32 %v3371
        %vm3665 = vweird.f32 %v3659
        %vm3666 = vmor %vm3664, %vm3665
        %v3667 = vsel %vm3666, %v3659, %v3663
        %v3668 = vand.u32 2147483647, %v3371
        %vm3669 = vcmp.eq.f32.partialorder %v3668, 8.507059e+37
        %v3670 = vand.u32 %v3371, 2147483648
        %v3671 = vor.u32 1.1754944e-38, %v3670
        %v3672 = vsel %vm3669, %v3671, %v3667
        %v3673 = vmul.f32 1.0, %v3672
        %v3674 = vrcp.pop %v3372
        %v3675 = vmul.f32 %v3372, %v3674
        %v3676 = vsub.f32 1.0, %v3675
        %v3677 = vmul.f32 %v3674, %v3676
        %v3678 = vadd.f32 %v3674, %v3677
        %vm3679 = vweird.f32 %v3372
        %vm3680 = vweird.f32 %v3674
        %vm3681 = vmor %vm3679, %vm3680
        %v3682 = vsel %vm3681, %v3674, %v3678
        %v3683 = vand.u32 2147483647, %v3372
        %vm3684 = vcmp.eq.f32.partialorder %v3683, 8.507059e+37
        %v3685 = vand.u32 %v3372, 2147483648
        %v3686 = vor.u32 1.1754944e-38, %v3685
        %v3687 = vsel %vm3684, %v3686, %v3682
        %v3688 = vmul.f32 1.0, %v3687
        %v3689 = vrcp.pop %v3373
        %v3690 = vmul.f32 %v3373, %v3689
        %v3691 = vsub.f32 1.0, %v3690
        %v3692 = vmul.f32 %v3689, %v3691
        %v3693 = vadd.f32 %v3689, %v3692
        %vm3694 = vweird.f32 %v3373
        %vm3695 = vweird.f32 %v3689
        %vm3696 = vmor %vm3694, %vm3695
        %v3697 = vsel %vm3696, %v3689, %v3693
        %v3698 = vand.u32 2147483647, %v3373
        %vm3699 = vcmp.eq.f32.partialorder %v3698, 8.507059e+37
        %v3700 = vand.u32 %v3373, 2147483648
        %v3701 = vor.u32 1.1754944e-38, %v3700
        %v3702 = vsel %vm3699, %v3701, %v3697
        %v3703 = vmul.f32 1.0, %v3702
        %v3704 = vrcp.pop %v3374
        %v3705 = vmul.f32 %v3374, %v3704
        %v3706 = vsub.f32 1.0, %v3705
        %v3707 = vmul.f32 %v3704, %v3706
        %v3708 = vadd.f32 %v3704, %v3707
        %vm3709 = vweird.f32 %v3374
        %vm3710 = vweird.f32 %v3704
        %vm3711 = vmor %vm3709, %vm3710
        %v3712 = vsel %vm3711, %v3704, %v3708
        %v3713 = vand.u32 2147483647, %v3374
        %vm3714 = vcmp.eq.f32.partialorder %v3713, 8.507059e+37
        %v3715 = vand.u32 %v3374, 2147483648
        %v3716 = vor.u32 1.1754944e-38, %v3715
        %v3717 = vsel %vm3714, %v3716, %v3712
        %v3718 = vmul.f32 1.0, %v3717
        %v3719 = vrcp.pop %v3375
        %v3720 = vmul.f32 %v3375, %v3719
        %v3721 = vsub.f32 1.0, %v3720
        %v3722 = vmul.f32 %v3719, %v3721
        %v3723 = vadd.f32 %v3719, %v3722
        %vm3724 = vweird.f32 %v3375
        %vm3725 = vweird.f32 %v3719
        %vm3726 = vmor %vm3724, %vm3725
        %v3727 = vsel %vm3726, %v3719, %v3723
        %v3728 = vand.u32 2147483647, %v3375
        %vm3729 = vcmp.eq.f32.partialorder %v3728, 8.507059e+37
        %v3730 = vand.u32 %v3375, 2147483648
        %v3731 = vor.u32 1.1754944e-38, %v3730
        %v3732 = vsel %vm3729, %v3731, %v3727
        %v3733 = vmul.f32 1.0, %v3732
        %v3734 = vrcp.pop %v3376
        %v3735 = vmul.f32 %v3376, %v3734
        %v3736 = vsub.f32 1.0, %v3735
        %v3737 = vmul.f32 %v3734, %v3736
        %v3738 = vadd.f32 %v3734, %v3737
        %vm3739 = vweird.f32 %v3376
        %vm3740 = vweird.f32 %v3734
        %vm3741 = vmor %vm3739, %vm3740
        %v3742 = vsel %vm3741, %v3734, %v3738
        %v3743 = vand.u32 2147483647, %v3376
        %vm3744 = vcmp.eq.f32.partialorder %v3743, 8.507059e+37
        %v3745 = vand.u32 %v3376, 2147483648
        %v3746 = vor.u32 1.1754944e-38, %v3745
        %v3747 = vsel %vm3744, %v3746, %v3742
        %v3748 = vmul.f32 1.0, %v3747
        %v3749 = vrcp.pop %v3377
        %v3750 = vmul.f32 %v3377, %v3749
        %v3751 = vsub.f32 1.0, %v3750
        %v3752 = vmul.f32 %v3749, %v3751
        %v3753 = vadd.f32 %v3749, %v3752
        %vm3754 = vweird.f32 %v3377
        %vm3755 = vweird.f32 %v3749
        %vm3756 = vmor %vm3754, %vm3755
        %v3757 = vsel %vm3756, %v3749, %v3753
        %v3758 = vand.u32 2147483647, %v3377
        %vm3759 = vcmp.eq.f32.partialorder %v3758, 8.507059e+37
        %v3760 = vand.u32 %v3377, 2147483648
        %v3761 = vor.u32 1.1754944e-38, %v3760
        %v3762 = vsel %vm3759, %v3761, %v3757
        %v3763 = vmul.f32 1.0, %v3762
        %v3764 = vrcp.pop %v3378
        %v3765 = vmul.f32 %v3378, %v3764
        %v3766 = vsub.f32 1.0, %v3765
        %v3767 = vmul.f32 %v3764, %v3766
        %v3768 = vadd.f32 %v3764, %v3767
        %vm3769 = vweird.f32 %v3378
        %vm3770 = vweird.f32 %v3764
        %vm3771 = vmor %vm3769, %vm3770
        %v3772 = vsel %vm3771, %v3764, %v3768
        %v3773 = vand.u32 2147483647, %v3378
        %vm3774 = vcmp.eq.f32.partialorder %v3773, 8.507059e+37
        %v3775 = vand.u32 %v3378, 2147483648
        %v3776 = vor.u32 1.1754944e-38, %v3775
        %v3777 = vsel %vm3774, %v3776, %v3772
        %v3778 = vmul.f32 1.0, %v3777
        %v3779 = vrcp.pop %v3379
        %v3780 = vmul.f32 %v3379, %v3779
        %v3781 = vsub.f32 1.0, %v3780
        %v3782 = vmul.f32 %v3779, %v3781
        %v3783 = vadd.f32 %v3779, %v3782
        %vm3784 = vweird.f32 %v3379
        %vm3785 = vweird.f32 %v3779
        %vm3786 = vmor %vm3784, %vm3785
        %v3787 = vsel %vm3786, %v3779, %v3783
        %v3788 = vand.u32 2147483647, %v3379
        %vm3789 = vcmp.eq.f32.partialorder %v3788, 8.507059e+37
        %v3790 = vand.u32 %v3379, 2147483648
        %v3791 = vor.u32 1.1754944e-38, %v3790
        %v3792 = vsel %vm3789, %v3791, %v3787
        %v3793 = vmul.f32 1.0, %v3792
        %v3794 = vrcp.pop %v3380
        %v3795 = vmul.f32 %v3380, %v3794
        %v3796 = vsub.f32 1.0, %v3795
        %v3797 = vmul.f32 %v3794, %v3796
        %v3798 = vadd.f32 %v3794, %v3797
        %vm3799 = vweird.f32 %v3380
        %vm3800 = vweird.f32 %v3794
        %vm3801 = vmor %vm3799, %vm3800
        %v3802 = vsel %vm3801, %v3794, %v3798
        %v3803 = vand.u32 2147483647, %v3380
        %vm3804 = vcmp.eq.f32.partialorder %v3803, 8.507059e+37
        %v3805 = vand.u32 %v3380, 2147483648
        %v3806 = vor.u32 1.1754944e-38, %v3805
        %v3807 = vsel %vm3804, %v3806, %v3802
        %v3808 = vmul.f32 1.0, %v3807
        %v3809 = vrcp.pop %v3381
        %v3810 = vmul.f32 %v3381, %v3809
        %v3811 = vsub.f32 1.0, %v3810
        %v3812 = vmul.f32 %v3809, %v3811
        %v3813 = vadd.f32 %v3809, %v3812
        %vm3814 = vweird.f32 %v3381
        %vm3815 = vweird.f32 %v3809
        %vm3816 = vmor %vm3814, %vm3815
        %v3817 = vsel %vm3816, %v3809, %v3813
        %v3818 = vand.u32 2147483647, %v3381
        %vm3819 = vcmp.eq.f32.partialorder %v3818, 8.507059e+37
        %v3820 = vand.u32 %v3381, 2147483648
        %v3821 = vor.u32 1.1754944e-38, %v3820
        %v3822 = vsel %vm3819, %v3821, %v3817
        %v3823 = vmul.f32 1.0, %v3822
        %v3824 = vrcp.pop %v3382
        %v3825 = vmul.f32 %v3382, %v3824
        %v3826 = vsub.f32 1.0, %v3825
        %v3827 = vmul.f32 %v3824, %v3826
        %v3828 = vadd.f32 %v3824, %v3827
        %vm3829 = vweird.f32 %v3382
        %vm3830 = vweird.f32 %v3824
        %vm3831 = vmor %vm3829, %vm3830
        %v3832 = vsel %vm3831, %v3824, %v3828
        %v3833 = vand.u32 2147483647, %v3382
        %vm3834 = vcmp.eq.f32.partialorder %v3833, 8.507059e+37
        %v3835 = vand.u32 %v3382, 2147483648
        %v3836 = vor.u32 1.1754944e-38, %v3835
        %v3837 = vsel %vm3834, %v3836, %v3832
        %v3838 = vmul.f32 1.0, %v3837
        %v3839 = vrcp.pop %v3383
        %v3840 = vmul.f32 %v3383, %v3839
        %v3841 = vsub.f32 1.0, %v3840
        %v3842 = vmul.f32 %v3839, %v3841
        %v3843 = vadd.f32 %v3839, %v3842
        %vm3844 = vweird.f32 %v3383
        %vm3845 = vweird.f32 %v3839
        %vm3846 = vmor %vm3844, %vm3845
        %v3847 = vsel %vm3846, %v3839, %v3843
        %v3848 = vand.u32 2147483647, %v3383
        %vm3849 = vcmp.eq.f32.partialorder %v3848, 8.507059e+37
        %v3850 = vand.u32 %v3383, 2147483648
        %v3851 = vor.u32 1.1754944e-38, %v3850
        %v3852 = vsel %vm3849, %v3851, %v3847
        %v3853 = vmul.f32 1.0, %v3852
        %v3854 = vrcp.pop %v3384
        %v3855 = vmul.f32 %v3384, %v3854
        %v3856 = vsub.f32 1.0, %v3855
        %v3857 = vmul.f32 %v3854, %v3856
        %v3858 = vadd.f32 %v3854, %v3857
        %vm3859 = vweird.f32 %v3384
        %vm3860 = vweird.f32 %v3854
        %vm3861 = vmor %vm3859, %vm3860
        %v3862 = vsel %vm3861, %v3854, %v3858
        %v3863 = vand.u32 2147483647, %v3384
        %vm3864 = vcmp.eq.f32.partialorder %v3863, 8.507059e+37
        %v3865 = vand.u32 %v3384, 2147483648
        %v3866 = vor.u32 1.1754944e-38, %v3865
        %v3867 = vsel %vm3864, %v3866, %v3862
        %v3868 = vmul.f32 1.0, %v3867
        %v3869 = vrcp.pop %v3385
        %v3870 = vmul.f32 %v3385, %v3869
        %v3871 = vsub.f32 1.0, %v3870
        %v3872 = vmul.f32 %v3869, %v3871
        %v3873 = vadd.f32 %v3869, %v3872
        %vm3874 = vweird.f32 %v3385
        %vm3875 = vweird.f32 %v3869
        %vm3876 = vmor %vm3874, %vm3875
        %v3877 = vsel %vm3876, %v3869, %v3873
        %v3878 = vand.u32 2147483647, %v3385
        %vm3879 = vcmp.eq.f32.partialorder %v3878, 8.507059e+37
        %v3880 = vand.u32 %v3385, 2147483648
        %v3881 = vor.u32 1.1754944e-38, %v3880
        %v3882 = vsel %vm3879, %v3881, %v3877
        %v3883 = vmul.f32 1.0, %v3882
        %v3884 = vrcp.pop %v3386
        %v3885 = vmul.f32 %v3386, %v3884
        %v3886 = vsub.f32 1.0, %v3885
        %v3887 = vmul.f32 %v3884, %v3886
        %v3888 = vadd.f32 %v3884, %v3887
        %vm3889 = vweird.f32 %v3386
        %vm3890 = vweird.f32 %v3884
        %vm3891 = vmor %vm3889, %vm3890
        %v3892 = vsel %vm3891, %v3884, %v3888
        %v3893 = vand.u32 2147483647, %v3386
        %vm3894 = vcmp.eq.f32.partialorder %v3893, 8.507059e+37
        %v3895 = vand.u32 %v3386, 2147483648
        %v3896 = vor.u32 1.1754944e-38, %v3895
        %v3897 = vsel %vm3894, %v3896, %v3892
        %v3898 = vmul.f32 1.0, %v3897
        %v3899 = vrcp.pop %v3387
        %v3900 = vmul.f32 %v3387, %v3899
        %v3901 = vsub.f32 1.0, %v3900
        %v3902 = vmul.f32 %v3899, %v3901
        %v3903 = vadd.f32 %v3899, %v3902
        %vm3904 = vweird.f32 %v3387
        %vm3905 = vweird.f32 %v3899
        %vm3906 = vmor %vm3904, %vm3905
        %v3907 = vsel %vm3906, %v3899, %v3903
        %v3908 = vand.u32 2147483647, %v3387
        %vm3909 = vcmp.eq.f32.partialorder %v3908, 8.507059e+37
        %v3910 = vand.u32 %v3387, 2147483648
        %v3911 = vor.u32 1.1754944e-38, %v3910
        %v3912 = vsel %vm3909, %v3911, %v3907
        %v3913 = vmul.f32 1.0, %v3912
        %v3914 = vrcp.pop %v3388
        %v3915 = vmul.f32 %v3388, %v3914
        %v3916 = vsub.f32 1.0, %v3915
        %v3917 = vmul.f32 %v3914, %v3916
        %v3918 = vadd.f32 %v3914, %v3917
        %vm3919 = vweird.f32 %v3388
        %vm3920 = vweird.f32 %v3914
        %vm3921 = vmor %vm3919, %vm3920
        %v3922 = vsel %vm3921, %v3914, %v3918
        %v3923 = vand.u32 2147483647, %v3388
        %vm3924 = vcmp.eq.f32.partialorder %v3923, 8.507059e+37
        %v3925 = vand.u32 %v3388, 2147483648
        %v3926 = vor.u32 1.1754944e-38, %v3925
        %v3927 = vsel %vm3924, %v3926, %v3922
        %v3928 = vmul.f32 1.0, %v3927
        %v3929 = vrcp.pop %v3389
        %v3930 = vmul.f32 %v3389, %v3929
        %v3931 = vsub.f32 1.0, %v3930
        %v3932 = vmul.f32 %v3929, %v3931
        %v3933 = vadd.f32 %v3929, %v3932
        %vm3934 = vweird.f32 %v3389
        %vm3935 = vweird.f32 %v3929
        %vm3936 = vmor %vm3934, %vm3935
        %v3937 = vsel %vm3936, %v3929, %v3933
        %v3938 = vand.u32 2147483647, %v3389
        %vm3939 = vcmp.eq.f32.partialorder %v3938, 8.507059e+37
        %v3940 = vand.u32 %v3389, 2147483648
        %v3941 = vor.u32 1.1754944e-38, %v3940
        %v3942 = vsel %vm3939, %v3941, %v3937
        %v3943 = vmul.f32 1.0, %v3942
        %v3944 = vrcp.pop %v3390
        %v3945 = vmul.f32 %v3390, %v3944
        %v3946 = vsub.f32 1.0, %v3945
        %v3947 = vmul.f32 %v3944, %v3946
        %v3948 = vadd.f32 %v3944, %v3947
        %vm3949 = vweird.f32 %v3390
        %vm3950 = vweird.f32 %v3944
        %vm3951 = vmor %vm3949, %vm3950
        %v3952 = vsel %vm3951, %v3944, %v3948
        %v3953 = vand.u32 2147483647, %v3390
        %vm3954 = vcmp.eq.f32.partialorder %v3953, 8.507059e+37
        %v3955 = vand.u32 %v3390, 2147483648
        %v3956 = vor.u32 1.1754944e-38, %v3955
        %v3957 = vsel %vm3954, %v3956, %v3952
        %v3958 = vmul.f32 1.0, %v3957
        %v3959 = vrcp.pop %v3391
        %v3960 = vmul.f32 %v3391, %v3959
        %v3961 = vsub.f32 1.0, %v3960
        %v3962 = vmul.f32 %v3959, %v3961
        %v3963 = vadd.f32 %v3959, %v3962
        %vm3964 = vweird.f32 %v3391
        %vm3965 = vweird.f32 %v3959
        %vm3966 = vmor %vm3964, %vm3965
        %v3967 = vsel %vm3966, %v3959, %v3963
        %v3968 = vand.u32 2147483647, %v3391
        %vm3969 = vcmp.eq.f32.partialorder %v3968, 8.507059e+37
        %v3970 = vand.u32 %v3391, 2147483648
        %v3971 = vor.u32 1.1754944e-38, %v3970
        %v3972 = vsel %vm3969, %v3971, %v3967
        %v3973 = vmul.f32 1.0, %v3972
        %v3974 = vrcp.pop %v3392
        %v3975 = vmul.f32 %v3392, %v3974
        %v3976 = vsub.f32 1.0, %v3975
        %v3977 = vmul.f32 %v3974, %v3976
        %v3978 = vadd.f32 %v3974, %v3977
        %vm3979 = vweird.f32 %v3392
        %vm3980 = vweird.f32 %v3974
        %vm3981 = vmor %vm3979, %vm3980
        %v3982 = vsel %vm3981, %v3974, %v3978
        %v3983 = vand.u32 2147483647, %v3392
        %vm3984 = vcmp.eq.f32.partialorder %v3983, 8.507059e+37
        %v3985 = vand.u32 %v3392, 2147483648
        %v3986 = vor.u32 1.1754944e-38, %v3985
        %v3987 = vsel %vm3984, %v3986, %v3982
        %v3988 = vmul.f32 1.0, %v3987
        %v3989 = vrcp.pop %v3393
        %v3990 = vmul.f32 %v3393, %v3989
        %v3991 = vsub.f32 1.0, %v3990
        %v3992 = vmul.f32 %v3989, %v3991
        %v3993 = vadd.f32 %v3989, %v3992
        %vm3994 = vweird.f32 %v3393
        %vm3995 = vweird.f32 %v3989
        %vm3996 = vmor %vm3994, %vm3995
        %v3997 = vsel %vm3996, %v3989, %v3993
        %v3998 = vand.u32 2147483647, %v3393
        %vm3999 = vcmp.eq.f32.partialorder %v3998, 8.507059e+37
        %v4000 = vand.u32 %v3393, 2147483648
        %v4001 = vor.u32 1.1754944e-38, %v4000
        %v4002 = vsel %vm3999, %v4001, %v3997
        %v4003 = vmul.f32 1.0, %v4002
        %v4004 = vrcp.pop %v3394
        %v4005 = vmul.f32 %v3394, %v4004
        %v4006 = vsub.f32 1.0, %v4005
        %v4007 = vmul.f32 %v4004, %v4006
        %v4008 = vadd.f32 %v4004, %v4007
        %vm4009 = vweird.f32 %v3394
        %vm4010 = vweird.f32 %v4004
        %vm4011 = vmor %vm4009, %vm4010
        %v4012 = vsel %vm4011, %v4004, %v4008
        %v4013 = vand.u32 2147483647, %v3394
        %vm4014 = vcmp.eq.f32.partialorder %v4013, 8.507059e+37
        %v4015 = vand.u32 %v3394, 2147483648
        %v4016 = vor.u32 1.1754944e-38, %v4015
        %v4017 = vsel %vm4014, %v4016, %v4012
        %v4018 = vmul.f32 1.0, %v4017
        %v4019 = vrcp.pop %v3395
        %v4020 = vmul.f32 %v3395, %v4019
        %v4021 = vsub.f32 1.0, %v4020
        %v4022 = vmul.f32 %v4019, %v4021
        %v4023 = vadd.f32 %v4019, %v4022
        %vm4024 = vweird.f32 %v3395
        %vm4025 = vweird.f32 %v4019
        %vm4026 = vmor %vm4024, %vm4025
        %v4027 = vsel %vm4026, %v4019, %v4023
        %v4028 = vand.u32 2147483647, %v3395
        %vm4029 = vcmp.eq.f32.partialorder %v4028, 8.507059e+37
        %v4030 = vand.u32 %v3395, 2147483648
        %v4031 = vor.u32 1.1754944e-38, %v4030
        %v4032 = vsel %vm4029, %v4031, %v4027
        %v4033 = vmul.f32 1.0, %v4032
        %v4034 = vrcp.pop %v3396
        %v4035 = vmul.f32 %v3396, %v4034
        %v4036 = vsub.f32 1.0, %v4035
        %v4037 = vmul.f32 %v4034, %v4036
        %v4038 = vadd.f32 %v4034, %v4037
        %vm4039 = vweird.f32 %v3396
        %vm4040 = vweird.f32 %v4034
        %vm4041 = vmor %vm4039, %vm4040
        %v4042 = vsel %vm4041, %v4034, %v4038
        %v4043 = vand.u32 2147483647, %v3396
        %vm4044 = vcmp.eq.f32.partialorder %v4043, 8.507059e+37
        %v4045 = vand.u32 %v3396, 2147483648
        %v4046 = vor.u32 1.1754944e-38, %v4045
        %v4047 = vsel %vm4044, %v4046, %v4042
        %v4048 = vmul.f32 1.0, %v4047
        %v4049 = vrcp.pop %v3397
        %v4050 = vmul.f32 %v3397, %v4049
        %v4051 = vsub.f32 1.0, %v4050
        %v4052 = vmul.f32 %v4049, %v4051
        %v4053 = vadd.f32 %v4049, %v4052
        %vm4054 = vweird.f32 %v3397
        %vm4055 = vweird.f32 %v4049
        %vm4056 = vmor %vm4054, %vm4055
        %v4057 = vsel %vm4056, %v4049, %v4053
        %v4058 = vand.u32 2147483647, %v3397
        %vm4059 = vcmp.eq.f32.partialorder %v4058, 8.507059e+37
        %v4060 = vand.u32 %v3397, 2147483648
        %v4061 = vor.u32 1.1754944e-38, %v4060
        %v4062 = vsel %vm4059, %v4061, %v4057
        %v4063 = vmul.f32 1.0, %v4062
        %v4064 = vrcp.pop %v3398
        %v4065 = vmul.f32 %v3398, %v4064
        %v4066 = vsub.f32 1.0, %v4065
        %v4067 = vmul.f32 %v4064, %v4066
        %v4068 = vadd.f32 %v4064, %v4067
        %vm4069 = vweird.f32 %v3398
        %vm4070 = vweird.f32 %v4064
        %vm4071 = vmor %vm4069, %vm4070
        %v4072 = vsel %vm4071, %v4064, %v4068
        %v4073 = vand.u32 2147483647, %v3398
        %vm4074 = vcmp.eq.f32.partialorder %v4073, 8.507059e+37
        %v4075 = vand.u32 %v3398, 2147483648
        %v4076 = vor.u32 1.1754944e-38, %v4075
        %v4077 = vsel %vm4074, %v4076, %v4072
        %v4078 = vmul.f32 1.0, %v4077
        %v4079 = vrcp.pop %v3399
        %v4080 = vmul.f32 %v3399, %v4079
        %v4081 = vsub.f32 1.0, %v4080
        %v4082 = vmul.f32 %v4079, %v4081
        %v4083 = vadd.f32 %v4079, %v4082
        %vm4084 = vweird.f32 %v3399
        %vm4085 = vweird.f32 %v4079
        %vm4086 = vmor %vm4084, %vm4085
        %v4087 = vsel %vm4086, %v4079, %v4083
        %v4088 = vand.u32 2147483647, %v3399
        %vm4089 = vcmp.eq.f32.partialorder %v4088, 8.507059e+37
        %v4090 = vand.u32 %v3399, 2147483648
        %v4091 = vor.u32 1.1754944e-38, %v4090
        %v4092 = vsel %vm4089, %v4091, %v4087
        %v4093 = vmul.f32 1.0, %v4092
        %v4094 = vrcp.pop %v3400
        %v4095 = vmul.f32 %v3400, %v4094
        %v4096 = vsub.f32 1.0, %v4095
        %v4097 = vmul.f32 %v4094, %v4096
        %v4098 = vadd.f32 %v4094, %v4097
        %vm4099 = vweird.f32 %v3400
        %vm4100 = vweird.f32 %v4094
        %vm4101 = vmor %vm4099, %vm4100
        %v4102 = vsel %vm4101, %v4094, %v4098
        %v4103 = vand.u32 2147483647, %v3400
        %vm4104 = vcmp.eq.f32.partialorder %v4103, 8.507059e+37
        %v4105 = vand.u32 %v3400, 2147483648
        %v4106 = vor.u32 1.1754944e-38, %v4105
        %v4107 = vsel %vm4104, %v4106, %v4102
        %v4108 = vmul.f32 1.0, %v4107
        %v4109 = vrcp.pop %v3401
        %v4110 = vmul.f32 %v3401, %v4109
        %v4111 = vsub.f32 1.0, %v4110
        %v4112 = vmul.f32 %v4109, %v4111
        %v4113 = vadd.f32 %v4109, %v4112
        %vm4114 = vweird.f32 %v3401
        %vm4115 = vweird.f32 %v4109
        %vm4116 = vmor %vm4114, %vm4115
        %v4117 = vsel %vm4116, %v4109, %v4113
        %v4118 = vand.u32 2147483647, %v3401
        %vm4119 = vcmp.eq.f32.partialorder %v4118, 8.507059e+37
        %v4120 = vand.u32 %v3401, 2147483648
        %v4121 = vor.u32 1.1754944e-38, %v4120
        %v4122 = vsel %vm4119, %v4121, %v4117
        %v4123 = vmul.f32 1.0, %v4122
        %v4124 = vrcp.pop %v3402
        %v4125 = vmul.f32 %v3402, %v4124
        %v4126 = vsub.f32 1.0, %v4125
        %v4127 = vmul.f32 %v4124, %v4126
        %v4128 = vadd.f32 %v4124, %v4127
        %vm4129 = vweird.f32 %v3402
        %vm4130 = vweird.f32 %v4124
        %vm4131 = vmor %vm4129, %vm4130
        %v4132 = vsel %vm4131, %v4124, %v4128
        %v4133 = vand.u32 2147483647, %v3402
        %vm4134 = vcmp.eq.f32.partialorder %v4133, 8.507059e+37
        %v4135 = vand.u32 %v3402, 2147483648
        %v4136 = vor.u32 1.1754944e-38, %v4135
        %v4137 = vsel %vm4134, %v4136, %v4132
        %v4138 = vmul.f32 1.0, %v4137
        %v4139 = vrcp.pop %v3403
        %v4140 = vmul.f32 %v3403, %v4139
        %v4141 = vsub.f32 1.0, %v4140
        %v4142 = vmul.f32 %v4139, %v4141
        %v4143 = vadd.f32 %v4139, %v4142
        %vm4144 = vweird.f32 %v3403
        %vm4145 = vweird.f32 %v4139
        %vm4146 = vmor %vm4144, %vm4145
        %v4147 = vsel %vm4146, %v4139, %v4143
        %v4148 = vand.u32 2147483647, %v3403
        %vm4149 = vcmp.eq.f32.partialorder %v4148, 8.507059e+37
        %v4150 = vand.u32 %v3403, 2147483648
        %v4151 = vor.u32 1.1754944e-38, %v4150
        %v4152 = vsel %vm4149, %v4151, %v4147
        %v4153 = vmul.f32 1.0, %v4152
        %v4154 = vrcp.pop %v3404
        %v4155 = vmul.f32 %v3404, %v4154
        %v4156 = vsub.f32 1.0, %v4155
        %v4157 = vmul.f32 %v4154, %v4156
        %v4158 = vadd.f32 %v4154, %v4157
        %vm4159 = vweird.f32 %v3404
        %vm4160 = vweird.f32 %v4154
        %vm4161 = vmor %vm4159, %vm4160
        %v4162 = vsel %vm4161, %v4154, %v4158
        %v4163 = vand.u32 2147483647, %v3404
        %vm4164 = vcmp.eq.f32.partialorder %v4163, 8.507059e+37
        %v4165 = vand.u32 %v3404, 2147483648
        %v4166 = vor.u32 1.1754944e-38, %v4165
        %v4167 = vsel %vm4164, %v4166, %v4162
        %v4168 = vmul.f32 1.0, %v4167
        %v4169 = vrcp.pop %v3405
        %v4170 = vmul.f32 %v3405, %v4169
        %v4171 = vsub.f32 1.0, %v4170
        %v4172 = vmul.f32 %v4169, %v4171
        %v4173 = vadd.f32 %v4169, %v4172
        %vm4174 = vweird.f32 %v3405
        %vm4175 = vweird.f32 %v4169
        %vm4176 = vmor %vm4174, %vm4175
        %v4177 = vsel %vm4176, %v4169, %v4173
        %v4178 = vand.u32 2147483647, %v3405
        %vm4179 = vcmp.eq.f32.partialorder %v4178, 8.507059e+37
        %v4180 = vand.u32 %v3405, 2147483648
        %v4181 = vor.u32 1.1754944e-38, %v4180
        %v4182 = vsel %vm4179, %v4181, %v4177
        %v4183 = vmul.f32 1.0, %v4182
        %v4184 = vrcp.pop %v3406
        %v4185 = vmul.f32 %v3406, %v4184
        %v4186 = vsub.f32 1.0, %v4185
        %v4187 = vmul.f32 %v4184, %v4186
        %v4188 = vadd.f32 %v4184, %v4187
        %vm4189 = vweird.f32 %v3406
        %vm4190 = vweird.f32 %v4184
        %vm4191 = vmor %vm4189, %vm4190
        %v4192 = vsel %vm4191, %v4184, %v4188
        %v4193 = vand.u32 2147483647, %v3406
        %vm4194 = vcmp.eq.f32.partialorder %v4193, 8.507059e+37
        %v4195 = vand.u32 %v3406, 2147483648
        %v4196 = vor.u32 1.1754944e-38, %v4195
        %v4197 = vsel %vm4194, %v4196, %v4192
        %v4198 = vmul.f32 1.0, %v4197
        %v4199 = vrcp.pop %v3407
        %v4200 = vmul.f32 %v3407, %v4199
        %v4201 = vsub.f32 1.0, %v4200
        %v4202 = vmul.f32 %v4199, %v4201
        %v4203 = vadd.f32 %v4199, %v4202
        %vm4204 = vweird.f32 %v3407
        %vm4205 = vweird.f32 %v4199
        %vm4206 = vmor %vm4204, %vm4205
        %v4207 = vsel %vm4206, %v4199, %v4203
        %v4208 = vand.u32 2147483647, %v3407
        %vm4209 = vcmp.eq.f32.partialorder %v4208, 8.507059e+37
        %v4210 = vand.u32 %v3407, 2147483648
        %v4211 = vor.u32 1.1754944e-38, %v4210
        %v4212 = vsel %vm4209, %v4211, %v4207
        %v4213 = vmul.f32 1.0, %v4212
        %v4214 = vrcp.pop %v3408
        %v4215 = vmul.f32 %v3408, %v4214
        %v4216 = vsub.f32 1.0, %v4215
        %v4217 = vmul.f32 %v4214, %v4216
        %v4218 = vadd.f32 %v4214, %v4217
        %vm4219 = vweird.f32 %v3408
        %vm4220 = vweird.f32 %v4214
        %vm4221 = vmor %vm4219, %vm4220
        %v4222 = vsel %vm4221, %v4214, %v4218
        %v4223 = vand.u32 2147483647, %v3408
        %vm4224 = vcmp.eq.f32.partialorder %v4223, 8.507059e+37
        %v4225 = vand.u32 %v3408, 2147483648
        %v4226 = vor.u32 1.1754944e-38, %v4225
        %v4227 = vsel %vm4224, %v4226, %v4222
        %v4228 = vmul.f32 1.0, %v4227
        %v4229 = vrcp.pop %v3409
        %v4230 = vmul.f32 %v3409, %v4229
        %v4231 = vsub.f32 1.0, %v4230
        %v4232 = vmul.f32 %v4229, %v4231
        %v4233 = vadd.f32 %v4229, %v4232
        %vm4234 = vweird.f32 %v3409
        %vm4235 = vweird.f32 %v4229
        %vm4236 = vmor %vm4234, %vm4235
        %v4237 = vsel %vm4236, %v4229, %v4233
        %v4238 = vand.u32 2147483647, %v3409
        %vm4239 = vcmp.eq.f32.partialorder %v4238, 8.507059e+37
        %v4240 = vand.u32 %v3409, 2147483648
        %v4241 = vor.u32 1.1754944e-38, %v4240
        %v4242 = vsel %vm4239, %v4241, %v4237
        %v4243 = vmul.f32 1.0, %v4242
        %v4244 = vrcp.pop %v3410
        %v4245 = vmul.f32 %v3410, %v4244
        %v4246 = vsub.f32 1.0, %v4245
        %v4247 = vmul.f32 %v4244, %v4246
        %v4248 = vadd.f32 %v4244, %v4247
        %vm4249 = vweird.f32 %v3410
        %vm4250 = vweird.f32 %v4244
        %vm4251 = vmor %vm4249, %vm4250
        %v4252 = vsel %vm4251, %v4244, %v4248
        %v4253 = vand.u32 2147483647, %v3410
        %vm4254 = vcmp.eq.f32.partialorder %v4253, 8.507059e+37
        %v4255 = vand.u32 %v3410, 2147483648
        %v4256 = vor.u32 1.1754944e-38, %v4255
        %v4257 = vsel %vm4254, %v4256, %v4252
        %v4258 = vmul.f32 1.0, %v4257
        %v4259 = vrcp.pop %v3411
        %v4260 = vmul.f32 %v3411, %v4259
        %v4261 = vsub.f32 1.0, %v4260
        %v4262 = vmul.f32 %v4259, %v4261
        %v4263 = vadd.f32 %v4259, %v4262
        %vm4264 = vweird.f32 %v3411
        %vm4265 = vweird.f32 %v4259
        %vm4266 = vmor %vm4264, %vm4265
        %v4267 = vsel %vm4266, %v4259, %v4263
        %v4268 = vand.u32 2147483647, %v3411
        %vm4269 = vcmp.eq.f32.partialorder %v4268, 8.507059e+37
        %v4270 = vand.u32 %v3411, 2147483648
        %v4271 = vor.u32 1.1754944e-38, %v4270
        %v4272 = vsel %vm4269, %v4271, %v4267
        %v4273 = vmul.f32 1.0, %v4272
        %v4274 = vrcp.pop %v3412
        %v4275 = vmul.f32 %v3412, %v4274
        %v4276 = vsub.f32 1.0, %v4275
        %v4277 = vmul.f32 %v4274, %v4276
        %v4278 = vadd.f32 %v4274, %v4277
        %vm4279 = vweird.f32 %v3412
        %vm4280 = vweird.f32 %v4274
        %vm4281 = vmor %vm4279, %vm4280
        %v4282 = vsel %vm4281, %v4274, %v4278
        %v4283 = vand.u32 2147483647, %v3412
        %vm4284 = vcmp.eq.f32.partialorder %v4283, 8.507059e+37
        %v4285 = vand.u32 %v3412, 2147483648
        %v4286 = vor.u32 1.1754944e-38, %v4285
        %v4287 = vsel %vm4284, %v4286, %v4282
        %v4288 = vmul.f32 1.0, %v4287
        %v4289 = vrcp.pop %v3413
        %v4290 = vmul.f32 %v3413, %v4289
        %v4291 = vsub.f32 1.0, %v4290
        %v4292 = vmul.f32 %v4289, %v4291
        %v4293 = vadd.f32 %v4289, %v4292
        %vm4294 = vweird.f32 %v3413
        %vm4295 = vweird.f32 %v4289
        %vm4296 = vmor %vm4294, %vm4295
        %v4297 = vsel %vm4296, %v4289, %v4293
        %v4298 = vand.u32 2147483647, %v3413
        %vm4299 = vcmp.eq.f32.partialorder %v4298, 8.507059e+37
        %v4300 = vand.u32 %v3413, 2147483648
        %v4301 = vor.u32 1.1754944e-38, %v4300
        %v4302 = vsel %vm4299, %v4301, %v4297
        %v4303 = vmul.f32 1.0, %v4302
        %v4304 = vrcp.pop %v3414
        %v4305 = vmul.f32 %v3414, %v4304
        %v4306 = vsub.f32 1.0, %v4305
        %v4307 = vmul.f32 %v4304, %v4306
        %v4308 = vadd.f32 %v4304, %v4307
        %vm4309 = vweird.f32 %v3414
        %vm4310 = vweird.f32 %v4304
        %vm4311 = vmor %vm4309, %vm4310
        %v4312 = vsel %vm4311, %v4304, %v4308
        %v4313 = vand.u32 2147483647, %v3414
        %vm4314 = vcmp.eq.f32.partialorder %v4313, 8.507059e+37
        %v4315 = vand.u32 %v3414, 2147483648
        %v4316 = vor.u32 1.1754944e-38, %v4315
        %v4317 = vsel %vm4314, %v4316, %v4312
        %v4318 = vmul.f32 1.0, %v4317
        %v4319 = vrcp.pop %v3415
        %v4320 = vmul.f32 %v3415, %v4319
        %v4321 = vsub.f32 1.0, %v4320
        %v4322 = vmul.f32 %v4319, %v4321
        %v4323 = vadd.f32 %v4319, %v4322
        %vm4324 = vweird.f32 %v3415
        %vm4325 = vweird.f32 %v4319
        %vm4326 = vmor %vm4324, %vm4325
        %v4327 = vsel %vm4326, %v4319, %v4323
        %v4328 = vand.u32 2147483647, %v3415
        %vm4329 = vcmp.eq.f32.partialorder %v4328, 8.507059e+37
        %v4330 = vand.u32 %v3415, 2147483648
        %v4331 = vor.u32 1.1754944e-38, %v4330
        %v4332 = vsel %vm4329, %v4331, %v4327
        %v4333 = vmul.f32 1.0, %v4332
        %v4334 = vrcp.pop %v3416
        %v4335 = vmul.f32 %v3416, %v4334
        %v4336 = vsub.f32 1.0, %v4335
        %v4337 = vmul.f32 %v4334, %v4336
        %v4338 = vadd.f32 %v4334, %v4337
        %vm4339 = vweird.f32 %v3416
        %vm4340 = vweird.f32 %v4334
        %vm4341 = vmor %vm4339, %vm4340
        %v4342 = vsel %vm4341, %v4334, %v4338
        %v4343 = vand.u32 2147483647, %v3416
        %vm4344 = vcmp.eq.f32.partialorder %v4343, 8.507059e+37
        %v4345 = vand.u32 %v3416, 2147483648
        %v4346 = vor.u32 1.1754944e-38, %v4345
        %v4347 = vsel %vm4344, %v4346, %v4342
        %v4348 = vmul.f32 1.0, %v4347
        %v4349 = vrcp.pop %v3417
        %v4350 = vmul.f32 %v3417, %v4349
        %v4351 = vsub.f32 1.0, %v4350
        %v4352 = vmul.f32 %v4349, %v4351
        %v4353 = vadd.f32 %v4349, %v4352
        %vm4354 = vweird.f32 %v3417
        %vm4355 = vweird.f32 %v4349
        %vm4356 = vmor %vm4354, %vm4355
        %v4357 = vsel %vm4356, %v4349, %v4353
        %v4358 = vand.u32 2147483647, %v3417
        %vm4359 = vcmp.eq.f32.partialorder %v4358, 8.507059e+37
        %v4360 = vand.u32 %v3417, 2147483648
        %v4361 = vor.u32 1.1754944e-38, %v4360
        %v4362 = vsel %vm4359, %v4361, %v4357
        %v4363 = vmul.f32 1.0, %v4362
        %v4364 = vrcp.pop %v3418
        %v4365 = vmul.f32 %v3418, %v4364
        %v4366 = vsub.f32 1.0, %v4365
        %v4367 = vmul.f32 %v4364, %v4366
        %v4368 = vadd.f32 %v4364, %v4367
        %vm4369 = vweird.f32 %v3418
        %vm4370 = vweird.f32 %v4364
        %vm4371 = vmor %vm4369, %vm4370
        %v4372 = vsel %vm4371, %v4364, %v4368
        %v4373 = vand.u32 2147483647, %v3418
        %vm4374 = vcmp.eq.f32.partialorder %v4373, 8.507059e+37
        %v4375 = vand.u32 %v3418, 2147483648
        %v4376 = vor.u32 1.1754944e-38, %v4375
        %v4377 = vsel %vm4374, %v4376, %v4372
        %v4378 = vmul.f32 1.0, %v4377
        %v4379 = vmul.f32 %v3099, %v3433
        %v4380 = vmul.f32 %v3100, %v3448
        %v4381 = vmul.f32 %v3101, %v3463
        %v4382 = vmul.f32 %v3102, %v3478
        %v4383 = vmul.f32 %v3103, %v3493
        %v4384 = vmul.f32 %v3104, %v3508
        %v4385 = vmul.f32 %v3105, %v3523
        %v4386 = vmul.f32 %v3106, %v3538
        %v4387 = vmul.f32 %v3107, %v3553
        %v4388 = vmul.f32 %v3108, %v3568
        %v4389 = vmul.f32 %v3109, %v3583
        %v4390 = vmul.f32 %v3110, %v3598
        %v4391 = vmul.f32 %v3111, %v3613
        %v4392 = vmul.f32 %v3112, %v3628
        %v4393 = vmul.f32 %v3113, %v3643
        %v4394 = vmul.f32 %v3114, %v3658
        %v4395 = vmul.f32 %v3115, %v3673
        %v4396 = vmul.f32 %v3116, %v3688
        %v4397 = vmul.f32 %v3117, %v3703
        %v4398 = vmul.f32 %v3118, %v3718
        %v4399 = vmul.f32 %v3119, %v3733
        %v4400 = vmul.f32 %v3120, %v3748
        %v4401 = vmul.f32 %v3121, %v3763
        %v4402 = vmul.f32 %v3122, %v3778
        %v4403 = vmul.f32 %v3123, %v3793
        %v4404 = vmul.f32 %v3124, %v3808
        %v4405 = vmul.f32 %v3125, %v3823
        %v4406 = vmul.f32 %v3126, %v3838
        %v4407 = vmul.f32 %v3127, %v3853
        %v4408 = vmul.f32 %v3128, %v3868
        %v4409 = vmul.f32 %v3129, %v3883
        %v4410 = vmul.f32 %v3130, %v3898
        %v4411 = vmul.f32 %v3131, %v3913
        %v4412 = vmul.f32 %v3132, %v3928
        %v4413 = vmul.f32 %v3133, %v3943
        %v4414 = vmul.f32 %v3134, %v3958
        %v4415 = vmul.f32 %v3135, %v3973
        %v4416 = vmul.f32 %v3136, %v3988
        %v4417 = vmul.f32 %v3137, %v4003
        %v4418 = vmul.f32 %v3138, %v4018
        %v4419 = vmul.f32 %v3139, %v4033
        %v4420 = vmul.f32 %v3140, %v4048
        %v4421 = vmul.f32 %v3141, %v4063
        %v4422 = vmul.f32 %v3142, %v4078
        %v4423 = vmul.f32 %v3143, %v4093
        %v4424 = vmul.f32 %v3144, %v4108
        %v4425 = vmul.f32 %v3145, %v4123
        %v4426 = vmul.f32 %v3146, %v4138
        %v4427 = vmul.f32 %v3147, %v4153
        %v4428 = vmul.f32 %v3148, %v4168
        %v4429 = vmul.f32 %v3149, %v4183
        %v4430 = vmul.f32 %v3150, %v4198
        %v4431 = vmul.f32 %v3151, %v4213
        %v4432 = vmul.f32 %v3152, %v4228
        %v4433 = vmul.f32 %v3153, %v4243
        %v4434 = vmul.f32 %v3154, %v4258
        %v4435 = vmul.f32 %v3155, %v4273
        %v4436 = vmul.f32 %v3156, %v4288
        %v4437 = vmul.f32 %v3157, %v4303
        %v4438 = vmul.f32 %v3158, %v4318
        %v4439 = vmul.f32 %v3159, %v4333
        %v4440 = vmul.f32 %v3160, %v4348
        %v4441 = vmul.f32 %v3161, %v4363
        %v4442 = vmul.f32 %v3162, %v4378
        %v4443 = vld [vmem:[%s10] sm:$0x1]
        %v4444 = vld [vmem:[#allocation4] sm:$0x1]
        %4446 = vset.pattern.permute.xlu0 0
        %4447 = vperm.xlu0 %4446, %v4444
        %v4448 = vpop.permute.xlu0 %4447
        %v4450 = vperm.slane %v4448, 0
        %4451 = vmatpush.xpose.msra.mxu0 %v4394
        %4452 = vmatpush.xpose.msra.mxu0 %v4393
        %4453 = vmatpush.xpose.msra.mxu0 %v4392
        %4454 = vmatpush.xpose.msra.mxu0 %v4391
        %4455 = vmatpush.xpose.msra.mxu0 %v4390
        %4456 = vmatpush.xpose.msra.mxu0 %v4389
        %4457 = vmatpush.xpose.msra.mxu0 %v4388
        %4458 = vmatpush.xpose.msra.mxu0 %v4387
        %4459 = vmatpush.xpose.msra.mxu0 %v4386
        %4460 = vmatpush.xpose.msra.mxu0 %v4385
        %4461 = vmatpush.xpose.msra.mxu0 %v4384
        %4462 = vmatpush.xpose.msra.mxu0 %v4383
        %4463 = vmatpush.xpose.msra.mxu0 %v4382
        %4464 = vmatpush.xpose.msra.mxu0 %v4381
        %4465 = vmatpush.xpose.msra.mxu0 %v4380
        %4466 = vmatpush.xpose.msra.mxu0 %v4379
        %4467 = vmatmul.f32.gmra.mxu0 %v4443
        %v4468 = vpop.f32.mrf.mxu0
        %v4469 = vadd.f32 %v4450, %v4468
        %4470 = vdwg.mxu0
        %4471 = vmatpush.xpose.msra.mxu0 %v4410
        %4472 = vmatpush.xpose.msra.mxu0 %v4409
        %4473 = vmatpush.xpose.msra.mxu0 %v4408
        %4474 = vmatpush.xpose.msra.mxu0 %v4407
        %4475 = vmatpush.xpose.msra.mxu0 %v4406
        %4476 = vmatpush.xpose.msra.mxu0 %v4405
        %4477 = vmatpush.xpose.msra.mxu0 %v4404
        %4478 = vmatpush.xpose.msra.mxu0 %v4403
        %4479 = vmatpush.xpose.msra.mxu0 %v4402
        %4480 = vmatpush.xpose.msra.mxu0 %v4401
        %4481 = vmatpush.xpose.msra.mxu0 %v4400
        %4482 = vmatpush.xpose.msra.mxu0 %v4399
        %4483 = vmatpush.xpose.msra.mxu0 %v4398
        %4484 = vmatpush.xpose.msra.mxu0 %v4397
        %4485 = vmatpush.xpose.msra.mxu0 %v4396
        %4486 = vmatpush.xpose.msra.mxu0 %v4395
        %4487 = vmatmul.f32.gmra.mxu0 %v4443
        %v4488 = vpop.f32.mrf.mxu0
        %v4489 = vadd.f32 %v4450, %v4488
        %4490 = vdwg.mxu0
        %4491 = vmatpush.xpose.msra.mxu0 %v4426
        %4492 = vmatpush.xpose.msra.mxu0 %v4425
        %4493 = vmatpush.xpose.msra.mxu0 %v4424
        %4494 = vmatpush.xpose.msra.mxu0 %v4423
        %4495 = vmatpush.xpose.msra.mxu0 %v4422
        %4496 = vmatpush.xpose.msra.mxu0 %v4421
        %4497 = vmatpush.xpose.msra.mxu0 %v4420
        %4498 = vmatpush.xpose.msra.mxu0 %v4419
        %4499 = vmatpush.xpose.msra.mxu0 %v4418
        %4500 = vmatpush.xpose.msra.mxu0 %v4417
        %4501 = vmatpush.xpose.msra.mxu0 %v4416
        %4502 = vmatpush.xpose.msra.mxu0 %v4415
        %4503 = vmatpush.xpose.msra.mxu0 %v4414
        %4504 = vmatpush.xpose.msra.mxu0 %v4413
        %4505 = vmatpush.xpose.msra.mxu0 %v4412
        %4506 = vmatpush.xpose.msra.mxu0 %v4411
        %4507 = vmatmul.f32.gmra.mxu0 %v4443
        %v4508 = vpop.f32.mrf.mxu0
        %v4509 = vadd.f32 %v4450, %v4508
        %4510 = vdwg.mxu0
        %4511 = vmatpush.xpose.msra.mxu0 %v4442
        %4512 = vmatpush.xpose.msra.mxu0 %v4441
        %4513 = vmatpush.xpose.msra.mxu0 %v4440
        %4514 = vmatpush.xpose.msra.mxu0 %v4439
        %4515 = vmatpush.xpose.msra.mxu0 %v4438
        %4516 = vmatpush.xpose.msra.mxu0 %v4437
        %4517 = vmatpush.xpose.msra.mxu0 %v4436
        %4518 = vmatpush.xpose.msra.mxu0 %v4435
        %4519 = vmatpush.xpose.msra.mxu0 %v4434
        %4520 = vmatpush.xpose.msra.mxu0 %v4433
        %4521 = vmatpush.xpose.msra.mxu0 %v4432
        %4522 = vmatpush.xpose.msra.mxu0 %v4431
        %4523 = vmatpush.xpose.msra.mxu0 %v4430
        %4524 = vmatpush.xpose.msra.mxu0 %v4429
        %4525 = vmatpush.xpose.msra.mxu0 %v4428
        %4526 = vmatpush.xpose.msra.mxu0 %v4427
        %4527 = vmatmul.f32.gmra.mxu0 %v4443
        %v4528 = vpop.f32.mrf.mxu0
        %v4529 = vadd.f32 %v4450, %v4528
        %4530 = vdwg.mxu0
        %s4531 = sadd.s32 %s41, %s42
        %s4532 = smul.u32 %s4531, 512
        %v4533 = vlaneseq
        %v4534 = vand.u32 %v4533, 127
        %v4535 = vadd.s32 %v4534, 128
        %v4536 = vadd.s32 %v4534, 256
        %v4537 = vadd.s32 %v4534, 384
        %v4538 = vstv %s4532
        %v4539 = vadd.s32 %v4538, %v4534
        %v4540 = vadd.s32 %v4538, %v4535
        %v4541 = vadd.s32 %v4538, %v4536
        %v4542 = vadd.s32 %v4538, %v4537
        %s4543 = sld [smem:[#allocation3]]
        %v4544 = vstv %s4543
        %vm4545 = vcmp.lt.s32.totalorder %v4539, %v4544
        %vm4546 = vcmp.lt.s32.totalorder %v4540, %v4544
        %vm4547 = vcmp.lt.s32.totalorder %v4541, %v4544
        %vm4548 = vcmp.lt.s32.totalorder %v4542, %v4544
        %v4549 = vsel %vm4545, %v4469, -1e+30
        %v4550 = vsel %vm4546, %v4489, -1e+30
        %v4551 = vsel %vm4547, %v4509, -1e+30
        %v4552 = vsel %vm4548, %v4529, -1e+30
        %v4557 = vrot.slane %v4550, 7
        %v4558 = vrot.slane %v4551, 6
        %v4559 = vrot.slane %v4552, 5
        %vm4560 = vcmask 1040384
        %v4561 = vsel %vm4560, %v4549, %v4557
        %vm4562 = vcmask 1042434
        %v4563 = vsel %vm4562, %v4558, %v4559
        %vm4564 = vcmask 1041408
        %v4565 = vsel %vm4564, %v4561, %v4563
        %v4567 = vlaneseq
        %vm4568 = vcmp.ge.s32.totalorder %v4567, 0
        %vm4569 = vcmp.lt.s32.totalorder %v4567, 512
        %vm4570 = vmand %vm4568, %vm4569
        %4571 = vst.msk [vmem:[%s524] sm:$0xf] %vm4570, %v4565
        %v4572 = vld [vmem:[%s554] sm:$0x1]
        %v4573 = vsel %vm4560, %v4549, -inf
        %v4574 = vsel %vm4560, %v4550, -inf
        %v4575 = vsel %vm4560, %v4551, -inf
        %v4576 = vsel %vm4560, %v4552, -inf
        %v4577 = vmax.f32 %v4573, %v4574
        %v4578 = vmax.f32 %v4575, %v4576
        %v4579 = vmax.f32 %v4577, %v4578
        %4580 = vmax.xlane.f32.xlu0 %v4579
        %v4581 = vpop.xlane.xlu0 %4580
        %v4582 = vmax.f32 %v4572, %v4581
        %v4583 = vsub.f32 %v4572, %v4582
        %v4584 = vmul.f32 %v4583, 1.442695
        %v4585 = vpow.pop %v4584
        %4587 = vset.pattern.permute.xlu0 0
        %4588 = vperm.xlu0 %4587, %v4582
        %v4589 = vpop.permute.xlu0 %4588
        %v4591 = vperm.slane %v4589, 0
        %v4592 = vsub.f32 %v4549, %v4591
        %v4593 = vsub.f32 %v4550, %v4591
        %v4594 = vsub.f32 %v4551, %v4591
        %v4595 = vsub.f32 %v4552, %v4591
        %v4596 = vmul.f32 %v4592, 1.442695
        %v4597 = vpow.pop %v4596
        %v4598 = vmul.f32 %v4593, 1.442695
        %v4599 = vpow.pop %v4598
        %v4600 = vmul.f32 %v4594, 1.442695
        %v4601 = vpow.pop %v4600
        %v4602 = vmul.f32 %v4595, 1.442695
        %v4603 = vpow.pop %v4602
        %v4604 = vld [vmem:[%s557] sm:$0x1]
        %v4605 = vmul.f32 %v4585, %v4604
        %v4606 = vsel %vm4560, %v4597, 0.0
        %v4607 = vsel %vm4560, %v4599, 0.0
        %v4608 = vadd.f32 %v4606, %v4607
        %v4609 = vsel %vm4560, %v4601, 0.0
        %v4610 = vadd.f32 %v4608, %v4609
        %v4611 = vsel %vm4560, %v4603, 0.0
        %v4612 = vadd.f32 %v4610, %v4611
        %4613 = vadd.xlane.f32.xlu0 %v4612
        %v4614 = vpop.xlane.xlu0 %4613
        %v4615 = vadd.f32 %v4605, %v4614
        %vm4616 = vcmask 0
        %4617 = vst.msk [vmem:[%s557] sm:$0x1] %vm4616, %v4615
        %v4618 = vld [vmem:[%s540] sm:$0x1]
        %4620 = vset.pattern.permute.xlu0 0
        %4621 = vperm.xlu0 %4620, %v4585
        %v4622 = vpop.permute.xlu0 %4621
        %v4624 = vperm.slane %v4622, 0
        %v4625 = vmul.f32 %v4624, %v4618
        %v4626 = vpack.c.bf16 %v4597, %v4597
        %v4627 = vpack.c.bf16 %v4599, %v4599
        %v4628 = vpack.c.bf16 %v4601, %v4601
        %v4629 = vpack.c.bf16 %v4603, %v4603
        %4630 = vmatpush.bf16.msra.mxu0 %v2624
        %4631 = vmatpush.bf16.msra.mxu0 %v2623
        %4632 = vmatpush.bf16.msra.mxu0 %v2622
        %4633 = vmatpush.bf16.msra.mxu0 %v2621
        %4634 = vmatpush.bf16.msra.mxu0 %v2620
        %4635 = vmatpush.bf16.msra.mxu0 %v2619
        %4636 = vmatpush.bf16.msra.mxu0 %v2618
        %4637 = vmatpush.bf16.msra.mxu0 %v2617
        %4638 = vmatmul.bf16.gmra.mxu0 %v4626
        %v4639 = vpop.f32.mrf.mxu0
        %v4640 = vadd.f32 0.0, %v4639
        %v4641 = vpop.f32.mrf.mxu0
        %4642 = vdwg.mxu0
        %4643 = vmatpush.bf16.msra.mxu0 %v2632
        %4644 = vmatpush.bf16.msra.mxu0 %v2631
        %4645 = vmatpush.bf16.msra.mxu0 %v2630
        %4646 = vmatpush.bf16.msra.mxu0 %v2629
        %4647 = vmatpush.bf16.msra.mxu0 %v2628
        %4648 = vmatpush.bf16.msra.mxu0 %v2627
        %4649 = vmatpush.bf16.msra.mxu0 %v2626
        %4650 = vmatpush.bf16.msra.mxu0 %v2625
        %4651 = vmatmul.bf16.gmra.mxu0 %v4627
        %v4652 = vpop.f32.mrf.mxu0
        %v4653 = vadd.f32 %v4640, %v4652
        %v4654 = vpop.f32.mrf.mxu0
        %4655 = vdwg.mxu0
        %4656 = vmatpush.bf16.msra.mxu0 %v2640
        %4657 = vmatpush.bf16.msra.mxu0 %v2639
        %4658 = vmatpush.bf16.msra.mxu0 %v2638
        %4659 = vmatpush.bf16.msra.mxu0 %v2637
        %4660 = vmatpush.bf16.msra.mxu0 %v2636
        %4661 = vmatpush.bf16.msra.mxu0 %v2635
        %4662 = vmatpush.bf16.msra.mxu0 %v2634
        %4663 = vmatpush.bf16.msra.mxu0 %v2633
        %4664 = vmatmul.bf16.gmra.mxu0 %v4628
        %v4665 = vpop.f32.mrf.mxu0
        %v4666 = vadd.f32 %v4653, %v4665
        %v4667 = vpop.f32.mrf.mxu0
        %4668 = vdwg.mxu0
        %4669 = vmatpush.bf16.msra.mxu0 %v2648
        %4670 = vmatpush.bf16.msra.mxu0 %v2647
        %4671 = vmatpush.bf16.msra.mxu0 %v2646
        %4672 = vmatpush.bf16.msra.mxu0 %v2645
        %4673 = vmatpush.bf16.msra.mxu0 %v2644
        %4674 = vmatpush.bf16.msra.mxu0 %v2643
        %4675 = vmatpush.bf16.msra.mxu0 %v2642
        %4676 = vmatpush.bf16.msra.mxu0 %v2641
        %4677 = vmatmul.bf16.gmra.mxu0 %v4629
        %v4678 = vpop.f32.mrf.mxu0
        %v4679 = vadd.f32 %v4666, %v4678
        %v4680 = vpop.f32.mrf.mxu0
        %4681 = vdwg.mxu0
        %v4682 = vadd.f32 %v4625, %v4679
        %4683 = vst [vmem:[%s540] sm:$0x1] %v4682
        %4684 = vst.msk [vmem:[%s554] sm:$0x1] %vm4616, %v4582
        %s4685 = sand.u32 %s297, 1
        %s4686 = scalar_lea.sflag [#allocation6], %s4685
        %s4687 = sand.u32 %s297, 1
        %s4688 = smul.addr %s4687, 256
        %s4689 = scalar_lea.vmem [#allocation5], %s4688
        %s4690 = sand.u32 %s37, 1
        %s4691 = scalar_lea.sflag [#allocation8], %s4690
        %s4692 = sand.u32 %s325, 1
        %s4693 = smul.addr %s4692, 4
        %s4694 = scalar_lea.vmem [#allocation7], %s4693
        %p4695 = scmp.lt.s32.totalorder %s41, 1
        %s4696 = scalar_select %p4695, %s41, 1
        %s4697 = scalar_lea.vmem %s14, %s4696
        %p4698 = scmp.lt.s32.totalorder %s41, 1
        %s4699 = scalar_select %p4698, %s41, 1
        %s4700 = scalar_lea.vmem %s15, %s4699
        %s4701 = sand.u32 %s37, 1
        %s4702 = scalar_lea.sflag [#allocation8], %s4701
        %s4703 = sand.u32 %s403, 1
        %s4704 = scalar_lea.vmem [#allocation9], %s4703
        // Predicated region
        $region69: #{tpu_custom_call.1} parent=63 // pred_check
          %p4705 = pneg %p307
        $region70: #{tpu_custom_call.1} parent=63 // pred_check_branch
          %4707 = sbr.rel (%p4705) target = $region72
        $region71: #{tpu_custom_call.1} parent=63 // pred_region
          %s4708 = sadd.s32 %s41, %s42
          %s4709 = smul.u32 64, %s4708
          %4711 = vsyncadd %s4686, 0
          %s4712 = smul.addr %s4709, 4
          %s4713 = scalar_lea.hbm %s12, %s4712
          %s4714 = sshll.u32 %s4689, 4
          %s4715 = int_to_ptr.vmem [resolvable:$true] %s4714
          %s4716 = sshll.u32 %s4713, 4
          %s4717 = int_to_ptr.hbm [resolvable:$true] %s4716
          %4722 = dma.vmem_to_hbm [thread:$0]  %s4715, 4096, %s4717, %s4686, 64, 64, 4
        $region72: #{tpu_custom_call.1} parent=63 // pred_fallthru
          _
        // Predicated region
        $region73: #{tpu_custom_call.1} parent=63 // pred_check
          %p4723 = pneg %p335
        $region74: #{tpu_custom_call.1} parent=63 // pred_check_branch
          %4725 = sbr.rel (%p4723) target = $region76
        $region75: #{tpu_custom_call.1} parent=63 // pred_region
          %s4726 = sadd.s32 %s41, %s42
          %4728 = vsyncadd %s4691, 0
          %s4729 = smul.addr %s4726, 4
          %s4730 = scalar_lea.hbm %s13, %s4729
          %s4732 = sshll.u32 %s4694, 4
          %s4733 = int_to_ptr.vmem [resolvable:$true] %s4732
          %s4734 = sshll.u32 %s4730, 4
          %s4735 = int_to_ptr.hbm [resolvable:$true] %s4734
          %4737 = dma.vmem_to_hbm [thread:$0]  %s4733, 64, %s4735, %s4691
        $region76: #{tpu_custom_call.1} parent=63 // pred_fallthru
          _
        // Predicated region
        $region77: #{tpu_custom_call.1} parent=63 // pred_check
          %p4738 = pneg %p361
        $region78: #{tpu_custom_call.1} parent=63 // pred_check_branch
          %4740 = sbr.rel (%p4738) target = $region80
        $region79: #{tpu_custom_call.1} parent=63 // pred_region
          _
        $region80: #{tpu_custom_call.1} parent=63 // pred_fallthru
          _
        // Predicated region
        $region81: #{tpu_custom_call.1} parent=63 // pred_check
          %p4741 = pneg %p387
        $region82: #{tpu_custom_call.1} parent=63 // pred_check_branch
          %4743 = sbr.rel (%p4741) target = $region84
        $region83: #{tpu_custom_call.1} parent=63 // pred_region
          _
        $region84: #{tpu_custom_call.1} parent=63 // pred_fallthru
          _
        // Predicated region
        $region85: #{tpu_custom_call.1} parent=63 // pred_check
          %p4744 = pneg %p413
        $region86: #{tpu_custom_call.1} parent=63 // pred_check_branch
          %4746 = sbr.rel (%p4744) target = $region88
        $region87: #{tpu_custom_call.1} parent=63 // pred_region
          %4748 = vsyncadd %s4702, 0
          %s4749 = scalar_lea.hbm %s16, %s41
          %s4751 = sshll.u32 %s4704, 4
          %s4752 = int_to_ptr.vmem [resolvable:$true] %s4751
          %s4753 = sshll.u32 %s4749, 4
          %s4754 = int_to_ptr.hbm [resolvable:$true] %s4753
          %4756 = dma.vmem_to_hbm [thread:$0]  %s4752, 16, %s4754, %s4702
        $region88: #{tpu_custom_call.1} parent=63 // pred_fallthru
          _
      $region64: #{tpu_custom_call.1} parent=5 // pred_fallthru
        _
      %p4757 = scmp.le.s32.totalorder 2, %s32
      // Predicated region
      $region89: #{tpu_custom_call.1} parent=5 // pred_check
        %p4758 = pneg %p4757
      $region90: #{tpu_custom_call.1} parent=5 // pred_check_branch
        %4760 = sbr.rel (%p4758) target = $region92
      $region91: #{tpu_custom_call.1} parent=5 // pred_region
        %s4761 = ssub.s32 %s32, 2
        // Predicated region
        $region93: #{tpu_custom_call.1} parent=91 // pred_check
          %p4762 = pneg %p313
        $region94: #{tpu_custom_call.1} parent=91 // pred_check_branch
          %4764 = sbr.rel (%p4762) target = $region96
        $region95: #{tpu_custom_call.1} parent=91 // pred_region
          %s4765 = sand.u32 %s298, 1
          %s4766 = scalar_lea.sflag [#allocation6], %s4765
          %s4767 = sand.u32 %s298, 1
          %s4768 = smul.addr %s4767, 256
          %s4769 = scalar_lea.vmem [#allocation5], %s4768
          %4771 = dma.done %s4766, 4096
        $region96: #{tpu_custom_call.1} parent=91 // pred_fallthru
          _
        // Predicated region
        $region97: #{tpu_custom_call.1} parent=91 // pred_check
          %p4772 = pneg %p341
        $region98: #{tpu_custom_call.1} parent=91 // pred_check_branch
          %4774 = sbr.rel (%p4772) target = $region100
        $region99: #{tpu_custom_call.1} parent=91 // pred_region
          %s4775 = sand.u32 %s38, 1
          %s4776 = scalar_lea.sflag [#allocation8], %s4775
          %s4777 = sand.u32 %s326, 1
          %s4778 = smul.addr %s4777, 4
          %s4779 = scalar_lea.vmem [#allocation7], %s4778
          %4781 = dma.done %s4776, 64
        $region100: #{tpu_custom_call.1} parent=91 // pred_fallthru
          _
        // Predicated region
        $region101: #{tpu_custom_call.1} parent=91 // pred_check
          %p4782 = pneg %p367
        $region102: #{tpu_custom_call.1} parent=91 // pred_check_branch
          %4784 = sbr.rel (%p4782) target = $region104
        $region103: #{tpu_custom_call.1} parent=91 // pred_region
          %p4785 = scmp.lt.s32.totalorder %s43, 1
          %s4786 = scalar_select %p4785, %s43, 1
          %s4787 = scalar_lea.vmem %s14, %s4786
        $region104: #{tpu_custom_call.1} parent=91 // pred_fallthru
          _
        // Predicated region
        $region105: #{tpu_custom_call.1} parent=91 // pred_check
          %p4788 = pneg %p393
        $region106: #{tpu_custom_call.1} parent=91 // pred_check_branch
          %4790 = sbr.rel (%p4788) target = $region108
        $region107: #{tpu_custom_call.1} parent=91 // pred_region
          %p4791 = scmp.lt.s32.totalorder %s43, 1
          %s4792 = scalar_select %p4791, %s43, 1
          %s4793 = scalar_lea.vmem %s15, %s4792
        $region108: #{tpu_custom_call.1} parent=91 // pred_fallthru
          _
        // Predicated region
        $region109: #{tpu_custom_call.1} parent=91 // pred_check
          %p4794 = pneg %p419
        $region110: #{tpu_custom_call.1} parent=91 // pred_check_branch
          %4796 = sbr.rel (%p4794) target = $region112
        $region111: #{tpu_custom_call.1} parent=91 // pred_region
          %s4797 = sand.u32 %s38, 1
          %s4798 = scalar_lea.sflag [#allocation8], %s4797
          %s4799 = sand.u32 %s404, 1
          %s4800 = scalar_lea.vmem [#allocation9], %s4799
          %4802 = dma.done %s4798, 16
        $region112: #{tpu_custom_call.1} parent=91 // pred_fallthru
          _
      $region92: #{tpu_custom_call.1} parent=5 // pred_fallthru
        _
    $region6: #{tpu_custom_call.1} parent=1 // loop_footer
      %s36 = sadd.s32 1, %s32
    $region7: #{tpu_custom_call.1} parent=1 // loop_footer_branch
      %31 = sbr.rel target = $region3
    $region8: #{tpu_custom_call.1} parent=1 // loop_exit
      _
    %4803 = vsyncpa [#allocation6], 1
    %s4804 = scalar_lea.sflag [#allocation6], 1
    %4805 = vsyncpa %s4804, 1
    %4806 = vsyncpa [#allocation8], 1
    %s4807 = scalar_lea.sflag [#allocation8], 1
    %4808 = vsyncpa %s4807, 1

</llo_original>
